<compile_context>
chip_gen: v6e
topology: v6e:2x2x1
jax: 0.10.0
libtpu: 0.0.40
codegen_flags: <defaults>
</compile_context>

<pallas_src>
import numpy as np
import jax
import jax.numpy as jnp
from jax import lax
from jax.experimental import pallas as pl
from jax.experimental.pallas import tpu as pltpu


def _round_up(x, m):
    return ((x + m - 1) // m) * m


# ------------------------------- host wrapper --------------------------------

def vanilla_gnn_forward(params, x, a_bin, *, tile=256):
    """Fused VanillaGNN (GraphSAGE) forward.

    x:     [N, nfeat] f32 node features
    a_bin: [N, N] f32 adjacency with edge counts, a_bin[dst, src] = #edges src->dst
    """
    n, nfeat = x.shape
    nhid = params["enc_w"].shape[1]
    nclass = params["dec_w"].shape[1]
    nlayers = len(params["convs"])
    assert nlayers >= 1
    assert tile % 128 == 0

    bf16, f32 = jnp.bfloat16, jnp.float32

    fin = _round_up(nfeat, 128)      # lane-dense input feature width
    f = _round_up(nhid, 128)         # lane-dense hidden width
    c = _round_up(nclass, 128)       # lane-dense logits slab (sliced below)
    tm = tk = tile
    n_pad = _round_up(n, tile)
    r = n_pad // tm                  # number of row tiles == number of col tiles

    def pad2(m, rows, cols, dtype):
        out = jnp.zeros((rows, cols), f32)
        out = out.at[:m.shape[0], :m.shape[1]].set(m.astype(f32))
        return out.astype(dtype)

    # Binary/count adjacency is exact in bf16; the exact f32 1/in-degree is
    # applied in the kernel epilogue (accuracy + keeps the mem-bound A stream
    # as small as possible without quantization).
    a_p = pad2(a_bin, n_pad, n_pad, bf16)
    deg = jnp.sum(a_bin, axis=1, keepdims=True)
    deginv_p = pad2(1.0 / jnp.maximum(deg, 1.0), n_pad, 1, f32)

    x_p = pad2(x, n_pad, fin, bf16)
    wenc_p = pad2(params["enc_w"], fin, f, bf16)
    benc_p = pad2(params["enc_b"], 1, f, f32)
    wdec_p = pad2(params["dec_w"], f, c, bf16)
    bdec_p = pad2(params["dec_b"], 1, c, f32)
    wl_p = jnp.stack([pad2(cv["wl"], f, f, bf16) for cv in params["convs"]])   # [L,f,f]
    wr_p = jnp.stack([pad2(cv["wr"], f, f, bf16) for cv in params["convs"]])   # [L,f,f]
    bconv_p = jnp.stack([pad2(cv["b"], 1, f, f32) for cv in params["convs"]])  # [L,1,f]

    # ---- Block-sparse A-tile schedule (scalar prefetch) ----------------------
    # For each row-tile i: the compacted list of column tiles containing edges.
    # Padded entries repeat the last valid id so the (unchanged) DMA is elided;
    # the accumulate is gated with k < cnt[i].
    a_np = np.zeros((n_pad, n_pad), np.float32)
    a_np[:n, :n] = np.asarray(a_bin, dtype=np.float32)
    tile_nz = a_np.reshape(r, tm, r, tk).any(axis=(1, 3))          # [r, r] bool
    cnt_np = tile_nz.sum(axis=1).astype(np.int32)                  # [r]
    kk_eff = int(max(1, cnt_np.max()))                             # k-grid extent
    kidx_np = np.zeros((r, kk_eff), np.int32)
    for ii in range(r):
        nz = np.nonzero(tile_nz[ii])[0].astype(np.int32)
        if nz.size:
            m = min(int(nz.size), kk_eff)
            kidx_np[ii, :m] = nz[:m]
            kidx_np[ii, m:] = nz[m - 1]
    kidx_flat = jnp.asarray(kidx_np.reshape(-1))                   # [r*kk_eff] int32
    cnt = jnp.asarray(cnt_np)                                      # [r] int32

    n_grid_l = nlayers + 1          # l==0 is the encoder "layer"
    last_l = n_grid_l - 1

    # ----------------------------- fused kernel ------------------------------
    def kernel(kidx_ref, cnt_ref, x_ref, a_ref, deginv_ref, wenc_ref, benc_ref,
               wl_ref, wr_ref, bconv_ref, wdec_ref, bdec_ref, out_ref,
               h_scr, agg_scr):
        l = pl.program_id(0)        # 0 = encoder, 1..nlayers = SAGE layers
        i = pl.program_id(1)        # row tile
        k = pl.program_id(2)        # position in the compacted nonzero-tile list
        n_k = pl.num_programs(2)

        # ---- Encoder: h0[i-tile] = relu(x @ Wenc + b) into ping-pong slot 0.
        # Padded rows (>= n) are zeroed explicitly.  Invariant relied upon
        # later: padded *columns* of A are zero, so padded h rows (which pick
        # up relu(bias) in deeper layers) can never contaminate real rows.
        @pl.when(jnp.logical_and(l == 0, k == 0))
        def _():
            h0 = (jnp.dot(x_ref[...], wenc_ref[...],
                          preferred_element_type=jnp.float32) + benc_ref[...])
            valid = (i * tm + lax.broadcasted_iota(jnp.int32, (tm, 1), 0)) < n
            h0 = jnp.where(valid, jnp.maximum(h0, 0.0), 0.0)
            h_scr[pl.ds(pl.multiple_of(i * tm, tm), tm), :] = h0.astype(h_scr.dtype)

        # ---- Sparse aggregation: agg(i) = sum over nonzero col-tiles of
        #      A[i-tile, kidx] @ h_prev[kidx-tile].   (f32 accumulator)
        def _accumulate(first):
            src = ((l - 1) % 2) * n_pad
            col = kidx_ref[i * kk_eff + k]
            h_k = h_scr[pl.ds(pl.multiple_of(src + col * tk, tk), tk), :]
            part = jnp.dot(a_ref[...], h_k, preferred_element_type=jnp.float32)
            if first:
                agg_scr[...] = part      # k==0: init folded into first dot;
            else:                        # empty row-tiles fetch an all-zero A
                agg_scr[...] += part     # tile, so this is still exactly 0.

        @pl.when(jnp.logical_and(l >= 1, k == 0))
        def _():
            _accumulate(True)

        @pl.when(jnp.logical_and(l >= 1,
                                 jnp.logical_and(k > 0, k < cnt_ref[i])))
        def _():
            _accumulate(False)

        # ---- Finalize row-tile: exact f32 mean (1/deg), two accumulating SAGE
        # dots, bias + ReLU in f32, ping-pong store; decoder on the last layer.
        @pl.when(jnp.logical_and(l >= 1, k == n_k - 1))
        def _():
            src = ((l - 1) % 2) * n_pad
            dst = (l % 2) * n_pad
            h_i = h_scr[pl.ds(pl.multiple_of(src + i * tm, tm), tm), :]
            agg = (agg_scr[...] * deginv_ref[...]).astype(h_scr.dtype)
            y = (jnp.dot(h_i, wr_ref[0], preferred_element_type=jnp.float32)
                 + jnp.dot(agg, wl_ref[0], preferred_element_type=jnp.float32)
                 + bconv_ref[0])
            h_new = jnp.maximum(y, 0.0).astype(h_scr.dtype)
            h_scr[pl.ds(pl.multiple_of(dst + i * tm, tm), tm), :] = h_new

            @pl.when(l == pl.num_programs(0) - 1)
            def _():
                out_ref[...] = (jnp.dot(h_new, wdec_ref[...],
                                        preferred_element_type=jnp.float32)
                                + bdec_ref[...])

    # ------------------------------ BlockSpecs --------------------------------
    in_specs = [
        # x: only needed during the encoder layer; frozen afterwards.
        pl.BlockSpec((tm, fin),
                     lambda l, i, k, kidx, cnt: (jnp.where(l == 0, i, 0), 0)),
        # A: stream only scheduled (nonzero) tiles; frozen during the encoder.
        pl.BlockSpec((tm, tk),
                     lambda l, i, k, kidx, cnt: (
                         jnp.where(l == 0, 0, i),
                         jnp.where(l == 0, 0, kidx[i * kk_eff + k]))),
        # 1/in-degree column (f32) for the exact mean.
        pl.BlockSpec((tm, 1), lambda l, i, k, kidx, cnt: (i, 0)),
        # Weights / biases: VMEM-resident (indices constant in i, k).
        pl.BlockSpec((fin, f), lambda l, i, k, kidx, cnt: (0, 0)),
        pl.BlockSpec((1, f), lambda l, i, k, kidx, cnt: (0, 0)),
        pl.BlockSpec((1, f, f),
                     lambda l, i, k, kidx, cnt: (jnp.maximum(l - 1, 0), 0, 0)),
        pl.BlockSpec((1, f, f),
                     lambda l, i, k, kidx, cnt: (jnp.maximum(l - 1, 0), 0, 0)),
        pl.BlockSpec((1, 1, f),
                     lambda l, i, k, kidx, cnt: (jnp.maximum(l - 1, 0), 0, 0)),
        pl.BlockSpec((f, c), lambda l, i, k, kidx, cnt: (0, 0)),
        pl.BlockSpec((1, c), lambda l, i, k, kidx, cnt: (0, 0)),
    ]
    # Output block index is frozen until the last layer: no stale writebacks.
    out_spec = pl.BlockSpec(
        (tm, c), lambda l, i, k, kidx, cnt: (jnp.where(l == last_l, i, 0), 0))

    # Explicit VMEM budget (persistent h ping-pong + double-buffered blocks).
    vmem_est = (2 * n_pad * f * 2 + tm * f * 4
                + 2 * (tm * tk * 2) + 2 * (tm * fin * 2) + 2 * (tm * c * 4)
                + 2 * (fin * f + 2 * f * f + f * c) * 2
                + 2 * (3 * f + c) * 4 + 2 * tm * 4)
    vmem_limit = max(32 * 1024 * 1024, int(1.5 * vmem_est))

    out_p = pl.pallas_call(
        kernel,
        out_shape=jax.ShapeDtypeStruct((n_pad, c), f32),
        grid_spec=pltpu.PrefetchScalarGridSpec(
            num_scalar_prefetch=2,
            grid=(n_grid_l, r, kk_eff),
            in_specs=in_specs,
            out_specs=out_spec,
            scratch_shapes=[
                pltpu.VMEM((2 * n_pad, f), bf16),   # ping-pong h across layers
                pltpu.VMEM((tm, f), f32),           # A @ h accumulator
            ],
        ),
        compiler_params=pltpu.CompilerParams(
            # Row-tile axis must stay "arbitrary": h lives in core-local VMEM.
            dimension_semantics=("arbitrary", "arbitrary", "arbitrary"),
            vmem_limit_bytes=vmem_limit),
    )(kidx_flat, cnt, x_p, a_p, deginv_p, wenc_p, benc_p,
      wl_p, wr_p, bconv_p, wdec_p, bdec_p)

    return out_p[:n, :nclass]


# ------------------------------ params / graph --------------------------------

def init_params(key, nfeat, nhid, nclass, nlayers):
    ks = jax.random.split(key, 4 + nlayers)
    p = {
        # weights stored pre-transposed: [Fin, Fout]
        "enc_w": jax.random.normal(ks[0], (nfeat, nhid), jnp.float32) * 0.1,
        "enc_b": jax.random.normal(ks[1], (1, nhid), jnp.float32) * 0.1,
        "dec_w": jax.random.normal(ks[2], (nhid, nclass), jnp.float32) * 0.1,
        "dec_b": jax.random.normal(ks[3], (1, nclass), jnp.float32) * 0.1,
        "convs": [],
    }
    for li in range(nlayers):
        kl, kr, kb = jax.random.split(ks[4 + li], 3)
        p["convs"].append({
            "wl": jax.random.normal(kl, (nhid, nhid), jnp.float32) * 0.1,   # lin_l (aggregated)
            "wr": jax.random.normal(kr, (nhid, nhid), jnp.float32) * 0.1,   # lin_r (self)
            "b": jax.random.normal(kb, (1, nhid), jnp.float32) * 0.1,
        })
    return p


def edge_index_to_adj(edge_index, n_nodes):
    # A[dst, src] = #edges src->dst  (mean aggregation over incoming edges)
    src, dst = edge_index
    return jnp.zeros((n_nodes, n_nodes), jnp.float32).at[dst, src].add(1.0)


# -------------------------------- references ----------------------------------

def vanilla_gnn_reference_f32(params, x, a_bin):
    """Pure-f32 semantic reference (matches the PyTorch module)."""
    deg = jnp.sum(a_bin, axis=1, keepdims=True)
    a_norm = a_bin / jnp.maximum(deg, 1.0)
    h = jnp.maximum(x @ params["enc_w"] + params["enc_b"], 0.0)
    for conv in params["convs"]:
        agg = a_norm @ h
        h = jnp.maximum(agg @ conv["wl"] + h @ conv["wr"] + conv["b"], 0.0)
    return h @ params["dec_w"] + params["dec_b"]


def vanilla_gnn_reference_bf16(params, x, a_bin):
    """Mimics the kernel numerics (bf16 operands, f32 accumulation, f32 1/deg)."""
    bf = jnp.bfloat16
    dot = lambda a, b: jnp.dot(a, b, preferred_element_type=jnp.float32)
    deg_inv = 1.0 / jnp.maximum(jnp.sum(a_bin, axis=1, keepdims=True), 1.0)
    xq, aq = x.astype(bf), a_bin.astype(bf)
    h = jnp.maximum(dot(xq, params["enc_w"].astype(bf)) + params["enc_b"],
                    0.0).astype(bf)
    for conv in params["convs"]:
        agg = (dot(aq, h) * deg_inv).astype(bf)
        y = (dot(h, conv["wr"].astype(bf)) + dot(agg, conv["wl"].astype(bf))
             + conv["b"])
        h = jnp.maximum(y, 0.0).astype(bf)
    return dot(h, params["dec_w"].astype(bf)) + params["dec_b"]


# ---------------------------------- driver ------------------------------------

if __name__ == "__main__":
    N_NODES, NFEAT, NHID, NCLASS, NLAYERS = 200, 16, 32, 4, 2

    key = jax.random.PRNGKey(0)
    k_x, k_p = jax.random.split(key)

    x = jax.random.normal(k_x, (N_NODES, NFEAT), jnp.float32)

    # Deterministic synthetic graph: bidirectional ring (2 in-edges per node).
    idx = np.arange(N_NODES)
    src = np.concatenate([idx, idx])
    dst = np.concatenate([(idx + 1) % N_NODES, (idx - 1) % N_NODES])
    edge_index = jnp.asarray(np.stack([src, dst]), jnp.int32)   # [2, E]
    a_bin = edge_index_to_adj(edge_index, N_NODES)

    params = init_params(k_p, NFEAT, NHID, NCLASS, NLAYERS)

    out = jax.block_until_ready(vanilla_gnn_forward(params, x, a_bin))
    assert out.shape == (N_NODES, NCLASS)

    # Numerics check vs a reference that mimics the kernel's bf16/f32 mix.
    ref_q = vanilla_gnn_reference_bf16(params, x, a_bin)
    np.testing.assert_allclose(np.asarray(out), np.asarray(ref_q),
                               rtol=1e-2, atol=1e-2)
    # Semantics check (padding, sparse-tile schedule, exact mean, layer fusion).
    ref_f = vanilla_gnn_reference_f32(params, x, a_bin)
    np.testing.assert_allclose(np.asarray(out), np.asarray(ref_f),
                               rtol=6e-2, atol=6e-2)

    print("KERNEL_OK")
</pallas_src>

<mosaic_0001>
module attributes {stable_mosaic.version = 11 : i64} {
  func.func @kernel(%arg0: i32, %arg1: i32, %arg2: i32, %arg3: memref<1xi32, #tpu.memory_space<smem>>, %arg4: memref<1xi32, #tpu.memory_space<smem>>, %arg5: memref<256x128xbf16, #tpu.memory_space<vmem>>, %arg6: memref<256x256xbf16, #tpu.memory_space<vmem>>, %arg7: memref<256x1xf32, #tpu.memory_space<vmem>>, %arg8: memref<128x128xbf16, #tpu.memory_space<vmem>>, %arg9: memref<1x128xf32, #tpu.memory_space<vmem>>, %arg10: memref<1x128x128xbf16, #tpu.memory_space<vmem>>, %arg11: memref<1x128x128xbf16, #tpu.memory_space<vmem>>, %arg12: memref<1x1x128xf32, #tpu.memory_space<vmem>>, %arg13: memref<128x128xbf16, #tpu.memory_space<vmem>>, %arg14: memref<1x128xf32, #tpu.memory_space<vmem>>, %arg15: memref<256x128xf32, #tpu.memory_space<vmem>>, %arg16: memref<512x128xbf16, #tpu.memory_space<vmem>>, %arg17: memref<256x128xf32, #tpu.memory_space<vmem>>) attributes {dimension_semantics = [#tpu.dimension_semantics<arbitrary>, #tpu.dimension_semantics<arbitrary>, #tpu.dimension_semantics<arbitrary>], iteration_bounds = array<i64: 3, 1, 1>, scalar_prefetch = 2 : i64, scratch_operands = 2 : i64, tpu.core_type = #tpu.core_type<tc>, window_params = [{transform_indices = @transform_0, window_bounds = array<i64: 256, 128>}, {transform_indices = @transform_1, window_bounds = array<i64: 256, 256>}, {transform_indices = @transform_2, window_bounds = array<i64: 256, 1>}, {pipeline_mode = #tpu.pipeline_mode<synchronous>, transform_indices = @transform_3, window_bounds = array<i64: 128, 128>}, {pipeline_mode = #tpu.pipeline_mode<synchronous>, transform_indices = @transform_4, window_bounds = array<i64: 1, 128>}, {transform_indices = @transform_5, window_bounds = array<i64: 1, 128, 128>}, {transform_indices = @transform_6, window_bounds = array<i64: 1, 128, 128>}, {transform_indices = @transform_7, window_bounds = array<i64: 1, 1, 128>}, {pipeline_mode = #tpu.pipeline_mode<synchronous>, transform_indices = @transform_8, window_bounds = array<i64: 128, 128>}, {pipeline_mode = #tpu.pipeline_mode<synchronous>, transform_indices = @transform_9, window_bounds = array<i64: 1, 128>}, {transform_indices = @transform_10, window_bounds = array<i64: 256, 128>}]} {
    %c0_i32 = arith.constant 0 : i32
    %0 = arith.cmpi eq, %arg0, %c0_i32 : i32
    %c0_i32_0 = arith.constant 0 : i32
    %1 = arith.cmpi eq, %arg2, %c0_i32_0 : i32
    %2 = arith.andi %0, %1 : i1
    %3 = arith.extui %2 : i1 to i32
    %c0_i32_1 = arith.constant 0 : i32
    %4 = arith.cmpi ne, %3, %c0_i32_1 : i32
    scf.if %4 {
      %c0 = arith.constant 0 : index
      %c0_10 = arith.constant 0 : index
      %24 = vector.load %arg5[%c0, %c0_10] : memref<256x128xbf16, #tpu.memory_space<vmem>>, vector<256x128xbf16>
      %c0_11 = arith.constant 0 : index
      %c0_12 = arith.constant 0 : index
      %25 = vector.load %arg8[%c0_11, %c0_12] : memref<128x128xbf16, #tpu.memory_space<vmem>>, vector<128x128xbf16>
      %cst = arith.constant dense<0.000000e+00> : vector<256x128xf32>
      %26 = tpu.matmul %24, %25, %cst {dimension_numbers = #tpu.dot_dimension_numbers<[1], [0], [0], [1], [0, 0, 1, 1], [], []>} : vector<256x128xbf16>, vector<128x128xbf16>, vector<256x128xf32> -> vector<256x128xf32>
      %c0_13 = arith.constant 0 : index
      %c0_14 = arith.constant 0 : index
      %27 = vector.load %arg9[%c0_13, %c0_14] : memref<1x128xf32, #tpu.memory_space<vmem>>, vector<1x128xf32>
      %28 = vector.broadcast %27 : vector<1x128xf32> to vector<256x128xf32>
      %29 = arith.addf %26, %28 : vector<256x128xf32>
      %c256_i32 = arith.constant 256 : i32
      %30 = arith.muli %arg1, %c256_i32 : i32
      %31 = tpu.iota {dimensions = array<i32: 0>} : vector<256x1xi32>
      %32 = vector.broadcast %30 : i32 to vector<256x1xi32>
      %33 = arith.addi %32, %31 : vector<256x1xi32>
      %c200_i32 = arith.constant 200 : i32
      %34 = vector.broadcast %c200_i32 : i32 to vector<256x1xi32>
      %35 = arith.cmpi slt, %33, %34 : vector<256x1xi32>
      %cst_15 = arith.constant 0.000000e+00 : f32
      %36 = vector.broadcast %cst_15 : f32 to vector<256x128xf32>
      %37 = arith.maximumf %29, %36 : vector<256x128xf32>
      %cst_16 = arith.constant 0.000000e+00 : f32
      %38 = vector.shape_cast %35 : vector<256x1xi1> to vector<256x1xi1>
      %39 = vector.broadcast %38 : vector<256x1xi1> to vector<256x128xi1>
      %40 = vector.broadcast %cst_16 : f32 to vector<256x128xf32>
      %41 = arith.select %39, %37, %40 : vector<256x128xi1>, vector<256x128xf32>
      %42 = arith.truncf %41 : vector<256x128xf32> to vector<256x128xbf16>
      %c256_i32_17 = arith.constant 256 : i32
      %43 = arith.muli %arg1, %c256_i32_17 : i32
      %44 = tpu.assume_multiple %43, 256 : i32
      %45 = arith.index_cast %44 : i32 to index
      %c0_18 = arith.constant 0 : index
      %46 = vector.load %arg16[%45, %c0_18] : memref<512x128xbf16, #tpu.memory_space<vmem>>, vector<256x128xbf16>
      tpu.vector_store %arg16[%45, %c0_18], %42 {strides = array<i32>} : memref<512x128xbf16, #tpu.memory_space<vmem>>, vector<256x128xbf16>,
    } else {
    }
    %c1_i32 = arith.constant 1 : i32
    %5 = arith.cmpi sge, %arg0, %c1_i32 : i32
    %c0_i32_2 = arith.constant 0 : i32
    %6 = arith.cmpi eq, %arg2, %c0_i32_2 : i32
    %7 = arith.andi %5, %6 : i1
    %8 = arith.extui %7 : i1 to i32
    %c0_i32_3 = arith.constant 0 : i32
    %9 = arith.cmpi ne, %8, %c0_i32_3 : i32
    scf.if %9 {
      %c1_i32_10 = arith.constant 1 : i32
      %24 = arith.subi %arg0, %c1_i32_10 : i32
      %c2_i32 = arith.constant 2 : i32
      %c0_i32_11 = arith.constant 0 : i32
      %25 = arith.cmpi eq, %c2_i32, %c0_i32_11 : i32
      %c1_i32_12 = arith.constant 1 : i32
      %26 = arith.select %25, %c1_i32_12, %c2_i32 : i32
      %27 = arith.remsi %24, %26 : i32
      %c0_i32_13 = arith.constant 0 : i32
      %28 = arith.cmpi ne, %27, %c0_i32_13 : i32
      %c0_i32_14 = arith.constant 0 : i32
      %29 = arith.cmpi slt, %27, %c0_i32_14 : i32
      %c0_i32_15 = arith.constant 0 : i32
      %30 = arith.cmpi slt, %26, %c0_i32_15 : i32
      %31 = arith.xori %29, %30 : i1
      %32 = arith.andi %31, %28 : i1
      %33 = arith.addi %27, %26 : i32
      %34 = arith.select %32, %33, %27 : i32
      %c256_i32 = arith.constant 256 : i32
      %35 = arith.muli %34, %c256_i32 : i32
      %c1_i32_16 = arith.constant 1 : i32
      %36 = arith.muli %arg1, %c1_i32_16 : i32
      %37 = arith.addi %36, %arg2 : i32
      %38 = arith.index_cast %37 : i32 to index
      %39 = memref.load %arg3[%38] : memref<1xi32, #tpu.memory_space<smem>>
      %c256_i32_17 = arith.constant 256 : i32
      %40 = arith.muli %39, %c256_i32_17 : i32
      %41 = arith.addi %35, %40 : i32
      %42 = tpu.assume_multiple %41, 256 : i32
      %43 = arith.index_cast %42 : i32 to index
      %c0 = arith.constant 0 : index
      %44 = vector.load %arg16[%43, %c0] : memref<512x128xbf16, #tpu.memory_space<vmem>>, vector<256x128xbf16>
      %c0_18 = arith.constant 0 : index
      %c0_19 = arith.constant 0 : index
      %45 = vector.load %arg6[%c0_18, %c0_19] : memref<256x256xbf16, #tpu.memory_space<vmem>>, vector<256x256xbf16>
      %cst = arith.constant dense<0.000000e+00> : vector<256x128xf32>
      %46 = tpu.matmul %45, %44, %cst {dimension_numbers = #tpu.dot_dimension_numbers<[1], [0], [0], [1], [0, 0, 1, 1], [], []>} : vector<256x256xbf16>, vector<256x128xbf16>, vector<256x128xf32> -> vector<256x128xf32>
      %c0_20 = arith.constant 0 : index
      %c0_21 = arith.constant 0 : index
      %47 = vector.load %arg17[%c0_20, %c0_21] : memref<256x128xf32, #tpu.memory_space<vmem>>, vector<256x128xf32>
      tpu.vector_store %arg17[%c0_20, %c0_21], %46 {strides = array<i32>} : memref<256x128xf32, #tpu.memory_space<vmem>>, vector<256x128xf32>,
    } else {
    }
    %c1_i32_4 = arith.constant 1 : i32
    %10 = arith.cmpi sge, %arg0, %c1_i32_4 : i32
    %c0_i32_5 = arith.constant 0 : i32
    %11 = arith.cmpi sgt, %arg2, %c0_i32_5 : i32
    %12 = arith.index_cast %arg1 : i32 to index
    %13 = memref.load %arg4[%12] : memref<1xi32, #tpu.memory_space<smem>>
    %14 = arith.cmpi slt, %arg2, %13 : i32
    %15 = arith.andi %11, %14 : i1
    %16 = arith.andi %10, %15 : i1
    %17 = arith.extui %16 : i1 to i32
    %c0_i32_6 = arith.constant 0 : i32
    %18 = arith.cmpi ne, %17, %c0_i32_6 : i32
    scf.if %18 {
      %c1_i32_10 = arith.constant 1 : i32
      %24 = arith.subi %arg0, %c1_i32_10 : i32
      %c2_i32 = arith.constant 2 : i32
      %c0_i32_11 = arith.constant 0 : i32
      %25 = arith.cmpi eq, %c2_i32, %c0_i32_11 : i32
      %c1_i32_12 = arith.constant 1 : i32
      %26 = arith.select %25, %c1_i32_12, %c2_i32 : i32
      %27 = arith.remsi %24, %26 : i32
      %c0_i32_13 = arith.constant 0 : i32
      %28 = arith.cmpi ne, %27, %c0_i32_13 : i32
      %c0_i32_14 = arith.constant 0 : i32
      %29 = arith.cmpi slt, %27, %c0_i32_14 : i32
      %c0_i32_15 = arith.constant 0 : i32
      %30 = arith.cmpi slt, %26, %c0_i32_15 : i32
      %31 = arith.xori %29, %30 : i1
      %32 = arith.andi %31, %28 : i1
      %33 = arith.addi %27, %26 : i32
      %34 = arith.select %32, %33, %27 : i32
      %c256_i32 = arith.constant 256 : i32
      %35 = arith.muli %34, %c256_i32 : i32
      %c1_i32_16 = arith.constant 1 : i32
      %36 = arith.muli %arg1, %c1_i32_16 : i32
      %37 = arith.addi %36, %arg2 : i32
      %38 = arith.index_cast %37 : i32 to index
      %39 = memref.load %arg3[%38] : memref<1xi32, #tpu.memory_space<smem>>
      %c256_i32_17 = arith.constant 256 : i32
      %40 = arith.muli %39, %c256_i32_17 : i32
      %41 = arith.addi %35, %40 : i32
      %42 = tpu.assume_multiple %41, 256 : i32
      %43 = arith.index_cast %42 : i32 to index
      %c0 = arith.constant 0 : index
      %44 = vector.load %arg16[%43, %c0] : memref<512x128xbf16, #tpu.memory_space<vmem>>, vector<256x128xbf16>
      %c0_18 = arith.constant 0 : index
      %c0_19 = arith.constant 0 : index
      %45 = vector.load %arg6[%c0_18, %c0_19] : memref<256x256xbf16, #tpu.memory_space<vmem>>, vector<256x256xbf16>
      %cst = arith.constant dense<0.000000e+00> : vector<256x128xf32>
      %46 = tpu.matmul %45, %44, %cst {dimension_numbers = #tpu.dot_dimension_numbers<[1], [0], [0], [1], [0, 0, 1, 1], [], []>} : vector<256x256xbf16>, vector<256x128xbf16>, vector<256x128xf32> -> vector<256x128xf32>
      %c0_20 = arith.constant 0 : index
      %c0_21 = arith.constant 0 : index
      %47 = vector.load %arg17[%c0_20, %c0_21] : memref<256x128xf32, #tpu.memory_space<vmem>>, vector<256x128xf32>
      %48 = arith.addf %47, %46 : vector<256x128xf32>
      %c0_22 = arith.constant 0 : index
      %c0_23 = arith.constant 0 : index
      %49 = vector.load %arg17[%c0_22, %c0_23] : memref<256x128xf32, #tpu.memory_space<vmem>>, vector<256x128xf32>
      tpu.vector_store %arg17[%c0_22, %c0_23], %48 {strides = array<i32>} : memref<256x128xf32, #tpu.memory_space<vmem>>, vector<256x128xf32>,
    } else {
    }
    %c1_i32_7 = arith.constant 1 : i32
    %19 = arith.cmpi sge, %arg0, %c1_i32_7 : i32
    %c0_i32_8 = arith.constant 0 : i32
    %20 = arith.cmpi eq, %arg2, %c0_i32_8 : i32
    %21 = arith.andi %19, %20 : i1
    %22 = arith.extui %21 : i1 to i32
    %c0_i32_9 = arith.constant 0 : i32
    %23 = arith.cmpi ne, %22, %c0_i32_9 : i32
    scf.if %23 {
      %c1_i32_10 = arith.constant 1 : i32
      %24 = arith.subi %arg0, %c1_i32_10 : i32
      %c2_i32 = arith.constant 2 : i32
      %c0_i32_11 = arith.constant 0 : i32
      %25 = arith.cmpi eq, %c2_i32, %c0_i32_11 : i32
      %c1_i32_12 = arith.constant 1 : i32
      %26 = arith.select %25, %c1_i32_12, %c2_i32 : i32
      %27 = arith.remsi %24, %26 : i32
      %c0_i32_13 = arith.constant 0 : i32
      %28 = arith.cmpi ne, %27, %c0_i32_13 : i32
      %c0_i32_14 = arith.constant 0 : i32
      %29 = arith.cmpi slt, %27, %c0_i32_14 : i32
      %c0_i32_15 = arith.constant 0 : i32
      %30 = arith.cmpi slt, %26, %c0_i32_15 : i32
      %31 = arith.xori %29, %30 : i1
      %32 = arith.andi %31, %28 : i1
      %33 = arith.addi %27, %26 : i32
      %34 = arith.select %32, %33, %27 : i32
      %c256_i32 = arith.constant 256 : i32
      %35 = arith.muli %34, %c256_i32 : i32
      %c2_i32_16 = arith.constant 2 : i32
      %c0_i32_17 = arith.constant 0 : i32
      %36 = arith.cmpi eq, %c2_i32_16, %c0_i32_17 : i32
      %c1_i32_18 = arith.constant 1 : i32
      %37 = arith.select %36, %c1_i32_18, %c2_i32_16 : i32
      %38 = arith.remsi %arg0, %37 : i32
      %c0_i32_19 = arith.constant 0 : i32
      %39 = arith.cmpi ne, %38, %c0_i32_19 : i32
      %c0_i32_20 = arith.constant 0 : i32
      %40 = arith.cmpi slt, %38, %c0_i32_20 : i32
      %c0_i32_21 = arith.constant 0 : i32
      %41 = arith.cmpi slt, %37, %c0_i32_21 : i32
      %42 = arith.xori %40, %41 : i1
      %43 = arith.andi %42, %39 : i1
      %44 = arith.addi %38, %37 : i32
      %45 = arith.select %43, %44, %38 : i32
      %c256_i32_22 = arith.constant 256 : i32
      %46 = arith.muli %45, %c256_i32_22 : i32
      %c256_i32_23 = arith.constant 256 : i32
      %47 = arith.muli %arg1, %c256_i32_23 : i32
      %48 = arith.addi %35, %47 : i32
      %49 = tpu.assume_multiple %48, 256 : i32
      %50 = arith.index_cast %49 : i32 to index
      %c0 = arith.constant 0 : index
      %51 = vector.load %arg16[%50, %c0] : memref<512x128xbf16, #tpu.memory_space<vmem>>, vector<256x128xbf16>
      %c0_24 = arith.constant 0 : index
      %c0_25 = arith.constant 0 : index
      %52 = vector.load %arg17[%c0_24, %c0_25] : memref<256x128xf32, #tpu.memory_space<vmem>>, vector<256x128xf32>
      %c0_26 = arith.constant 0 : index
      %c0_27 = arith.constant 0 : index
      %53 = vector.load %arg7[%c0_26, %c0_27] : memref<256x1xf32, #tpu.memory_space<vmem>>, vector<256x1xf32>
      %54 = vector.broadcast %53 : vector<256x1xf32> to vector<256x128xf32>
      %55 = arith.mulf %52, %54 : vector<256x128xf32>
      %56 = arith.truncf %55 : vector<256x128xf32> to vector<256x128xbf16>
      %c0_28 = arith.constant 0 : index
      %c0_29 = arith.constant 0 : index
      %c0_30 = arith.constant 0 : index
      %57 = vector.load %arg11[%c0_28, %c0_29, %c0_30] : memref<1x128x128xbf16, #tpu.memory_space<vmem>>, vector<1x128x128xbf16>
      %58 = vector.shape_cast %57 : vector<1x128x128xbf16> to vector<128x128xbf16>
      %cst = arith.constant dense<0.000000e+00> : vector<256x128xf32>
      %59 = tpu.matmul %51, %58, %cst {dimension_numbers = #tpu.dot_dimension_numbers<[1], [0], [0], [1], [0, 0, 1, 1], [], []>} : vector<256x128xbf16>, vector<128x128xbf16>, vector<256x128xf32> -> vector<256x128xf32>
      %c0_31 = arith.constant 0 : index
      %c0_32 = arith.constant 0 : index
      %c0_33 = arith.constant 0 : index
      %60 = vector.load %arg10[%c0_31, %c0_32, %c0_33] : memref<1x128x128xbf16, #tpu.memory_space<vmem>>, vector<1x128x128xbf16>
      %61 = vector.shape_cast %60 : vector<1x128x128xbf16> to vector<128x128xbf16>
      %cst_34 = arith.constant dense<0.000000e+00> : vector<256x128xf32>
      %62 = tpu.matmul %56, %61, %cst_34 {dimension_numbers = #tpu.dot_dimension_numbers<[1], [0], [0], [1], [0, 0, 1, 1], [], []>} : vector<256x128xbf16>, vector<128x128xbf16>, vector<256x128xf32> -> vector<256x128xf32>
      %63 = arith.addf %59, %62 : vector<256x128xf32>
      %c0_35 = arith.constant 0 : index
      %c0_36 = arith.constant 0 : index
      %c0_37 = arith.constant 0 : index
      %64 = vector.load %arg12[%c0_35, %c0_36, %c0_37] : memref<1x1x128xf32, #tpu.memory_space<vmem>>, vector<1x1x128xf32>
      %65 = vector.shape_cast %64 : vector<1x1x128xf32> to vector<1x128xf32>
      %66 = vector.broadcast %65 : vector<1x128xf32> to vector<256x128xf32>
      %67 = arith.addf %63, %66 : vector<256x128xf32>
      %cst_38 = arith.constant 0.000000e+00 : f32
      %68 = vector.broadcast %cst_38 : f32 to vector<256x128xf32>
      %69 = arith.maximumf %67, %68 : vector<256x128xf32>
      %70 = arith.truncf %69 : vector<256x128xf32> to vector<256x128xbf16>
      %c256_i32_39 = arith.constant 256 : i32
      %71 = arith.muli %arg1, %c256_i32_39 : i32
      %72 = arith.addi %46, %71 : i32
      %73 = tpu.assume_multiple %72, 256 : i32
      %74 = arith.index_cast %73 : i32 to index
      %c0_40 = arith.constant 0 : index
      %75 = vector.load %arg16[%74, %c0_40] : memref<512x128xbf16, #tpu.memory_space<vmem>>, vector<256x128xbf16>
      tpu.vector_store %arg16[%74, %c0_40], %70 {strides = array<i32>} : memref<512x128xbf16, #tpu.memory_space<vmem>>, vector<256x128xbf16>,
      %c2_i32_41 = arith.constant 2 : i32
      %76 = arith.cmpi eq, %arg0, %c2_i32_41 : i32
      %77 = arith.extui %76 : i1 to i32
      %c0_i32_42 = arith.constant 0 : i32
      %78 = arith.cmpi ne, %77, %c0_i32_42 : i32
      scf.if %78 {
        %c0_43 = arith.constant 0 : index
        %c0_44 = arith.constant 0 : index
        %79 = vector.load %arg13[%c0_43, %c0_44] : memref<128x128xbf16, #tpu.memory_space<vmem>>, vector<128x128xbf16>
        %cst_45 = arith.constant dense<0.000000e+00> : vector<256x128xf32>
        %80 = tpu.matmul %70, %79, %cst_45 {dimension_numbers = #tpu.dot_dimension_numbers<[1], [0], [0], [1], [0, 0, 1, 1], [], []>} : vector<256x128xbf16>, vector<128x128xbf16>, vector<256x128xf32> -> vector<256x128xf32>
        %c0_46 = arith.constant 0 : index
        %c0_47 = arith.constant 0 : index
        %81 = vector.load %arg14[%c0_46, %c0_47] : memref<1x128xf32, #tpu.memory_space<vmem>>, vector<1x128xf32>
        %82 = vector.broadcast %81 : vector<1x128xf32> to vector<256x128xf32>
        %83 = arith.addf %80, %82 : vector<256x128xf32>
        %c0_48 = arith.constant 0 : index
        %c0_49 = arith.constant 0 : index
        %84 = vector.load %arg15[%c0_48, %c0_49] : memref<256x128xf32, #tpu.memory_space<vmem>>, vector<256x128xf32>
        tpu.vector_store %arg15[%c0_48, %c0_49], %83 {strides = array<i32>} : memref<256x128xf32, #tpu.memory_space<vmem>>, vector<256x128xf32>,
      } else {
      }
    } else {
    }
    return
  }
  func.func @transform_0(%arg0: i32, %arg1: i32, %arg2: i32, %arg3: memref<1xi32, #tpu.memory_space<smem>>, %arg4: memref<1xi32, #tpu.memory_space<smem>>) -> (i32, i32) {
    %c0_i32 = arith.constant 0 : i32
    %0 = arith.cmpi eq, %arg0, %c0_i32 : i32
    %c0_i32_0 = arith.constant 0 : i32
    %1 = arith.select %0, %arg1, %c0_i32_0 : i32
    %c0_i32_1 = arith.constant 0 : i32
    %c0_i32_2 = arith.constant 0 : i32
    return %1, %c0_i32_1 : i32, i32
  }
  func.func @transform_1(%arg0: i32, %arg1: i32, %arg2: i32, %arg3: memref<1xi32, #tpu.memory_space<smem>>, %arg4: memref<1xi32, #tpu.memory_space<smem>>) -> (i32, i32) {
    %c0_i32 = arith.constant 0 : i32
    %0 = arith.cmpi eq, %arg0, %c0_i32 : i32
    %c0_i32_0 = arith.constant 0 : i32
    %1 = arith.select %0, %c0_i32_0, %arg1 : i32
    %c0_i32_1 = arith.constant 0 : i32
    %2 = arith.cmpi eq, %arg0, %c0_i32_1 : i32
    %c1_i32 = arith.constant 1 : i32
    %3 = arith.muli %arg1, %c1_i32 : i32
    %4 = arith.addi %3, %arg2 : i32
    %5 = arith.index_cast %4 : i32 to index
    %6 = memref.load %arg3[%5] : memref<1xi32, #tpu.memory_space<smem>>
    %c0_i32_2 = arith.constant 0 : i32
    %7 = arith.select %2, %c0_i32_2, %6 : i32
    %c0_i32_3 = arith.constant 0 : i32
    return %1, %7 : i32, i32
  }
  func.func @transform_2(%arg0: i32, %arg1: i32, %arg2: i32, %arg3: memref<1xi32, #tpu.memory_space<smem>>, %arg4: memref<1xi32, #tpu.memory_space<smem>>) -> (i32, i32) {
    %c0_i32 = arith.constant 0 : i32
    %c0_i32_0 = arith.constant 0 : i32
    return %arg1, %c0_i32 : i32, i32
  }
  func.func @transform_3(%arg0: i32, %arg1: i32, %arg2: i32, %arg3: memref<1xi32, #tpu.memory_space<smem>>, %arg4: memref<1xi32, #tpu.memory_space<smem>>) -> (i32, i32) {
    %c0_i32 = arith.constant 0 : i32
    %c0_i32_0 = arith.constant 0 : i32
    %c0_i32_1 = arith.constant 0 : i32
    return %c0_i32, %c0_i32_0 : i32, i32
  }
  func.func @transform_4(%arg0: i32, %arg1: i32, %arg2: i32, %arg3: memref<1xi32, #tpu.memory_space<smem>>, %arg4: memref<1xi32, #tpu.memory_space<smem>>) -> (i32, i32) {
    %c0_i32 = arith.constant 0 : i32
    %c0_i32_0 = arith.constant 0 : i32
    %c0_i32_1 = arith.constant 0 : i32
    return %c0_i32, %c0_i32_0 : i32, i32
  }
  func.func @transform_5(%arg0: i32, %arg1: i32, %arg2: i32, %arg3: memref<1xi32, #tpu.memory_space<smem>>, %arg4: memref<1xi32, #tpu.memory_space<smem>>) -> (i32, i32, i32) {
    %c1_i32 = arith.constant 1 : i32
    %0 = arith.subi %arg0, %c1_i32 : i32
    %c0_i32 = arith.constant 0 : i32
    %1 = arith.maxsi %0, %c0_i32 : i32
    %c0_i32_0 = arith.constant 0 : i32
    %c0_i32_1 = arith.constant 0 : i32
    %c0_i32_2 = arith.constant 0 : i32
    return %1, %c0_i32_0, %c0_i32_1 : i32, i32, i32
  }
  func.func @transform_6(%arg0: i32, %arg1: i32, %arg2: i32, %arg3: memref<1xi32, #tpu.memory_space<smem>>, %arg4: memref<1xi32, #tpu.memory_space<smem>>) -> (i32, i32, i32) {
    %c1_i32 = arith.constant 1 : i32
    %0 = arith.subi %arg0, %c1_i32 : i32
    %c0_i32 = arith.constant 0 : i32
    %1 = arith.maxsi %0, %c0_i32 : i32
    %c0_i32_0 = arith.constant 0 : i32
    %c0_i32_1 = arith.constant 0 : i32
    %c0_i32_2 = arith.constant 0 : i32
    return %1, %c0_i32_0, %c0_i32_1 : i32, i32, i32
  }
  func.func @transform_7(%arg0: i32, %arg1: i32, %arg2: i32, %arg3: memref<1xi32, #tpu.memory_space<smem>>, %arg4: memref<1xi32, #tpu.memory_space<smem>>) -> (i32, i32, i32) {
    %c1_i32 = arith.constant 1 : i32
    %0 = arith.subi %arg0, %c1_i32 : i32
    %c0_i32 = arith.constant 0 : i32
    %1 = arith.maxsi %0, %c0_i32 : i32
    %c0_i32_0 = arith.constant 0 : i32
    %c0_i32_1 = arith.constant 0 : i32
    %c0_i32_2 = arith.constant 0 : i32
    return %1, %c0_i32_0, %c0_i32_1 : i32, i32, i32
  }
  func.func @transform_8(%arg0: i32, %arg1: i32, %arg2: i32, %arg3: memref<1xi32, #tpu.memory_space<smem>>, %arg4: memref<1xi32, #tpu.memory_space<smem>>) -> (i32, i32) {
    %c0_i32 = arith.constant 0 : i32
    %c0_i32_0 = arith.constant 0 : i32
    %c0_i32_1 = arith.constant 0 : i32
    return %c0_i32, %c0_i32_0 : i32, i32
  }
  func.func @transform_9(%arg0: i32, %arg1: i32, %arg2: i32, %arg3: memref<1xi32, #tpu.memory_space<smem>>, %arg4: memref<1xi32, #tpu.memory_space<smem>>) -> (i32, i32) {
    %c0_i32 = arith.constant 0 : i32
    %c0_i32_0 = arith.constant 0 : i32
    %c0_i32_1 = arith.constant 0 : i32
    return %c0_i32, %c0_i32_0 : i32, i32
  }
  func.func @transform_10(%arg0: i32, %arg1: i32, %arg2: i32, %arg3: memref<1xi32, #tpu.memory_space<smem>>, %arg4: memref<1xi32, #tpu.memory_space<smem>>) -> (i32, i32) {
    %c2_i32 = arith.constant 2 : i32
    %0 = arith.cmpi eq, %arg0, %c2_i32 : i32
    %c0_i32 = arith.constant 0 : i32
    %1 = arith.select %0, %arg1, %c0_i32 : i32
    %c0_i32_0 = arith.constant 0 : i32
    %c0_i32_1 = arith.constant 0 : i32
    return %1, %c0_i32_0 : i32, i32
  }
}

</mosaic_0001>

<llo_original>
// kernel: tpu_custom_call.1
$region0: #{tpu_custom_call.1}
  #allocation0 [shape = 'u32[]', space=smem, size = 0x4, offset = 0x4, fixed_abs, tag = 'smem constant byte address 0x4 - core index']
  #allocation1 [shape = 'u32[144,128]{1,0:T(1,128)}', space=vmem, size = 0x12000, scoped, tag = 'internal scratch']
  #allocation2 [shape = 'bf16[512,128]{1,0:T(8,128)(2,1)}', space=vmem, size = 0x20000, scoped, tag = 'scratch operand']
  #allocation3 [shape = 'f32[256,128]{1,0:T(8,128)}', space=vmem, size = 0x20000, scoped, tag = 'scratch operand']
  #allocation4 [shape = 's32[1]{0}', space=sflag, size = 0x4, scoped, tag = 'scoped memory for tpu_custom_call.1']
  #allocation5 [shape = 's32[1]{0:T(128)S(6)}', space=smem, size = 0x200, scoped, tag = 'prefetched SMEM operand 0']
  #allocation6 [shape = 's32[1]{0:T(128)S(6)}', space=smem, size = 0x200, scoped, tag = 'prefetched SMEM operand 1']
  %s0 = inlined_call_operand.<no memory space> [shape: s32[1], index: 0, kind: input, shape index: {}]
  %s1 = inlined_call_operand.<no memory space> [shape: s32[1], index: 1, kind: input, shape index: {}]
  %s2 = inlined_call_operand.hbm [shape: bf16[256,128], index: 2, kind: input, shape index: {}]
  %s3 = inlined_call_operand.vmem [shape: bf16[256,256], index: 3, kind: input, shape index: {}]
  %s4 = inlined_call_operand.vmem [shape: f32[256,1], index: 4, kind: input, shape index: {}]
  %s5 = inlined_call_operand.hbm [shape: bf16[128,128], index: 5, kind: input, shape index: {}]
  %s6 = inlined_call_operand.vmem [shape: f32[1,128], index: 6, kind: input, shape index: {}]
  %s7 = inlined_call_operand.hbm [shape: bf16[2,128,128], index: 7, kind: input, shape index: {}]
  %s8 = inlined_call_operand.hbm [shape: bf16[2,128,128], index: 8, kind: input, shape index: {}]
  %s9 = inlined_call_operand.vmem [shape: f32[2,1,128], index: 9, kind: input, shape index: {}]
  %s10 = inlined_call_operand.hbm [shape: bf16[128,128], index: 10, kind: input, shape index: {}]
  %s11 = inlined_call_operand.vmem [shape: f32[1,128], index: 11, kind: input, shape index: {}]
  %s12 = inlined_call_operand.hbm [shape: f32[256,128], index: 12, kind: output, shape index: {}]
  %s13 = sld [smem:[#allocation0]]
  $region113: #{tpu_custom_call.1} parent=0
    _
  %s15 = ssub.s32 1, %s13
  %s16 = scalar_select 0, %s15, %s13
  %17 = sst [smem:[#allocation5]] %s0
  %18 = sst [smem:[#allocation6]] %s1
  $region1: #{tpu_custom_call.1} parent=0
    #allocation7 [shape = 'u8[131072]{0}', space=vmem, size = 0x20000, scoped, tag = 'input window, operand 2']
    #allocation8 [shape = 's32[2]{0}', space=sflag, size = 0x8, scoped, tag = 'scoped memory for tpu_custom_call.1']
    #allocation9 [shape = 's32[2]{0}', space=sflag, size = 0x8, scoped, tag = 'scoped memory for tpu_custom_call.1']
    #allocation10 [shape = 'u8[32768]{0}', space=vmem, size = 0x8000, scoped, tag = 'input window, operand 5, single buffered']
    #allocation11 [shape = 's32[1]{0}', space=sflag, size = 0x4, scoped, tag = 'scoped memory for tpu_custom_call.1']
    #allocation12 [shape = 'u8[65536]{0}', space=vmem, size = 0x10000, scoped, tag = 'input window, operand 7']
    #allocation13 [shape = 'u8[65536]{0}', space=vmem, size = 0x10000, scoped, tag = 'input window, operand 8']
    #allocation14 [shape = 'u8[32768]{0}', space=vmem, size = 0x8000, scoped, tag = 'input window, operand 10, single buffered']
    #allocation15 [shape = 'u8[262144]{0}', space=vmem, size = 0x40000, scoped, tag = 'output window, operand 0']
    %19 = vsyncpa [#allocation8], 0
    %s20 = scalar_lea.sflag [#allocation8], 1
    %21 = vsyncpa %s20, 0
    %22 = vsyncpa [#allocation11], 0
    %23 = vsyncpa [#allocation9], 0
    %s24 = scalar_lea.sflag [#allocation9], 1
    %25 = vsyncpa %s24, 0
    loop: start=0, step=1, limit=5
    $region2: #{tpu_custom_call.1} parent=1 // loop_pre_header
      _
    $region3: #{tpu_custom_call.1} parent=1 // loop_header
      %s27 = sphi 0, %s31
      %p28 = scmp.ge.s32.totalorder %s27, 5
      %s34 = sphi 0, %s53
      %s35 = sphi 0, %s49
      %s36 = sphi 0, %s45
      %s37 = sphi 0, %s34
      %s38 = sphi 0, %s35
      %s39 = sphi 0, %s36
      %s40 = sphi 0, %s37
      %s41 = sphi 0, %s38
      %s42 = sphi 0, %s39
      %s60 = sphi 0, %s62
      %s63 = sphi 0, %s60
      %s64 = sphi 0, %s63
      %s80 = sphi 0, %s64
      %s98 = sphi 0, %s100
      %s101 = sphi 0, %s98
      %s102 = sphi 0, %s101
      %s118 = sphi 0, %s102
      %s124 = sphi 0, %s126
      %s127 = sphi 0, %s124
      %s128 = sphi 0, %s127
      %s144 = sphi 0, %s128
      %s148 = sphi 0, %s148
      %s150 = sphi 0, %s148
      %s151 = sphi 0, %s150
      %s165 = sphi 0, %s151
      %s169 = sphi 0, %s169
      %s171 = sphi 0, %s169
      %s172 = sphi 0, %s171
      %s186 = sphi 0, %s172
      %s198 = sphi 0, %s200
      %s201 = sphi 0, %s198
      %s202 = sphi 0, %s201
      %s218 = sphi 0, %s202
      %s230 = sphi 0, %s232
      %s233 = sphi 0, %s230
      %s234 = sphi 0, %s233
      %s250 = sphi 0, %s234
      %s262 = sphi 0, %s264
      %s265 = sphi 0, %s262
      %s266 = sphi 0, %s265
      %s282 = sphi 0, %s266
      %s286 = sphi 0, %s286
      %s288 = sphi 0, %s286
      %s289 = sphi 0, %s288
      %s303 = sphi 0, %s289
      %s307 = sphi 0, %s307
      %s309 = sphi 0, %s307
      %s310 = sphi 0, %s309
      %s324 = sphi 0, %s310
      %s334 = sphi 0, %s336
      %s337 = sphi 0, %s334
      %s338 = sphi 0, %s337
      %s354 = sphi 0, %s338
    $region4: #{tpu_custom_call.1} parent=1 // loop_header_branch
      %30 = sbr.rel (%p28) target = $region8
    $region5: #{tpu_custom_call.1} parent=1 // loop_body
      %s32 = ssub.s32 %s27, 1
      %s33 = ssub.s32 %s27, 2
      %s43 = sadd.s32 1, %s36
      %p44 = scmp.ge.s32.totalorder %s43, 1
      %s45 = scalar_select %p44, 0, %s43
      %s46 = sadd.s32 1, %s35
      %s47 = scalar_select %p44, %s46, %s35
      %p48 = scmp.ge.s32.totalorder %s47, 1
      %s49 = scalar_select %p48, 0, %s47
      %s50 = sadd.s32 1, %s34
      %s51 = scalar_select %p48, %s50, %s34
      %p52 = scmp.ge.s32.totalorder %s51, 3
      %s53 = scalar_select %p52, 0, %s51
      %p54 = scmp.eq.s32.totalorder %s34, 0
      %s55 = scalar_select %p54, %s35, 0
      %p56 = scmp.eq.s32.totalorder %s53, 0
      %s57 = scalar_select %p56, %s49, 0
      %s58 = ssub.s32 %s55, %s57
      %p59 = scmp.eq.s32.totalorder %s58, 0
      %s61 = sadd.s32 %s60, 1
      %s62 = scalar_select %p59, %s60, %s61
      %p65 = pneg %p59
      %p66 = scmp.eq.s32.totalorder %s27, 2
      %p67 = por %p65, %p66
      %p68 = scmp.ne.s32.totalorder %s60, %s63
      %p69 = scmp.eq.s32.totalorder %s27, 0
      %p70 = por %p68, %p69
      %p71 = scmp.ne.s32.totalorder %s60, %s63
      %p72 = scmp.eq.s32.totalorder %s32, 2
      %p73 = por %p71, %p72
      %p74 = scmp.ne.s32.totalorder %s63, %s64
      %p75 = scmp.eq.s32.totalorder %s32, 0
      %p76 = por %p74, %p75
      %p77 = scmp.ne.s32.totalorder %s63, %s64
      %p78 = scmp.eq.s32.totalorder %s33, 2
      %p79 = por %p77, %p78
      %p81 = scmp.ne.s32.totalorder %s64, %s80
      %p82 = scmp.eq.s32.totalorder %s33, 0
      %p83 = por %p81, %p82
      %p84 = scmp.eq.s32.totalorder %s34, 0
      %s85 = scalar_select %p84, 0, %s35
      %s86 = sadd.s32 %s35, %s36
      %s87 = sld [smem:[#allocation5 + %s86]]
      %s88 = scalar_select %p84, 0, %s87
      %p89 = scmp.eq.s32.totalorder %s53, 0
      %s90 = scalar_select %p89, 0, %s49
      %s91 = sadd.s32 %s49, %s45
      %s92 = sld [smem:[#allocation5 + %s91]]
      %s93 = scalar_select %p89, 0, %s92
      %s94 = ssub.s32 %s85, %s90
      %s95 = ssub.s32 %s88, %s93
      %s96 = sor.u32 %s94, %s95
      %p97 = scmp.eq.s32.totalorder %s96, 0
      %s99 = sadd.s32 %s98, 1
      %s100 = scalar_select %p97, %s98, %s99
      %p103 = pneg %p97
      %p104 = scmp.eq.s32.totalorder %s27, 2
      %p105 = por %p103, %p104
      %p106 = scmp.ne.s32.totalorder %s98, %s101
      %p107 = scmp.eq.s32.totalorder %s27, 0
      %p108 = por %p106, %p107
      %p109 = scmp.ne.s32.totalorder %s98, %s101
      %p110 = scmp.eq.s32.totalorder %s32, 2
      %p111 = por %p109, %p110
      %p112 = scmp.ne.s32.totalorder %s101, %s102
      %p113 = scmp.eq.s32.totalorder %s32, 0
      %p114 = por %p112, %p113
      %p115 = scmp.ne.s32.totalorder %s101, %s102
      %p116 = scmp.eq.s32.totalorder %s33, 2
      %p117 = por %p115, %p116
      %p119 = scmp.ne.s32.totalorder %s102, %s118
      %p120 = scmp.eq.s32.totalorder %s33, 0
      %p121 = por %p119, %p120
      %s122 = ssub.s32 %s35, %s49
      %p123 = scmp.eq.s32.totalorder %s122, 0
      %s125 = sadd.s32 %s124, 1
      %s126 = scalar_select %p123, %s124, %s125
      %p129 = pneg %p123
      %p130 = scmp.eq.s32.totalorder %s27, 2
      %p131 = por %p129, %p130
      %p132 = scmp.ne.s32.totalorder %s124, %s127
      %p133 = scmp.eq.s32.totalorder %s27, 0
      %p134 = por %p132, %p133
      %p135 = scmp.ne.s32.totalorder %s124, %s127
      %p136 = scmp.eq.s32.totalorder %s32, 2
      %p137 = por %p135, %p136
      %p138 = scmp.ne.s32.totalorder %s127, %s128
      %p139 = scmp.eq.s32.totalorder %s32, 0
      %p140 = por %p138, %p139
      %p141 = scmp.ne.s32.totalorder %s127, %s128
      %p142 = scmp.eq.s32.totalorder %s33, 2
      %p143 = por %p141, %p142
      %p145 = scmp.ne.s32.totalorder %s128, %s144
      %p146 = scmp.eq.s32.totalorder %s33, 0
      %p147 = por %p145, %p146
      %s149 = sadd.s32 %s148, 1
      %p152 = scmp.eq.s32.totalorder %s27, 2
      %p153 = scmp.ne.s32.totalorder %s148, %s150
      %p154 = scmp.eq.s32.totalorder %s27, 0
      %p155 = por %p153, %p154
      %p156 = scmp.ne.s32.totalorder %s148, %s150
      %p157 = scmp.eq.s32.totalorder %s32, 2
      %p158 = por %p156, %p157
      %p159 = scmp.ne.s32.totalorder %s150, %s151
      %p160 = scmp.eq.s32.totalorder %s32, 0
      %p161 = por %p159, %p160
      %p162 = scmp.ne.s32.totalorder %s150, %s151
      %p163 = scmp.eq.s32.totalorder %s33, 2
      %p164 = por %p162, %p163
      %p166 = scmp.ne.s32.totalorder %s151, %s165
      %p167 = scmp.eq.s32.totalorder %s33, 0
      %p168 = por %p166, %p167
      %s170 = sadd.s32 %s169, 1
      %p173 = scmp.eq.s32.totalorder %s27, 2
      %p174 = scmp.ne.s32.totalorder %s169, %s171
      %p175 = scmp.eq.s32.totalorder %s27, 0
      %p176 = por %p174, %p175
      %p177 = scmp.ne.s32.totalorder %s169, %s171
      %p178 = scmp.eq.s32.totalorder %s32, 2
      %p179 = por %p177, %p178
      %p180 = scmp.ne.s32.totalorder %s171, %s172
      %p181 = scmp.eq.s32.totalorder %s32, 0
      %p182 = por %p180, %p181
      %p183 = scmp.ne.s32.totalorder %s171, %s172
      %p184 = scmp.eq.s32.totalorder %s33, 2
      %p185 = por %p183, %p184
      %p187 = scmp.ne.s32.totalorder %s172, %s186
      %p188 = scmp.eq.s32.totalorder %s33, 0
      %p189 = por %p187, %p188
      %s190 = ssub.s32 %s34, 1
      %p191 = scmp.gt.s32.totalorder %s190, 0
      %s192 = scalar_select %p191, %s190, 0
      %s193 = ssub.s32 %s53, 1
      %p194 = scmp.gt.s32.totalorder %s193, 0
      %s195 = scalar_select %p194, %s193, 0
      %s196 = ssub.s32 %s192, %s195
      %p197 = scmp.eq.s32.totalorder %s196, 0
      %s199 = sadd.s32 %s198, 1
      %s200 = scalar_select %p197, %s198, %s199
      %p203 = pneg %p197
      %p204 = scmp.eq.s32.totalorder %s27, 2
      %p205 = por %p203, %p204
      %p206 = scmp.ne.s32.totalorder %s198, %s201
      %p207 = scmp.eq.s32.totalorder %s27, 0
      %p208 = por %p206, %p207
      %p209 = scmp.ne.s32.totalorder %s198, %s201
      %p210 = scmp.eq.s32.totalorder %s32, 2
      %p211 = por %p209, %p210
      %p212 = scmp.ne.s32.totalorder %s201, %s202
      %p213 = scmp.eq.s32.totalorder %s32, 0
      %p214 = por %p212, %p213
      %p215 = scmp.ne.s32.totalorder %s201, %s202
      %p216 = scmp.eq.s32.totalorder %s33, 2
      %p217 = por %p215, %p216
      %p219 = scmp.ne.s32.totalorder %s202, %s218
      %p220 = scmp.eq.s32.totalorder %s33, 0
      %p221 = por %p219, %p220
      %s222 = ssub.s32 %s34, 1
      %p223 = scmp.gt.s32.totalorder %s222, 0
      %s224 = scalar_select %p223, %s222, 0
      %s225 = ssub.s32 %s53, 1
      %p226 = scmp.gt.s32.totalorder %s225, 0
      %s227 = scalar_select %p226, %s225, 0
      %s228 = ssub.s32 %s224, %s227
      %p229 = scmp.eq.s32.totalorder %s228, 0
      %s231 = sadd.s32 %s230, 1
      %s232 = scalar_select %p229, %s230, %s231
      %p235 = pneg %p229
      %p236 = scmp.eq.s32.totalorder %s27, 2
      %p237 = por %p235, %p236
      %p238 = scmp.ne.s32.totalorder %s230, %s233
      %p239 = scmp.eq.s32.totalorder %s27, 0
      %p240 = por %p238, %p239
      %p241 = scmp.ne.s32.totalorder %s230, %s233
      %p242 = scmp.eq.s32.totalorder %s32, 2
      %p243 = por %p241, %p242
      %p244 = scmp.ne.s32.totalorder %s233, %s234
      %p245 = scmp.eq.s32.totalorder %s32, 0
      %p246 = por %p244, %p245
      %p247 = scmp.ne.s32.totalorder %s233, %s234
      %p248 = scmp.eq.s32.totalorder %s33, 2
      %p249 = por %p247, %p248
      %p251 = scmp.ne.s32.totalorder %s234, %s250
      %p252 = scmp.eq.s32.totalorder %s33, 0
      %p253 = por %p251, %p252
      %s254 = ssub.s32 %s34, 1
      %p255 = scmp.gt.s32.totalorder %s254, 0
      %s256 = scalar_select %p255, %s254, 0
      %s257 = ssub.s32 %s53, 1
      %p258 = scmp.gt.s32.totalorder %s257, 0
      %s259 = scalar_select %p258, %s257, 0
      %s260 = ssub.s32 %s256, %s259
      %p261 = scmp.eq.s32.totalorder %s260, 0
      %s263 = sadd.s32 %s262, 1
      %s264 = scalar_select %p261, %s262, %s263
      %p267 = pneg %p261
      %p268 = scmp.eq.s32.totalorder %s27, 2
      %p269 = por %p267, %p268
      %p270 = scmp.ne.s32.totalorder %s262, %s265
      %p271 = scmp.eq.s32.totalorder %s27, 0
      %p272 = por %p270, %p271
      %p273 = scmp.ne.s32.totalorder %s262, %s265
      %p274 = scmp.eq.s32.totalorder %s32, 2
      %p275 = por %p273, %p274
      %p276 = scmp.ne.s32.totalorder %s265, %s266
      %p277 = scmp.eq.s32.totalorder %s32, 0
      %p278 = por %p276, %p277
      %p279 = scmp.ne.s32.totalorder %s265, %s266
      %p280 = scmp.eq.s32.totalorder %s33, 2
      %p281 = por %p279, %p280
      %p283 = scmp.ne.s32.totalorder %s266, %s282
      %p284 = scmp.eq.s32.totalorder %s33, 0
      %p285 = por %p283, %p284
      %s287 = sadd.s32 %s286, 1
      %p290 = scmp.eq.s32.totalorder %s27, 2
      %p291 = scmp.ne.s32.totalorder %s286, %s288
      %p292 = scmp.eq.s32.totalorder %s27, 0
      %p293 = por %p291, %p292
      %p294 = scmp.ne.s32.totalorder %s286, %s288
      %p295 = scmp.eq.s32.totalorder %s32, 2
      %p296 = por %p294, %p295
      %p297 = scmp.ne.s32.totalorder %s288, %s289
      %p298 = scmp.eq.s32.totalorder %s32, 0
      %p299 = por %p297, %p298
      %p300 = scmp.ne.s32.totalorder %s288, %s289
      %p301 = scmp.eq.s32.totalorder %s33, 2
      %p302 = por %p300, %p301
      %p304 = scmp.ne.s32.totalorder %s289, %s303
      %p305 = scmp.eq.s32.totalorder %s33, 0
      %p306 = por %p304, %p305
      %s308 = sadd.s32 %s307, 1
      %p311 = scmp.eq.s32.totalorder %s27, 2
      %p312 = scmp.ne.s32.totalorder %s307, %s309
      %p313 = scmp.eq.s32.totalorder %s27, 0
      %p314 = por %p312, %p313
      %p315 = scmp.ne.s32.totalorder %s307, %s309
      %p316 = scmp.eq.s32.totalorder %s32, 2
      %p317 = por %p315, %p316
      %p318 = scmp.ne.s32.totalorder %s309, %s310
      %p319 = scmp.eq.s32.totalorder %s32, 0
      %p320 = por %p318, %p319
      %p321 = scmp.ne.s32.totalorder %s309, %s310
      %p322 = scmp.eq.s32.totalorder %s33, 2
      %p323 = por %p321, %p322
      %p325 = scmp.ne.s32.totalorder %s310, %s324
      %p326 = scmp.eq.s32.totalorder %s33, 0
      %p327 = por %p325, %p326
      %p328 = scmp.eq.s32.totalorder %s34, 2
      %s329 = scalar_select %p328, %s35, 0
      %p330 = scmp.eq.s32.totalorder %s53, 2
      %s331 = scalar_select %p330, %s49, 0
      %s332 = ssub.s32 %s329, %s331
      %p333 = scmp.eq.s32.totalorder %s332, 0
      %s335 = sadd.s32 %s334, 1
      %s336 = scalar_select %p333, %s334, %s335
      %p339 = pneg %p333
      %p340 = scmp.eq.s32.totalorder %s27, 2
      %p341 = por %p339, %p340
      %p342 = scmp.ne.s32.totalorder %s334, %s337
      %p343 = scmp.eq.s32.totalorder %s27, 0
      %p344 = por %p342, %p343
      %p345 = scmp.ne.s32.totalorder %s334, %s337
      %p346 = scmp.eq.s32.totalorder %s32, 2
      %p347 = por %p345, %p346
      %p348 = scmp.ne.s32.totalorder %s337, %s338
      %p349 = scmp.eq.s32.totalorder %s32, 0
      %p350 = por %p348, %p349
      %p351 = scmp.ne.s32.totalorder %s337, %s338
      %p352 = scmp.eq.s32.totalorder %s33, 2
      %p353 = por %p351, %p352
      %p355 = scmp.ne.s32.totalorder %s338, %s354
      %p356 = scmp.eq.s32.totalorder %s33, 0
      %p357 = por %p355, %p356
      %p358 = scmp.le.s32.totalorder 1, %s27
      %p359 = scmp.lt.s32.totalorder %s27, 4
      %p360 = pnand %p358, %p359
      %p361 = pneg %p360
      // Predicated region
      $region9: #{tpu_custom_call.1} parent=5 // pred_check
        _
      $region10: #{tpu_custom_call.1} parent=5 // pred_check_branch
        %363 = sbr.rel (%p360) target = $region12
      $region11: #{tpu_custom_call.1} parent=5 // pred_region
        %s364 = ssub.s32 %s27, 1
        // Predicated region
        $region13: #{tpu_custom_call.1} parent=11 // pred_check
          %p365 = pneg %p140
        $region14: #{tpu_custom_call.1} parent=11 // pred_check_branch
          %367 = sbr.rel (%p365) target = $region16
        $region15: #{tpu_custom_call.1} parent=11 // pred_region
          %s368 = smul.u32 32, %s38
          %p369 = scmp.lt.s32.totalorder %s368, 31
          %s370 = scalar_select %p369, %s368, 31
          %s371 = smul.addr %s370, 8
          %s372 = scalar_lea.vmem %s4, %s371
          %s373 = smul.u32 32, %s38
        $region16: #{tpu_custom_call.1} parent=11 // pred_fallthru
          _
        // Predicated region
        $region17: #{tpu_custom_call.1} parent=11 // pred_check
          %p374 = pneg %p161
        $region18: #{tpu_custom_call.1} parent=11 // pred_check_branch
          %376 = sbr.rel (%p374) target = $region20
        $region19: #{tpu_custom_call.1} parent=11 // pred_region
          %s378 = ssub.s32 1024, 1024
          %379 = vsyncadd [#allocation11], %s378
          %s380 = sshll.u32 [#allocation10], 4
          %s381 = int_to_ptr.vmem [resolvable:$true] %s380
          %386 = dma.hbm_to_vmem [thread:$0]  %s5, 1024, %s381, [#allocation11], 64, 64, 4
        $region20: #{tpu_custom_call.1} parent=11 // pred_fallthru
          _
        // Predicated region
        $region21: #{tpu_custom_call.1} parent=11 // pred_check
          %p387 = pneg %p182
        $region22: #{tpu_custom_call.1} parent=11 // pred_check_branch
          %389 = sbr.rel (%p387) target = $region24
        $region23: #{tpu_custom_call.1} parent=11 // pred_region
          _
        $region24: #{tpu_custom_call.1} parent=11 // pred_fallthru
          _
        // Predicated region
        $region25: #{tpu_custom_call.1} parent=11 // pred_check
          %p390 = pneg %p299
        $region26: #{tpu_custom_call.1} parent=11 // pred_check_branch
          %392 = sbr.rel (%p390) target = $region28
        $region27: #{tpu_custom_call.1} parent=11 // pred_region
          %s394 = ssub.s32 1024, 1024
          %395 = vsyncadd [#allocation11], %s394
          %s396 = sshll.u32 [#allocation14], 4
          %s397 = int_to_ptr.vmem [resolvable:$true] %s396
          %402 = dma.hbm_to_vmem [thread:$0]  %s10, 1024, %s397, [#allocation11], 64, 64, 4
        $region28: #{tpu_custom_call.1} parent=11 // pred_fallthru
          _
        // Predicated region
        $region29: #{tpu_custom_call.1} parent=11 // pred_check
          %p403 = pneg %p320
        $region30: #{tpu_custom_call.1} parent=11 // pred_check_branch
          %405 = sbr.rel (%p403) target = $region32
        $region31: #{tpu_custom_call.1} parent=11 // pred_region
          _
        $region32: #{tpu_custom_call.1} parent=11 // pred_fallthru
          _
      $region12: #{tpu_custom_call.1} parent=5 // pred_fallthru
        _
      %p406 = scmp.lt.s32.totalorder %s27, 3
      // Predicated region
      $region33: #{tpu_custom_call.1} parent=5 // pred_check
        %p407 = pneg %p406
      $region34: #{tpu_custom_call.1} parent=5 // pred_check_branch
        %409 = sbr.rel (%p407) target = $region36
      $region35: #{tpu_custom_call.1} parent=5 // pred_region
        // Predicated region
        $region37: #{tpu_custom_call.1} parent=35 // pred_check
          %p410 = pneg %p70
        $region38: #{tpu_custom_call.1} parent=35 // pred_check_branch
          %412 = sbr.rel (%p410) target = $region40
        $region39: #{tpu_custom_call.1} parent=35 // pred_region
          %s413 = sand.u32 %s27, 1
          %s414 = scalar_lea.sflag [#allocation8], %s413
          %s415 = sand.u32 %s60, 1
          %s416 = smul.addr %s415, 128
          %s417 = scalar_lea.vmem [#allocation7], %s416
          %p418 = scmp.eq.s32.totalorder %s34, 0
          %s419 = scalar_select %p418, %s35, 0
          %s420 = smul.u32 32, %s419
          %s422 = ssub.s32 2048, 2048
          %423 = vsyncadd %s414, %s422
          %s424 = smul.addr %s420, 64
          %s425 = scalar_lea.hbm %s2, %s424
          %s426 = sshll.u32 %s417, 4
          %s427 = int_to_ptr.vmem [resolvable:$true] %s426
          %432 = dma.hbm_to_vmem [thread:$0]  %s425, 2048, %s427, %s414, 64, 64, 4
        $region40: #{tpu_custom_call.1} parent=35 // pred_fallthru
          _
        // Predicated region
        $region41: #{tpu_custom_call.1} parent=35 // pred_check
          %p433 = pneg %p108
        $region42: #{tpu_custom_call.1} parent=35 // pred_check_branch
          %435 = sbr.rel (%p433) target = $region44
        $region43: #{tpu_custom_call.1} parent=35 // pred_region
          %p436 = scmp.eq.s32.totalorder %s34, 0
          %s437 = scalar_select %p436, 0, %s35
          %s438 = sadd.s32 %s35, %s36
          %s439 = sld [smem:[#allocation5 + %s438]]
          %s440 = scalar_select %p436, 0, %s439
          %s441 = smul.u32 32, %s437
          %s442 = smul.u32 2, %s440
          %p443 = scmp.lt.s32.totalorder %s441, 31
          %s444 = scalar_select %p443, %s441, 31
          %p445 = scmp.lt.s32.totalorder %s442, 1
          %s446 = scalar_select %p445, %s442, 1
          %s447 = smul.addr %s444, 2
          %s448 = sadd.s32 %s446, %s447
          %s449 = smul.addr %s448, 4
          %s450 = scalar_lea.vmem %s3, %s449
          %p451 = scmp.eq.s32.totalorder %s34, 0
          %s452 = scalar_select %p451, 0, %s35
          %s453 = sadd.s32 %s35, %s36
          %s454 = sld [smem:[#allocation5 + %s453]]
          %s455 = scalar_select %p451, 0, %s454
          %s456 = smul.u32 32, %s452
          %s457 = smul.u32 2, %s455
        $region44: #{tpu_custom_call.1} parent=35 // pred_fallthru
          _
        // Predicated region
        $region45: #{tpu_custom_call.1} parent=35 // pred_check
          %p458 = pneg %p208
        $region46: #{tpu_custom_call.1} parent=35 // pred_check_branch
          %460 = sbr.rel (%p458) target = $region48
        $region47: #{tpu_custom_call.1} parent=35 // pred_region
          %s461 = sand.u32 %s27, 1
          %s462 = scalar_lea.sflag [#allocation8], %s461
          %s463 = sand.u32 %s198, 1
          %s464 = smul.addr %s463, 64
          %s465 = scalar_lea.vmem [#allocation12], %s464
          %s466 = ssub.s32 %s34, 1
          %p467 = scmp.gt.s32.totalorder %s466, 0
          %s468 = scalar_select %p467, %s466, 0
          %s470 = ssub.s32 1024, 1024
          %471 = vsyncadd %s462, %s470
          %s472 = smul.addr %s468, 16
          %s473 = smul.addr %s472, 64
          %s474 = scalar_lea.hbm %s7, %s473
          %s475 = sshll.u32 %s465, 4
          %s476 = int_to_ptr.vmem [resolvable:$true] %s475
          %481 = dma.hbm_to_vmem [thread:$0]  %s474, 1024, %s476, %s462, 64, 64, 4
        $region48: #{tpu_custom_call.1} parent=35 // pred_fallthru
          _
        // Predicated region
        $region49: #{tpu_custom_call.1} parent=35 // pred_check
          %p482 = pneg %p240
        $region50: #{tpu_custom_call.1} parent=35 // pred_check_branch
          %484 = sbr.rel (%p482) target = $region52
        $region51: #{tpu_custom_call.1} parent=35 // pred_region
          %s485 = sand.u32 %s27, 1
          %s486 = scalar_lea.sflag [#allocation8], %s485
          %s487 = sand.u32 %s230, 1
          %s488 = smul.addr %s487, 64
          %s489 = scalar_lea.vmem [#allocation13], %s488
          %s490 = ssub.s32 %s34, 1
          %p491 = scmp.gt.s32.totalorder %s490, 0
          %s492 = scalar_select %p491, %s490, 0
          %s494 = ssub.s32 1024, 1024
          %495 = vsyncadd %s486, %s494
          %s496 = smul.addr %s492, 16
          %s497 = smul.addr %s496, 64
          %s498 = scalar_lea.hbm %s8, %s497
          %s499 = sshll.u32 %s489, 4
          %s500 = int_to_ptr.vmem [resolvable:$true] %s499
          %505 = dma.hbm_to_vmem [thread:$0]  %s498, 1024, %s500, %s486, 64, 64, 4
        $region52: #{tpu_custom_call.1} parent=35 // pred_fallthru
          _
        // Predicated region
        $region53: #{tpu_custom_call.1} parent=35 // pred_check
          %p506 = pneg %p272
        $region54: #{tpu_custom_call.1} parent=35 // pred_check_branch
          %508 = sbr.rel (%p506) target = $region56
        $region55: #{tpu_custom_call.1} parent=35 // pred_region
          %s509 = ssub.s32 %s34, 1
          %p510 = scmp.gt.s32.totalorder %s509, 0
          %s511 = scalar_select %p510, %s509, 0
          %p512 = scmp.lt.s32.totalorder %s511, 1
          %s513 = scalar_select %p512, %s511, 1
          %s514 = scalar_lea.vmem %s9, %s513
          %s515 = ssub.s32 %s34, 1
          %p516 = scmp.gt.s32.totalorder %s515, 0
          %s517 = scalar_select %p516, %s515, 0
        $region56: #{tpu_custom_call.1} parent=35 // pred_fallthru
          _
      $region36: #{tpu_custom_call.1} parent=5 // pred_fallthru
        _
      %p518 = scmp.le.s32.totalorder 1, %s27
      %p519 = scmp.lt.s32.totalorder %s27, 4
      %p520 = pnand %p518, %p519
      %p521 = pneg %p520
      // Predicated region
      $region57: #{tpu_custom_call.1} parent=5 // pred_check
        _
      $region58: #{tpu_custom_call.1} parent=5 // pred_check_branch
        %523 = sbr.rel (%p520) target = $region60
      $region59: #{tpu_custom_call.1} parent=5 // pred_region
        %s524 = ssub.s32 %s27, 1
        %s525 = sand.u32 %s32, 1
        %s526 = scalar_lea.sflag [#allocation8], %s525
        %s527 = sand.u32 %s63, 1
        %s528 = smul.addr %s527, 128
        %s529 = scalar_lea.vmem [#allocation7], %s528
        // Predicated region
        $region61: #{tpu_custom_call.1} parent=59 // pred_check
          %p530 = pneg %p76
        $region62: #{tpu_custom_call.1} parent=59 // pred_check_branch
          %532 = sbr.rel (%p530) target = $region64
        $region63: #{tpu_custom_call.1} parent=59 // pred_region
          %533 = dma.done %s526, 2048
        $region64: #{tpu_custom_call.1} parent=59 // pred_fallthru
          _
        // Predicated region
        $region65: #{tpu_custom_call.1} parent=59 // pred_check
          %p534 = pneg %p161
        $region66: #{tpu_custom_call.1} parent=59 // pred_check_branch
          %536 = sbr.rel (%p534) target = $region68
        $region67: #{tpu_custom_call.1} parent=59 // pred_region
          %537 = dma.done [#allocation11], 1024
        $region68: #{tpu_custom_call.1} parent=59 // pred_fallthru
          _
        %s538 = sand.u32 %s32, 1
        %s539 = scalar_lea.sflag [#allocation8], %s538
        %s540 = sand.u32 %s201, 1
        %s541 = smul.addr %s540, 64
        %s542 = scalar_lea.vmem [#allocation12], %s541
        // Predicated region
        $region69: #{tpu_custom_call.1} parent=59 // pred_check
          %p543 = pneg %p214
        $region70: #{tpu_custom_call.1} parent=59 // pred_check_branch
          %545 = sbr.rel (%p543) target = $region72
        $region71: #{tpu_custom_call.1} parent=59 // pred_region
          %546 = dma.done %s539, 1024
        $region72: #{tpu_custom_call.1} parent=59 // pred_fallthru
          _
        %s547 = sand.u32 %s32, 1
        %s548 = scalar_lea.sflag [#allocation8], %s547
        %s549 = sand.u32 %s233, 1
        %s550 = smul.addr %s549, 64
        %s551 = scalar_lea.vmem [#allocation13], %s550
        // Predicated region
        $region73: #{tpu_custom_call.1} parent=59 // pred_check
          %p552 = pneg %p246
        $region74: #{tpu_custom_call.1} parent=59 // pred_check_branch
          %554 = sbr.rel (%p552) target = $region76
        $region75: #{tpu_custom_call.1} parent=59 // pred_region
          %555 = dma.done %s548, 1024
        $region76: #{tpu_custom_call.1} parent=59 // pred_fallthru
          _
        // Predicated region
        $region77: #{tpu_custom_call.1} parent=59 // pred_check
          %p556 = pneg %p299
        $region78: #{tpu_custom_call.1} parent=59 // pred_check_branch
          %558 = sbr.rel (%p556) target = $region80
        $region79: #{tpu_custom_call.1} parent=59 // pred_region
          %559 = dma.done [#allocation11], 1024
        $region80: #{tpu_custom_call.1} parent=59 // pred_fallthru
          _
        %s560 = sand.u32 %s32, 1
        %s561 = scalar_lea.sflag [#allocation8], %s560
        %s562 = sand.u32 %s63, 1
        %s563 = smul.addr %s562, 128
        %s564 = scalar_lea.vmem [#allocation7], %s563
        %p565 = pneg %p76
        %p566 = pneg %p73
        %p567 = scmp.eq.s32.totalorder %s37, 0
        %s568 = scalar_select %p567, 0, %s38
        %s569 = sadd.s32 %s38, %s39
        %s570 = sld [smem:[#allocation5 + %s569]]
        %s571 = scalar_select %p567, 0, %s570
        %s572 = smul.u32 32, %s568
        %s573 = smul.u32 2, %s571
        %p574 = scmp.lt.s32.totalorder %s572, 31
        %s575 = scalar_select %p574, %s572, 31
        %p576 = scmp.lt.s32.totalorder %s573, 1
        %s577 = scalar_select %p576, %s573, 1
        %s578 = smul.addr %s575, 2
        %s579 = sadd.s32 %s577, %s578
        %s580 = smul.addr %s579, 4
        %s581 = scalar_lea.vmem %s3, %s580
        %p582 = pneg %p114
        %p583 = pneg %p111
        %s584 = smul.u32 32, %s38
        %p585 = scmp.lt.s32.totalorder %s584, 31
        %s586 = scalar_select %p585, %s584, 31
        %s587 = smul.addr %s586, 8
        %s588 = scalar_lea.vmem %s4, %s587
        %p589 = pneg %p140
        %p590 = pneg %p137
        %p591 = pneg %p161
        %p592 = pneg %p158
        %p593 = pneg %p182
        %p594 = pneg %p179
        %s595 = sand.u32 %s32, 1
        %s596 = scalar_lea.sflag [#allocation8], %s595
        %s597 = sand.u32 %s201, 1
        %s598 = smul.addr %s597, 64
        %s599 = scalar_lea.vmem [#allocation12], %s598
        %p600 = pneg %p214
        %p601 = pneg %p211
        %s602 = sand.u32 %s32, 1
        %s603 = scalar_lea.sflag [#allocation8], %s602
        %s604 = sand.u32 %s233, 1
        %s605 = smul.addr %s604, 64
        %s606 = scalar_lea.vmem [#allocation13], %s605
        %p607 = pneg %p246
        %p608 = pneg %p243
        %s609 = ssub.s32 %s37, 1
        %p610 = scmp.gt.s32.totalorder %s609, 0
        %s611 = scalar_select %p610, %s609, 0
        %p612 = scmp.lt.s32.totalorder %s611, 1
        %s613 = scalar_select %p612, %s611, 1
        %s614 = scalar_lea.vmem %s9, %s613
        %p615 = pneg %p278
        %p616 = pneg %p275
        %p617 = pneg %p299
        %p618 = pneg %p296
        %p619 = pneg %p320
        %p620 = pneg %p317
        %p621 = pneg %p350
        %p622 = pneg %p347
        %s623 = sand.u32 %s337, 1
        %s624 = scalar_lea.sflag [#allocation9], %s623
        %s625 = sand.u32 %s337, 1
        %s626 = smul.addr %s625, 256
        %s627 = scalar_lea.vmem [#allocation15], %s626
        %p628 = scmp.eq.s32.totalorder %s37, 0
        %s629 = scalar_select %p628, %s38, 0
        %s630 = smul.u32 32, %s629
        %p631 = scmp.eq.s32.totalorder %s37, 0
        %s632 = scalar_select %p631, 0, %s38
        %s633 = sadd.s32 %s38, %s39
        %s634 = sld [smem:[#allocation5 + %s633]]
        %s635 = scalar_select %p631, 0, %s634
        %s636 = smul.u32 32, %s632
        %s637 = smul.u32 2, %s635
        %p638 = scmp.lt.s32.totalorder %s636, 31
        %s639 = scalar_select %p638, %s636, 31
        %p640 = scmp.lt.s32.totalorder %s637, 1
        %s641 = scalar_select %p640, %s637, 1
        %s642 = smul.addr %s639, 2
        %s643 = sadd.s32 %s641, %s642
        %s644 = smul.addr %s643, 4
        %s645 = scalar_lea.vmem %s3, %s644
        %p646 = scmp.eq.s32.totalorder %s37, 0
        %s647 = scalar_select %p646, 0, %s38
        %s648 = sadd.s32 %s38, %s39
        %s649 = sld [smem:[#allocation5 + %s648]]
        %s650 = scalar_select %p646, 0, %s649
        %s651 = smul.u32 32, %s647
        %s652 = smul.u32 2, %s650
        %s653 = smul.u32 32, %s38
        %p654 = scmp.lt.s32.totalorder %s653, 31
        %s655 = scalar_select %p654, %s653, 31
        %s656 = smul.addr %s655, 8
        %s657 = scalar_lea.vmem %s4, %s656
        %s658 = smul.u32 32, %s38
        %s659 = ssub.s32 %s37, 1
        %p660 = scmp.gt.s32.totalorder %s659, 0
        %s661 = scalar_select %p660, %s659, 0
        %s662 = ssub.s32 %s37, 1
        %p663 = scmp.gt.s32.totalorder %s662, 0
        %s664 = scalar_select %p663, %s662, 0
        %s665 = ssub.s32 %s37, 1
        %p666 = scmp.gt.s32.totalorder %s665, 0
        %s667 = scalar_select %p666, %s665, 0
        %p668 = scmp.lt.s32.totalorder %s667, 1
        %s669 = scalar_select %p668, %s667, 1
        %s670 = scalar_lea.vmem %s9, %s669
        %s671 = ssub.s32 %s37, 1
        %p672 = scmp.gt.s32.totalorder %s671, 0
        %s673 = scalar_select %p672, %s671, 0
        %p674 = scmp.eq.s32.totalorder %s37, 2
        %s675 = scalar_select %p674, %s38, 0
        %s676 = smul.u32 32, %s675
        %p678 = scmp.eq.s32.totalorder %s37, 0
        %p679 = scmp.eq.s32.totalorder %s39, 0
        %p680 = pnand %p678, %p679
        %p681 = pneg %p680
        // Predicated region
        $region81: #{tpu_custom_call.1} parent=59 // pred_check
          _
        $region82: #{tpu_custom_call.1} parent=59 // pred_check_branch
          %683 = sbr.rel (%p680) target = $region84
        $region83: #{tpu_custom_call.1} parent=59 // pred_region
          %v684 = vld [vmem:[%s529] sm:$0xf]
          %v685 = vld [vmem:[%s529 + $0x4] sm:$0xf]
          %v686 = vld [vmem:[%s529 + $0x8] sm:$0xf]
          %v687 = vld [vmem:[%s529 + $0xc] sm:$0xf]
          %v688 = vld [vmem:[%s529 + $0x10] sm:$0xf]
          %v689 = vld [vmem:[%s529 + $0x14] sm:$0xf]
          %v690 = vld [vmem:[%s529 + $0x18] sm:$0xf]
          %v691 = vld [vmem:[%s529 + $0x1c] sm:$0xf]
          %v692 = vld [vmem:[%s529 + $0x20] sm:$0xf]
          %v693 = vld [vmem:[%s529 + $0x24] sm:$0xf]
          %v694 = vld [vmem:[%s529 + $0x28] sm:$0xf]
          %v695 = vld [vmem:[%s529 + $0x2c] sm:$0xf]
          %v696 = vld [vmem:[%s529 + $0x30] sm:$0xf]
          %v697 = vld [vmem:[%s529 + $0x34] sm:$0xf]
          %v698 = vld [vmem:[%s529 + $0x38] sm:$0xf]
          %v699 = vld [vmem:[%s529 + $0x3c] sm:$0xf]
          %v700 = vld [vmem:[%s529 + $0x40] sm:$0xf]
          %v701 = vld [vmem:[%s529 + $0x44] sm:$0xf]
          %v702 = vld [vmem:[%s529 + $0x48] sm:$0xf]
          %v703 = vld [vmem:[%s529 + $0x4c] sm:$0xf]
          %v704 = vld [vmem:[%s529 + $0x50] sm:$0xf]
          %v705 = vld [vmem:[%s529 + $0x54] sm:$0xf]
          %v706 = vld [vmem:[%s529 + $0x58] sm:$0xf]
          %v707 = vld [vmem:[%s529 + $0x5c] sm:$0xf]
          %v708 = vld [vmem:[%s529 + $0x60] sm:$0xf]
          %v709 = vld [vmem:[%s529 + $0x64] sm:$0xf]
          %v710 = vld [vmem:[%s529 + $0x68] sm:$0xf]
          %v711 = vld [vmem:[%s529 + $0x6c] sm:$0xf]
          %v712 = vld [vmem:[%s529 + $0x70] sm:$0xf]
          %v713 = vld [vmem:[%s529 + $0x74] sm:$0xf]
          %v714 = vld [vmem:[%s529 + $0x78] sm:$0xf]
          %v715 = vld [vmem:[%s529 + $0x7c] sm:$0xf]
          %v716 = vld [vmem:[#allocation10] sm:$0xf]
          %v717 = vld [vmem:[#allocation10 + $0x4] sm:$0xf]
          %v718 = vld [vmem:[#allocation10 + $0x8] sm:$0xf]
          %v719 = vld [vmem:[#allocation10 + $0xc] sm:$0xf]
          %v720 = vld [vmem:[#allocation10 + $0x10] sm:$0xf]
          %v721 = vld [vmem:[#allocation10 + $0x14] sm:$0xf]
          %v722 = vld [vmem:[#allocation10 + $0x18] sm:$0xf]
          %v723 = vld [vmem:[#allocation10 + $0x1c] sm:$0xf]
          %v724 = vld [vmem:[#allocation10 + $0x20] sm:$0xf]
          %v725 = vld [vmem:[#allocation10 + $0x24] sm:$0xf]
          %v726 = vld [vmem:[#allocation10 + $0x28] sm:$0xf]
          %v727 = vld [vmem:[#allocation10 + $0x2c] sm:$0xf]
          %v728 = vld [vmem:[#allocation10 + $0x30] sm:$0xf]
          %v729 = vld [vmem:[#allocation10 + $0x34] sm:$0xf]
          %v730 = vld [vmem:[#allocation10 + $0x38] sm:$0xf]
          %v731 = vld [vmem:[#allocation10 + $0x3c] sm:$0xf]
          %v732 = vld [vmem:[%s6] sm:$0x1]
          %v734 = vlaneseq
          %v735 = vshrl.u32 %v734, 7
          %v736 = vsub.s32 0, %v735
          %v737 = vrot.slane %v732, %v736
          %v771 = vunpack.c.l.b16 %v684
          %v772 = vunpack.c.l.b16 %v685
          %v773 = vunpack.c.l.b16 %v686
          %v774 = vunpack.c.l.b16 %v687
          %v775 = vunpack.c.l.b16 %v688
          %v776 = vunpack.c.l.b16 %v689
          %v777 = vunpack.c.l.b16 %v690
          %v778 = vunpack.c.l.b16 %v691
          %v779 = vunpack.c.l.b16 %v692
          %v780 = vunpack.c.l.b16 %v693
          %v781 = vunpack.c.l.b16 %v694
          %v782 = vunpack.c.l.b16 %v695
          %v783 = vunpack.c.l.b16 %v696
          %v784 = vunpack.c.l.b16 %v697
          %v785 = vunpack.c.l.b16 %v698
          %v786 = vunpack.c.l.b16 %v699
          %v787 = vunpack.c.l.b16 %v700
          %v788 = vunpack.c.l.b16 %v701
          %v789 = vunpack.c.l.b16 %v702
          %v790 = vunpack.c.l.b16 %v703
          %v791 = vunpack.c.l.b16 %v704
          %v792 = vunpack.c.l.b16 %v705
          %v793 = vunpack.c.l.b16 %v706
          %v794 = vunpack.c.l.b16 %v707
          %v795 = vunpack.c.l.b16 %v708
          %v796 = vunpack.c.l.b16 %v709
          %v797 = vunpack.c.l.b16 %v710
          %v798 = vunpack.c.l.b16 %v711
          %v799 = vunpack.c.l.b16 %v712
          %v800 = vunpack.c.l.b16 %v713
          %v801 = vunpack.c.l.b16 %v714
          %v802 = vunpack.c.l.b16 %v715
          %v803 = vpack.c.b16 %v772, %v771
          %v804 = vpack.c.b16 %v774, %v773
          %v805 = vpack.c.b16 %v776, %v775
          %v806 = vpack.c.b16 %v778, %v777
          %v807 = vpack.c.b16 %v780, %v779
          %v808 = vpack.c.b16 %v782, %v781
          %v809 = vpack.c.b16 %v784, %v783
          %v810 = vpack.c.b16 %v786, %v785
          %v811 = vpack.c.b16 %v788, %v787
          %v812 = vpack.c.b16 %v790, %v789
          %v813 = vpack.c.b16 %v792, %v791
          %v814 = vpack.c.b16 %v794, %v793
          %v815 = vpack.c.b16 %v796, %v795
          %v816 = vpack.c.b16 %v798, %v797
          %v817 = vpack.c.b16 %v800, %v799
          %v818 = vpack.c.b16 %v802, %v801
          %v851 = vunpack.c.l.b16 %v716
          %v852 = vunpack.c.l.b16 %v717
          %v853 = vunpack.c.l.b16 %v718
          %v854 = vunpack.c.l.b16 %v719
          %v855 = vunpack.c.l.b16 %v720
          %v856 = vunpack.c.l.b16 %v721
          %v857 = vunpack.c.l.b16 %v722
          %v858 = vunpack.c.l.b16 %v723
          %v859 = vunpack.c.l.b16 %v724
          %v860 = vunpack.c.l.b16 %v725
          %v861 = vunpack.c.l.b16 %v726
          %v862 = vunpack.c.l.b16 %v727
          %v863 = vunpack.c.l.b16 %v728
          %v864 = vunpack.c.l.b16 %v729
          %v865 = vunpack.c.l.b16 %v730
          %v866 = vunpack.c.l.b16 %v731
          %v867 = vpack.c.b16 %v852, %v851
          %v868 = vpack.c.b16 %v854, %v853
          %v869 = vpack.c.b16 %v856, %v855
          %v870 = vpack.c.b16 %v858, %v857
          %v871 = vpack.c.b16 %v860, %v859
          %v872 = vpack.c.b16 %v862, %v861
          %v873 = vpack.c.b16 %v864, %v863
          %v874 = vpack.c.b16 %v866, %v865
          %883 = vmatprep.subr.bf16.mxu0 0
          %884 = vmatpush1.bf16.msra.mxu0 %v874
          %885 = vmatprep.subr.bf16.mxu0 0
          %886 = vmatpush1.bf16.msra.mxu0 %v873
          %887 = vmatprep.subr.bf16.mxu0 0
          %888 = vmatpush1.bf16.msra.mxu0 %v872
          %889 = vmatprep.subr.bf16.mxu0 0
          %890 = vmatpush1.bf16.msra.mxu0 %v871
          %891 = vmatprep.subr.bf16.mxu0 0
          %892 = vmatpush1.bf16.msra.mxu0 %v870
          %893 = vmatprep.subr.bf16.mxu0 0
          %894 = vmatpush1.bf16.msra.mxu0 %v869
          %895 = vmatprep.subr.bf16.mxu0 0
          %896 = vmatpush1.bf16.msra.mxu0 %v868
          %897 = vmatprep.subr.bf16.mxu0 0
          %898 = vmatpush1.bf16.msra.mxu0 %v867
          %899 = vmatprep.subr.bf16.mxu0 0
          %900 = vmatpush2.bf16.msra.mxu0 0
          %901 = vmatprep.subr.bf16.mxu0 0
          %902 = vmatpush2.bf16.msra.mxu0 0
          %903 = vmatprep.subr.bf16.mxu0 0
          %904 = vmatpush2.bf16.msra.mxu0 0
          %905 = vmatprep.subr.bf16.mxu0 0
          %906 = vmatpush2.bf16.msra.mxu0 0
          %907 = vmatprep.subr.bf16.mxu0 0
          %908 = vmatpush2.bf16.msra.mxu0 0
          %909 = vmatprep.subr.bf16.mxu0 0
          %910 = vmatpush2.bf16.msra.mxu0 0
          %911 = vmatprep.subr.bf16.mxu0 0
          %912 = vmatpush2.bf16.msra.mxu0 0
          %913 = vmatprep.subr.bf16.mxu0 0
          %914 = vmatpush2.bf16.msra.mxu0 0
          %915 = vmatprep.mubr.bf16.mxu0 0
          %916 = vmatmul.mubr.bf16.gmra.mxu0 %v803
          %v917 = vpop.f32.mrf.mxu0
          %v918 = vadd.f32 %v737, %v917
          %v919 = vpop.f32.mrf.mxu0
          %v920 = vpop.f32.mrf.mxu0
          %v921 = vadd.f32 %v737, %v920
          %v922 = vpop.f32.mrf.mxu0
          %923 = vmatprep.mubr.bf16.mxu0 0
          %924 = vmatmul.mubr.bf16.gmra.mxu0 %v804
          %v925 = vpop.f32.mrf.mxu0
          %v926 = vadd.f32 %v737, %v925
          %v927 = vpop.f32.mrf.mxu0
          %v928 = vpop.f32.mrf.mxu0
          %v929 = vadd.f32 %v737, %v928
          %v930 = vpop.f32.mrf.mxu0
          %931 = vmatprep.mubr.bf16.mxu0 0
          %932 = vmatmul.mubr.bf16.gmra.mxu0 %v805
          %v933 = vpop.f32.mrf.mxu0
          %v934 = vadd.f32 %v737, %v933
          %v935 = vpop.f32.mrf.mxu0
          %v936 = vpop.f32.mrf.mxu0
          %v937 = vadd.f32 %v737, %v936
          %v938 = vpop.f32.mrf.mxu0
          %939 = vmatprep.mubr.bf16.mxu0 0
          %940 = vmatmul.mubr.bf16.gmra.mxu0 %v806
          %v941 = vpop.f32.mrf.mxu0
          %v942 = vadd.f32 %v737, %v941
          %v943 = vpop.f32.mrf.mxu0
          %v944 = vpop.f32.mrf.mxu0
          %v945 = vadd.f32 %v737, %v944
          %v946 = vpop.f32.mrf.mxu0
          %947 = vmatprep.mubr.bf16.mxu0 0
          %948 = vmatmul.mubr.bf16.gmra.mxu0 %v807
          %v949 = vpop.f32.mrf.mxu0
          %v950 = vadd.f32 %v737, %v949
          %v951 = vpop.f32.mrf.mxu0
          %v952 = vpop.f32.mrf.mxu0
          %v953 = vadd.f32 %v737, %v952
          %v954 = vpop.f32.mrf.mxu0
          %955 = vmatprep.mubr.bf16.mxu0 0
          %956 = vmatmul.mubr.bf16.gmra.mxu0 %v808
          %v957 = vpop.f32.mrf.mxu0
          %v958 = vadd.f32 %v737, %v957
          %v959 = vpop.f32.mrf.mxu0
          %v960 = vpop.f32.mrf.mxu0
          %v961 = vadd.f32 %v737, %v960
          %v962 = vpop.f32.mrf.mxu0
          %963 = vmatprep.mubr.bf16.mxu0 0
          %964 = vmatmul.mubr.bf16.gmra.mxu0 %v809
          %v965 = vpop.f32.mrf.mxu0
          %v966 = vadd.f32 %v737, %v965
          %v967 = vpop.f32.mrf.mxu0
          %v968 = vpop.f32.mrf.mxu0
          %v969 = vadd.f32 %v737, %v968
          %v970 = vpop.f32.mrf.mxu0
          %971 = vmatprep.mubr.bf16.mxu0 0
          %972 = vmatmul.mubr.bf16.gmra.mxu0 %v810
          %v973 = vpop.f32.mrf.mxu0
          %v974 = vadd.f32 %v737, %v973
          %v975 = vpop.f32.mrf.mxu0
          %v976 = vpop.f32.mrf.mxu0
          %v977 = vadd.f32 %v737, %v976
          %v978 = vpop.f32.mrf.mxu0
          %979 = vmatprep.mubr.bf16.mxu0 0
          %980 = vmatmul.mubr.bf16.gmra.mxu0 %v811
          %v981 = vpop.f32.mrf.mxu0
          %v982 = vadd.f32 %v737, %v981
          %v983 = vpop.f32.mrf.mxu0
          %v984 = vpop.f32.mrf.mxu0
          %v985 = vadd.f32 %v737, %v984
          %v986 = vpop.f32.mrf.mxu0
          %987 = vmatprep.mubr.bf16.mxu0 0
          %988 = vmatmul.mubr.bf16.gmra.mxu0 %v812
          %v989 = vpop.f32.mrf.mxu0
          %v990 = vadd.f32 %v737, %v989
          %v991 = vpop.f32.mrf.mxu0
          %v992 = vpop.f32.mrf.mxu0
          %v993 = vadd.f32 %v737, %v992
          %v994 = vpop.f32.mrf.mxu0
          %995 = vmatprep.mubr.bf16.mxu0 0
          %996 = vmatmul.mubr.bf16.gmra.mxu0 %v813
          %v997 = vpop.f32.mrf.mxu0
          %v998 = vadd.f32 %v737, %v997
          %v999 = vpop.f32.mrf.mxu0
          %v1000 = vpop.f32.mrf.mxu0
          %v1001 = vadd.f32 %v737, %v1000
          %v1002 = vpop.f32.mrf.mxu0
          %1003 = vmatprep.mubr.bf16.mxu0 0
          %1004 = vmatmul.mubr.bf16.gmra.mxu0 %v814
          %v1005 = vpop.f32.mrf.mxu0
          %v1006 = vadd.f32 %v737, %v1005
          %v1007 = vpop.f32.mrf.mxu0
          %v1008 = vpop.f32.mrf.mxu0
          %v1009 = vadd.f32 %v737, %v1008
          %v1010 = vpop.f32.mrf.mxu0
          %1011 = vmatprep.mubr.bf16.mxu0 0
          %1012 = vmatmul.mubr.bf16.gmra.mxu0 %v815
          %v1013 = vpop.f32.mrf.mxu0
          %v1014 = vadd.f32 %v737, %v1013
          %v1015 = vpop.f32.mrf.mxu0
          %v1016 = vpop.f32.mrf.mxu0
          %v1017 = vadd.f32 %v737, %v1016
          %v1018 = vpop.f32.mrf.mxu0
          %1019 = vmatprep.mubr.bf16.mxu0 0
          %1020 = vmatmul.mubr.bf16.gmra.mxu0 %v816
          %v1021 = vpop.f32.mrf.mxu0
          %v1022 = vadd.f32 %v737, %v1021
          %v1023 = vpop.f32.mrf.mxu0
          %v1024 = vpop.f32.mrf.mxu0
          %v1025 = vadd.f32 %v737, %v1024
          %v1026 = vpop.f32.mrf.mxu0
          %1027 = vmatprep.mubr.bf16.mxu0 0
          %1028 = vmatmul.mubr.bf16.gmra.mxu0 %v817
          %v1029 = vpop.f32.mrf.mxu0
          %v1030 = vadd.f32 %v737, %v1029
          %v1031 = vpop.f32.mrf.mxu0
          %v1032 = vpop.f32.mrf.mxu0
          %v1033 = vadd.f32 %v737, %v1032
          %v1034 = vpop.f32.mrf.mxu0
          %1035 = vmatprep.mubr.bf16.mxu0 0
          %1036 = vmatmul.mubr.bf16.gmra.mxu0 %v818
          %v1037 = vpop.f32.mrf.mxu0
          %v1038 = vadd.f32 %v737, %v1037
          %v1039 = vpop.f32.mrf.mxu0
          %v1040 = vpop.f32.mrf.mxu0
          %v1041 = vadd.f32 %v737, %v1040
          %v1042 = vpop.f32.mrf.mxu0
          %1043 = vdwg.mxu0
          %s1044 = smul.u32 %s38, 256
          %v1045 = vlaneseq
          %v1046 = vshrl.u32 %v1045, 7
          %v1047 = vadd.s32 %v1046, 8
          %v1048 = vadd.s32 %v1046, 16
          %v1049 = vadd.s32 %v1046, 24
          %v1050 = vadd.s32 %v1046, 32
          %v1051 = vadd.s32 %v1046, 40
          %v1052 = vadd.s32 %v1046, 48
          %v1053 = vadd.s32 %v1046, 56
          %v1054 = vadd.s32 %v1046, 64
          %v1055 = vadd.s32 %v1046, 72
          %v1056 = vadd.s32 %v1046, 80
          %v1057 = vadd.s32 %v1046, 88
          %v1058 = vadd.s32 %v1046, 96
          %v1059 = vadd.s32 %v1046, 104
          %v1060 = vadd.s32 %v1046, 112
          %v1061 = vadd.s32 %v1046, 120
          %v1062 = vadd.s32 %v1046, 128
          %v1063 = vadd.s32 %v1046, 136
          %v1064 = vadd.s32 %v1046, 144
          %v1065 = vadd.s32 %v1046, 152
          %v1066 = vadd.s32 %v1046, 160
          %v1067 = vadd.s32 %v1046, 168
          %v1068 = vadd.s32 %v1046, 176
          %v1069 = vadd.s32 %v1046, 184
          %v1070 = vadd.s32 %v1046, 192
          %v1071 = vadd.s32 %v1046, 200
          %v1072 = vadd.s32 %v1046, 208
          %v1073 = vadd.s32 %v1046, 216
          %v1074 = vadd.s32 %v1046, 224
          %v1075 = vadd.s32 %v1046, 232
          %v1076 = vadd.s32 %v1046, 240
          %v1077 = vadd.s32 %v1046, 248
          %v1078 = vstv %s1044
          %v1079 = vadd.s32 %v1078, %v1046
          %v1080 = vadd.s32 %v1078, %v1047
          %v1081 = vadd.s32 %v1078, %v1048
          %v1082 = vadd.s32 %v1078, %v1049
          %v1083 = vadd.s32 %v1078, %v1050
          %v1084 = vadd.s32 %v1078, %v1051
          %v1085 = vadd.s32 %v1078, %v1052
          %v1086 = vadd.s32 %v1078, %v1053
          %v1087 = vadd.s32 %v1078, %v1054
          %v1088 = vadd.s32 %v1078, %v1055
          %v1089 = vadd.s32 %v1078, %v1056
          %v1090 = vadd.s32 %v1078, %v1057
          %v1091 = vadd.s32 %v1078, %v1058
          %v1092 = vadd.s32 %v1078, %v1059
          %v1093 = vadd.s32 %v1078, %v1060
          %v1094 = vadd.s32 %v1078, %v1061
          %v1095 = vadd.s32 %v1078, %v1062
          %v1096 = vadd.s32 %v1078, %v1063
          %v1097 = vadd.s32 %v1078, %v1064
          %v1098 = vadd.s32 %v1078, %v1065
          %v1099 = vadd.s32 %v1078, %v1066
          %v1100 = vadd.s32 %v1078, %v1067
          %v1101 = vadd.s32 %v1078, %v1068
          %v1102 = vadd.s32 %v1078, %v1069
          %v1103 = vadd.s32 %v1078, %v1070
          %v1104 = vadd.s32 %v1078, %v1071
          %v1105 = vadd.s32 %v1078, %v1072
          %v1106 = vadd.s32 %v1078, %v1073
          %v1107 = vadd.s32 %v1078, %v1074
          %v1108 = vadd.s32 %v1078, %v1075
          %v1109 = vadd.s32 %v1078, %v1076
          %v1110 = vadd.s32 %v1078, %v1077
          %vm1111 = vcmp.lt.s32.totalorder %v1079, 200
          %vm1112 = vcmp.lt.s32.totalorder %v1080, 200
          %vm1113 = vcmp.lt.s32.totalorder %v1081, 200
          %vm1114 = vcmp.lt.s32.totalorder %v1082, 200
          %vm1115 = vcmp.lt.s32.totalorder %v1083, 200
          %vm1116 = vcmp.lt.s32.totalorder %v1084, 200
          %vm1117 = vcmp.lt.s32.totalorder %v1085, 200
          %vm1118 = vcmp.lt.s32.totalorder %v1086, 200
          %vm1119 = vcmp.lt.s32.totalorder %v1087, 200
          %vm1120 = vcmp.lt.s32.totalorder %v1088, 200
          %vm1121 = vcmp.lt.s32.totalorder %v1089, 200
          %vm1122 = vcmp.lt.s32.totalorder %v1090, 200
          %vm1123 = vcmp.lt.s32.totalorder %v1091, 200
          %vm1124 = vcmp.lt.s32.totalorder %v1092, 200
          %vm1125 = vcmp.lt.s32.totalorder %v1093, 200
          %vm1126 = vcmp.lt.s32.totalorder %v1094, 200
          %vm1127 = vcmp.lt.s32.totalorder %v1095, 200
          %vm1128 = vcmp.lt.s32.totalorder %v1096, 200
          %vm1129 = vcmp.lt.s32.totalorder %v1097, 200
          %vm1130 = vcmp.lt.s32.totalorder %v1098, 200
          %vm1131 = vcmp.lt.s32.totalorder %v1099, 200
          %vm1132 = vcmp.lt.s32.totalorder %v1100, 200
          %vm1133 = vcmp.lt.s32.totalorder %v1101, 200
          %vm1134 = vcmp.lt.s32.totalorder %v1102, 200
          %vm1135 = vcmp.lt.s32.totalorder %v1103, 200
          %vm1136 = vcmp.lt.s32.totalorder %v1104, 200
          %vm1137 = vcmp.lt.s32.totalorder %v1105, 200
          %vm1138 = vcmp.lt.s32.totalorder %v1106, 200
          %vm1139 = vcmp.lt.s32.totalorder %v1107, 200
          %vm1140 = vcmp.lt.s32.totalorder %v1108, 200
          %vm1141 = vcmp.lt.s32.totalorder %v1109, 200
          %vm1142 = vcmp.lt.s32.totalorder %v1110, 200
          %v1143 = vmax.f32 %v918, 0.0
          %v1144 = vmax.f32 %v921, 0.0
          %v1145 = vmax.f32 %v926, 0.0
          %v1146 = vmax.f32 %v929, 0.0
          %v1147 = vmax.f32 %v934, 0.0
          %v1148 = vmax.f32 %v937, 0.0
          %v1149 = vmax.f32 %v942, 0.0
          %v1150 = vmax.f32 %v945, 0.0
          %v1151 = vmax.f32 %v950, 0.0
          %v1152 = vmax.f32 %v953, 0.0
          %v1153 = vmax.f32 %v958, 0.0
          %v1154 = vmax.f32 %v961, 0.0
          %v1155 = vmax.f32 %v966, 0.0
          %v1156 = vmax.f32 %v969, 0.0
          %v1157 = vmax.f32 %v974, 0.0
          %v1158 = vmax.f32 %v977, 0.0
          %v1159 = vmax.f32 %v982, 0.0
          %v1160 = vmax.f32 %v985, 0.0
          %v1161 = vmax.f32 %v990, 0.0
          %v1162 = vmax.f32 %v993, 0.0
          %v1163 = vmax.f32 %v998, 0.0
          %v1164 = vmax.f32 %v1001, 0.0
          %v1165 = vmax.f32 %v1006, 0.0
          %v1166 = vmax.f32 %v1009, 0.0
          %v1167 = vmax.f32 %v1014, 0.0
          %v1168 = vmax.f32 %v1017, 0.0
          %v1169 = vmax.f32 %v1022, 0.0
          %v1170 = vmax.f32 %v1025, 0.0
          %v1171 = vmax.f32 %v1030, 0.0
          %v1172 = vmax.f32 %v1033, 0.0
          %v1173 = vmax.f32 %v1038, 0.0
          %v1174 = vmax.f32 %v1041, 0.0
          %v1175 = vsel %vm1111, 1, 0
          %v1176 = vsel %vm1112, 1, 0
          %v1177 = vsel %vm1113, 1, 0
          %v1178 = vsel %vm1114, 1, 0
          %v1179 = vsel %vm1115, 1, 0
          %v1180 = vsel %vm1116, 1, 0
          %v1181 = vsel %vm1117, 1, 0
          %v1182 = vsel %vm1118, 1, 0
          %v1183 = vsel %vm1119, 1, 0
          %v1184 = vsel %vm1120, 1, 0
          %v1185 = vsel %vm1121, 1, 0
          %v1186 = vsel %vm1122, 1, 0
          %v1187 = vsel %vm1123, 1, 0
          %v1188 = vsel %vm1124, 1, 0
          %v1189 = vsel %vm1125, 1, 0
          %v1190 = vsel %vm1126, 1, 0
          %v1191 = vsel %vm1127, 1, 0
          %v1192 = vsel %vm1128, 1, 0
          %v1193 = vsel %vm1129, 1, 0
          %v1194 = vsel %vm1130, 1, 0
          %v1195 = vsel %vm1131, 1, 0
          %v1196 = vsel %vm1132, 1, 0
          %v1197 = vsel %vm1133, 1, 0
          %v1198 = vsel %vm1134, 1, 0
          %v1199 = vsel %vm1135, 1, 0
          %v1200 = vsel %vm1136, 1, 0
          %v1201 = vsel %vm1137, 1, 0
          %v1202 = vsel %vm1138, 1, 0
          %v1203 = vsel %vm1139, 1, 0
          %v1204 = vsel %vm1140, 1, 0
          %v1205 = vsel %vm1141, 1, 0
          %v1206 = vsel %vm1142, 1, 0
          %vm1207 = vcmp.eq.s32.totalorder %v1175, 1
          %vm1208 = vcmp.eq.s32.totalorder %v1176, 1
          %vm1209 = vcmp.eq.s32.totalorder %v1177, 1
          %vm1210 = vcmp.eq.s32.totalorder %v1178, 1
          %vm1211 = vcmp.eq.s32.totalorder %v1179, 1
          %vm1212 = vcmp.eq.s32.totalorder %v1180, 1
          %vm1213 = vcmp.eq.s32.totalorder %v1181, 1
          %vm1214 = vcmp.eq.s32.totalorder %v1182, 1
          %vm1215 = vcmp.eq.s32.totalorder %v1183, 1
          %vm1216 = vcmp.eq.s32.totalorder %v1184, 1
          %vm1217 = vcmp.eq.s32.totalorder %v1185, 1
          %vm1218 = vcmp.eq.s32.totalorder %v1186, 1
          %vm1219 = vcmp.eq.s32.totalorder %v1187, 1
          %vm1220 = vcmp.eq.s32.totalorder %v1188, 1
          %vm1221 = vcmp.eq.s32.totalorder %v1189, 1
          %vm1222 = vcmp.eq.s32.totalorder %v1190, 1
          %vm1223 = vcmp.eq.s32.totalorder %v1191, 1
          %vm1224 = vcmp.eq.s32.totalorder %v1192, 1
          %vm1225 = vcmp.eq.s32.totalorder %v1193, 1
          %vm1226 = vcmp.eq.s32.totalorder %v1194, 1
          %vm1227 = vcmp.eq.s32.totalorder %v1195, 1
          %vm1228 = vcmp.eq.s32.totalorder %v1196, 1
          %vm1229 = vcmp.eq.s32.totalorder %v1197, 1
          %vm1230 = vcmp.eq.s32.totalorder %v1198, 1
          %vm1231 = vcmp.eq.s32.totalorder %v1199, 1
          %vm1232 = vcmp.eq.s32.totalorder %v1200, 1
          %vm1233 = vcmp.eq.s32.totalorder %v1201, 1
          %vm1234 = vcmp.eq.s32.totalorder %v1202, 1
          %vm1235 = vcmp.eq.s32.totalorder %v1203, 1
          %vm1236 = vcmp.eq.s32.totalorder %v1204, 1
          %vm1237 = vcmp.eq.s32.totalorder %v1205, 1
          %vm1238 = vcmp.eq.s32.totalorder %v1206, 1
          %v1239 = vsel %vm1207, %v1143, 0.0
          %v1240 = vsel %vm1208, %v1144, 0.0
          %v1241 = vsel %vm1209, %v1145, 0.0
          %v1242 = vsel %vm1210, %v1146, 0.0
          %v1243 = vsel %vm1211, %v1147, 0.0
          %v1244 = vsel %vm1212, %v1148, 0.0
          %v1245 = vsel %vm1213, %v1149, 0.0
          %v1246 = vsel %vm1214, %v1150, 0.0
          %v1247 = vsel %vm1215, %v1151, 0.0
          %v1248 = vsel %vm1216, %v1152, 0.0
          %v1249 = vsel %vm1217, %v1153, 0.0
          %v1250 = vsel %vm1218, %v1154, 0.0
          %v1251 = vsel %vm1219, %v1155, 0.0
          %v1252 = vsel %vm1220, %v1156, 0.0
          %v1253 = vsel %vm1221, %v1157, 0.0
          %v1254 = vsel %vm1222, %v1158, 0.0
          %v1255 = vsel %vm1223, %v1159, 0.0
          %v1256 = vsel %vm1224, %v1160, 0.0
          %v1257 = vsel %vm1225, %v1161, 0.0
          %v1258 = vsel %vm1226, %v1162, 0.0
          %v1259 = vsel %vm1227, %v1163, 0.0
          %v1260 = vsel %vm1228, %v1164, 0.0
          %v1261 = vsel %vm1229, %v1165, 0.0
          %v1262 = vsel %vm1230, %v1166, 0.0
          %v1263 = vsel %vm1231, %v1167, 0.0
          %v1264 = vsel %vm1232, %v1168, 0.0
          %v1265 = vsel %vm1233, %v1169, 0.0
          %v1266 = vsel %vm1234, %v1170, 0.0
          %v1267 = vsel %vm1235, %v1171, 0.0
          %v1268 = vsel %vm1236, %v1172, 0.0
          %v1269 = vsel %vm1237, %v1173, 0.0
          %v1270 = vsel %vm1238, %v1174, 0.0
          %v1271 = vpack.c.bf16 %v1240, %v1239
          %v1272 = vpack.c.bf16 %v1242, %v1241
          %v1273 = vpack.c.bf16 %v1244, %v1243
          %v1274 = vpack.c.bf16 %v1246, %v1245
          %v1275 = vpack.c.bf16 %v1248, %v1247
          %v1276 = vpack.c.bf16 %v1250, %v1249
          %v1277 = vpack.c.bf16 %v1252, %v1251
          %v1278 = vpack.c.bf16 %v1254, %v1253
          %v1279 = vpack.c.bf16 %v1256, %v1255
          %v1280 = vpack.c.bf16 %v1258, %v1257
          %v1281 = vpack.c.bf16 %v1260, %v1259
          %v1282 = vpack.c.bf16 %v1262, %v1261
          %v1283 = vpack.c.bf16 %v1264, %v1263
          %v1284 = vpack.c.bf16 %v1266, %v1265
          %v1285 = vpack.c.bf16 %v1268, %v1267
          %v1286 = vpack.c.bf16 %v1270, %v1269
          %v1303 = vunpack.c.l.b16 %v1271
          %v1304 = vunpack.c.h.b16 %v1271
          %v1305 = vunpack.c.l.b16 %v1272
          %v1306 = vunpack.c.h.b16 %v1272
          %v1307 = vunpack.c.l.b16 %v1273
          %v1308 = vunpack.c.h.b16 %v1273
          %v1309 = vunpack.c.l.b16 %v1274
          %v1310 = vunpack.c.h.b16 %v1274
          %v1311 = vunpack.c.l.b16 %v1275
          %v1312 = vunpack.c.h.b16 %v1275
          %v1313 = vunpack.c.l.b16 %v1276
          %v1314 = vunpack.c.h.b16 %v1276
          %v1315 = vunpack.c.l.b16 %v1277
          %v1316 = vunpack.c.h.b16 %v1277
          %v1317 = vunpack.c.l.b16 %v1278
          %v1318 = vunpack.c.h.b16 %v1278
          %v1319 = vunpack.c.l.b16 %v1279
          %v1320 = vunpack.c.h.b16 %v1279
          %v1321 = vunpack.c.l.b16 %v1280
          %v1322 = vunpack.c.h.b16 %v1280
          %v1323 = vunpack.c.l.b16 %v1281
          %v1324 = vunpack.c.h.b16 %v1281
          %v1325 = vunpack.c.l.b16 %v1282
          %v1326 = vunpack.c.h.b16 %v1282
          %v1327 = vunpack.c.l.b16 %v1283
          %v1328 = vunpack.c.h.b16 %v1283
          %v1329 = vunpack.c.l.b16 %v1284
          %v1330 = vunpack.c.h.b16 %v1284
          %v1331 = vunpack.c.l.b16 %v1285
          %v1332 = vunpack.c.h.b16 %v1285
          %v1333 = vunpack.c.l.b16 %v1286
          %v1334 = vunpack.c.h.b16 %v1286
          %v1335 = vpack.c.b16 %v1303, %v1303
          %v1336 = vpack.c.b16 %v1304, %v1304
          %v1337 = vpack.c.b16 %v1305, %v1305
          %v1338 = vpack.c.b16 %v1306, %v1306
          %v1339 = vpack.c.b16 %v1307, %v1307
          %v1340 = vpack.c.b16 %v1308, %v1308
          %v1341 = vpack.c.b16 %v1309, %v1309
          %v1342 = vpack.c.b16 %v1310, %v1310
          %v1343 = vpack.c.b16 %v1311, %v1311
          %v1344 = vpack.c.b16 %v1312, %v1312
          %v1345 = vpack.c.b16 %v1313, %v1313
          %v1346 = vpack.c.b16 %v1314, %v1314
          %v1347 = vpack.c.b16 %v1315, %v1315
          %v1348 = vpack.c.b16 %v1316, %v1316
          %v1349 = vpack.c.b16 %v1317, %v1317
          %v1350 = vpack.c.b16 %v1318, %v1318
          %v1351 = vpack.c.b16 %v1319, %v1319
          %v1352 = vpack.c.b16 %v1320, %v1320
          %v1353 = vpack.c.b16 %v1321, %v1321
          %v1354 = vpack.c.b16 %v1322, %v1322
          %v1355 = vpack.c.b16 %v1323, %v1323
          %v1356 = vpack.c.b16 %v1324, %v1324
          %v1357 = vpack.c.b16 %v1325, %v1325
          %v1358 = vpack.c.b16 %v1326, %v1326
          %v1359 = vpack.c.b16 %v1327, %v1327
          %v1360 = vpack.c.b16 %v1328, %v1328
          %v1361 = vpack.c.b16 %v1329, %v1329
          %v1362 = vpack.c.b16 %v1330, %v1330
          %v1363 = vpack.c.b16 %v1331, %v1331
          %v1364 = vpack.c.b16 %v1332, %v1332
          %v1365 = vpack.c.b16 %v1333, %v1333
          %v1366 = vpack.c.b16 %v1334, %v1334
          %s1399 = sshra.s32 %s1044, 3
          %s1400 = sand.u32 %s1044, 7
          %s1401 = smul.addr %s1399, 4
          %s1402 = scalar_lea.vmem [#allocation2], %s1401
          %1403 = vst [vmem:[%s1402] sm:$0xf] %v1335
          %1404 = vst [vmem:[%s1402 + $0x4] sm:$0xf] %v1336
          %1405 = vst [vmem:[%s1402 + $0x8] sm:$0xf] %v1337
          %1406 = vst [vmem:[%s1402 + $0xc] sm:$0xf] %v1338
          %1407 = vst [vmem:[%s1402 + $0x10] sm:$0xf] %v1339
          %1408 = vst [vmem:[%s1402 + $0x14] sm:$0xf] %v1340
          %1409 = vst [vmem:[%s1402 + $0x18] sm:$0xf] %v1341
          %1410 = vst [vmem:[%s1402 + $0x1c] sm:$0xf] %v1342
          %1411 = vst [vmem:[%s1402 + $0x20] sm:$0xf] %v1343
          %1412 = vst [vmem:[%s1402 + $0x24] sm:$0xf] %v1344
          %1413 = vst [vmem:[%s1402 + $0x28] sm:$0xf] %v1345
          %1414 = vst [vmem:[%s1402 + $0x2c] sm:$0xf] %v1346
          %1415 = vst [vmem:[%s1402 + $0x30] sm:$0xf] %v1347
          %1416 = vst [vmem:[%s1402 + $0x34] sm:$0xf] %v1348
          %1417 = vst [vmem:[%s1402 + $0x38] sm:$0xf] %v1349
          %1418 = vst [vmem:[%s1402 + $0x3c] sm:$0xf] %v1350
          %1419 = vst [vmem:[%s1402 + $0x40] sm:$0xf] %v1351
          %1420 = vst [vmem:[%s1402 + $0x44] sm:$0xf] %v1352
          %1421 = vst [vmem:[%s1402 + $0x48] sm:$0xf] %v1353
          %1422 = vst [vmem:[%s1402 + $0x4c] sm:$0xf] %v1354
          %1423 = vst [vmem:[%s1402 + $0x50] sm:$0xf] %v1355
          %1424 = vst [vmem:[%s1402 + $0x54] sm:$0xf] %v1356
          %1425 = vst [vmem:[%s1402 + $0x58] sm:$0xf] %v1357
          %1426 = vst [vmem:[%s1402 + $0x5c] sm:$0xf] %v1358
          %1427 = vst [vmem:[%s1402 + $0x60] sm:$0xf] %v1359
          %1428 = vst [vmem:[%s1402 + $0x64] sm:$0xf] %v1360
          %1429 = vst [vmem:[%s1402 + $0x68] sm:$0xf] %v1361
          %1430 = vst [vmem:[%s1402 + $0x6c] sm:$0xf] %v1362
          %1431 = vst [vmem:[%s1402 + $0x70] sm:$0xf] %v1363
          %1432 = vst [vmem:[%s1402 + $0x74] sm:$0xf] %v1364
          %1433 = vst [vmem:[%s1402 + $0x78] sm:$0xf] %v1365
          %1434 = vst [vmem:[%s1402 + $0x7c] sm:$0xf] %v1366
        $region84: #{tpu_custom_call.1} parent=59 // pred_fallthru
          _
        %p1435 = scmp.ge.s32.totalorder %s37, 1
        %p1436 = pnand %p1435, %p679
        %p1437 = pneg %p1436
        // Predicated region
        $region85: #{tpu_custom_call.1} parent=59 // pred_check
          _
        $region86: #{tpu_custom_call.1} parent=59 // pred_check_branch
          %1439 = sbr.rel (%p1436) target = $region88
        $region87: #{tpu_custom_call.1} parent=59 // pred_region
          %s1440 = ssub.s32 %s37, 1
          %p1441 = scmp.lt.s32.totalorder %s1440, 0
          %s1442 = ssub.s32 0, %s1440
          %s1443 = scalar_select %p1441, %s1442, %s1440
          %s1444 = sand.u32 %s1443, 1
          %s1445 = ssub.s32 0, %s1444
          %s1446 = scalar_select %p1441, %s1445, %s1444
          %p1447 = scmp.ne.s32.totalorder %s1446, 0
          %p1448 = scmp.lt.s32.totalorder %s1446, 0
          %p1449 = pnand %p1448, %p1447
          %p1450 = pneg %p1449
          %s1451 = sadd.s32 %s1446, 2
          %s1452 = scalar_select %p1450, %s1451, %s1446
          %s1453 = smul.u32 %s1452, 256
          %s1454 = sadd.s32 %s38, %s39
          %s1455 = sld [smem:[#allocation5 + %s1454]]
          %s1456 = smul.u32 %s1455, 256
          %s1457 = sadd.s32 %s1453, %s1456
          %s1458 = sshra.s32 %s1457, 3
          %s1459 = sand.u32 %s1457, 7
          %s1460 = smul.addr %s1458, 4
          %s1461 = scalar_lea.vmem [#allocation2], %s1460
          %v1462 = vld [vmem:[%s1461] sm:$0xf]
          %v1463 = vld [vmem:[%s1461 + $0x4] sm:$0xf]
          %v1464 = vld [vmem:[%s1461 + $0x8] sm:$0xf]
          %v1465 = vld [vmem:[%s1461 + $0xc] sm:$0xf]
          %v1466 = vld [vmem:[%s1461 + $0x10] sm:$0xf]
          %v1467 = vld [vmem:[%s1461 + $0x14] sm:$0xf]
          %v1468 = vld [vmem:[%s1461 + $0x18] sm:$0xf]
          %v1469 = vld [vmem:[%s1461 + $0x1c] sm:$0xf]
          %v1470 = vld [vmem:[%s1461 + $0x20] sm:$0xf]
          %v1471 = vld [vmem:[%s1461 + $0x24] sm:$0xf]
          %v1472 = vld [vmem:[%s1461 + $0x28] sm:$0xf]
          %v1473 = vld [vmem:[%s1461 + $0x2c] sm:$0xf]
          %v1474 = vld [vmem:[%s1461 + $0x30] sm:$0xf]
          %v1475 = vld [vmem:[%s1461 + $0x34] sm:$0xf]
          %v1476 = vld [vmem:[%s1461 + $0x38] sm:$0xf]
          %v1477 = vld [vmem:[%s1461 + $0x3c] sm:$0xf]
          %v1478 = vld [vmem:[%s1461 + $0x40] sm:$0xf]
          %v1479 = vld [vmem:[%s1461 + $0x44] sm:$0xf]
          %v1480 = vld [vmem:[%s1461 + $0x48] sm:$0xf]
          %v1481 = vld [vmem:[%s1461 + $0x4c] sm:$0xf]
          %v1482 = vld [vmem:[%s1461 + $0x50] sm:$0xf]
          %v1483 = vld [vmem:[%s1461 + $0x54] sm:$0xf]
          %v1484 = vld [vmem:[%s1461 + $0x58] sm:$0xf]
          %v1485 = vld [vmem:[%s1461 + $0x5c] sm:$0xf]
          %v1486 = vld [vmem:[%s1461 + $0x60] sm:$0xf]
          %v1487 = vld [vmem:[%s1461 + $0x64] sm:$0xf]
          %v1488 = vld [vmem:[%s1461 + $0x68] sm:$0xf]
          %v1489 = vld [vmem:[%s1461 + $0x6c] sm:$0xf]
          %v1490 = vld [vmem:[%s1461 + $0x70] sm:$0xf]
          %v1491 = vld [vmem:[%s1461 + $0x74] sm:$0xf]
          %v1492 = vld [vmem:[%s1461 + $0x78] sm:$0xf]
          %v1493 = vld [vmem:[%s1461 + $0x7c] sm:$0xf]
          %v1494 = vld [vmem:[%s645] sm:$0xff]
          %v1495 = vld [vmem:[%s645 + $0x8] sm:$0xff]
          %v1496 = vld [vmem:[%s645 + $0x10] sm:$0xff]
          %v1497 = vld [vmem:[%s645 + $0x18] sm:$0xff]
          %v1498 = vld [vmem:[%s645 + $0x20] sm:$0xff]
          %v1499 = vld [vmem:[%s645 + $0x28] sm:$0xff]
          %v1500 = vld [vmem:[%s645 + $0x30] sm:$0xff]
          %v1501 = vld [vmem:[%s645 + $0x38] sm:$0xff]
          %v1502 = vld [vmem:[%s645 + $0x40] sm:$0xff]
          %v1503 = vld [vmem:[%s645 + $0x48] sm:$0xff]
          %v1504 = vld [vmem:[%s645 + $0x50] sm:$0xff]
          %v1505 = vld [vmem:[%s645 + $0x58] sm:$0xff]
          %v1506 = vld [vmem:[%s645 + $0x60] sm:$0xff]
          %v1507 = vld [vmem:[%s645 + $0x68] sm:$0xff]
          %v1508 = vld [vmem:[%s645 + $0x70] sm:$0xff]
          %v1509 = vld [vmem:[%s645 + $0x78] sm:$0xff]
          %v1510 = vld [vmem:[%s645 + $0x80] sm:$0xff]
          %v1511 = vld [vmem:[%s645 + $0x88] sm:$0xff]
          %v1512 = vld [vmem:[%s645 + $0x90] sm:$0xff]
          %v1513 = vld [vmem:[%s645 + $0x98] sm:$0xff]
          %v1514 = vld [vmem:[%s645 + $0xa0] sm:$0xff]
          %v1515 = vld [vmem:[%s645 + $0xa8] sm:$0xff]
          %v1516 = vld [vmem:[%s645 + $0xb0] sm:$0xff]
          %v1517 = vld [vmem:[%s645 + $0xb8] sm:$0xff]
          %v1518 = vld [vmem:[%s645 + $0xc0] sm:$0xff]
          %v1519 = vld [vmem:[%s645 + $0xc8] sm:$0xff]
          %v1520 = vld [vmem:[%s645 + $0xd0] sm:$0xff]
          %v1521 = vld [vmem:[%s645 + $0xd8] sm:$0xff]
          %v1522 = vld [vmem:[%s645 + $0xe0] sm:$0xff]
          %v1523 = vld [vmem:[%s645 + $0xe8] sm:$0xff]
          %v1524 = vld [vmem:[%s645 + $0xf0] sm:$0xff]
          %v1525 = vld [vmem:[%s645 + $0xf8] sm:$0xff]
          %v1558 = vunpack.c.l.b16 %v1494
          %v1559 = vunpack.c.h.b16 %v1494
          %v1560 = vunpack.c.l.b16 %v1495
          %v1561 = vunpack.c.h.b16 %v1495
          %v1562 = vunpack.c.l.b16 %v1496
          %v1563 = vunpack.c.h.b16 %v1496
          %v1564 = vunpack.c.l.b16 %v1497
          %v1565 = vunpack.c.h.b16 %v1497
          %v1566 = vunpack.c.l.b16 %v1498
          %v1567 = vunpack.c.h.b16 %v1498
          %v1568 = vunpack.c.l.b16 %v1499
          %v1569 = vunpack.c.h.b16 %v1499
          %v1570 = vunpack.c.l.b16 %v1500
          %v1571 = vunpack.c.h.b16 %v1500
          %v1572 = vunpack.c.l.b16 %v1501
          %v1573 = vunpack.c.h.b16 %v1501
          %v1574 = vunpack.c.l.b16 %v1502
          %v1575 = vunpack.c.h.b16 %v1502
          %v1576 = vunpack.c.l.b16 %v1503
          %v1577 = vunpack.c.h.b16 %v1503
          %v1578 = vunpack.c.l.b16 %v1504
          %v1579 = vunpack.c.h.b16 %v1504
          %v1580 = vunpack.c.l.b16 %v1505
          %v1581 = vunpack.c.h.b16 %v1505
          %v1582 = vunpack.c.l.b16 %v1506
          %v1583 = vunpack.c.h.b16 %v1506
          %v1584 = vunpack.c.l.b16 %v1507
          %v1585 = vunpack.c.h.b16 %v1507
          %v1586 = vunpack.c.l.b16 %v1508
          %v1587 = vunpack.c.h.b16 %v1508
          %v1588 = vunpack.c.l.b16 %v1509
          %v1589 = vunpack.c.h.b16 %v1509
          %v1590 = vunpack.c.l.b16 %v1510
          %v1591 = vunpack.c.h.b16 %v1510
          %v1592 = vunpack.c.l.b16 %v1511
          %v1593 = vunpack.c.h.b16 %v1511
          %v1594 = vunpack.c.l.b16 %v1512
          %v1595 = vunpack.c.h.b16 %v1512
          %v1596 = vunpack.c.l.b16 %v1513
          %v1597 = vunpack.c.h.b16 %v1513
          %v1598 = vunpack.c.l.b16 %v1514
          %v1599 = vunpack.c.h.b16 %v1514
          %v1600 = vunpack.c.l.b16 %v1515
          %v1601 = vunpack.c.h.b16 %v1515
          %v1602 = vunpack.c.l.b16 %v1516
          %v1603 = vunpack.c.h.b16 %v1516
          %v1604 = vunpack.c.l.b16 %v1517
          %v1605 = vunpack.c.h.b16 %v1517
          %v1606 = vunpack.c.l.b16 %v1518
          %v1607 = vunpack.c.h.b16 %v1518
          %v1608 = vunpack.c.l.b16 %v1519
          %v1609 = vunpack.c.h.b16 %v1519
          %v1610 = vunpack.c.l.b16 %v1520
          %v1611 = vunpack.c.h.b16 %v1520
          %v1612 = vunpack.c.l.b16 %v1521
          %v1613 = vunpack.c.h.b16 %v1521
          %v1614 = vunpack.c.l.b16 %v1522
          %v1615 = vunpack.c.h.b16 %v1522
          %v1616 = vunpack.c.l.b16 %v1523
          %v1617 = vunpack.c.h.b16 %v1523
          %v1618 = vunpack.c.l.b16 %v1524
          %v1619 = vunpack.c.h.b16 %v1524
          %v1620 = vunpack.c.l.b16 %v1525
          %v1621 = vunpack.c.h.b16 %v1525
          %v1622 = vpack.c.b16 %v1560, %v1558
          %v1623 = vpack.c.b16 %v1561, %v1559
          %v1624 = vpack.c.b16 %v1564, %v1562
          %v1625 = vpack.c.b16 %v1565, %v1563
          %v1626 = vpack.c.b16 %v1568, %v1566
          %v1627 = vpack.c.b16 %v1569, %v1567
          %v1628 = vpack.c.b16 %v1572, %v1570
          %v1629 = vpack.c.b16 %v1573, %v1571
          %v1630 = vpack.c.b16 %v1576, %v1574
          %v1631 = vpack.c.b16 %v1577, %v1575
          %v1632 = vpack.c.b16 %v1580, %v1578
          %v1633 = vpack.c.b16 %v1581, %v1579
          %v1634 = vpack.c.b16 %v1584, %v1582
          %v1635 = vpack.c.b16 %v1585, %v1583
          %v1636 = vpack.c.b16 %v1588, %v1586
          %v1637 = vpack.c.b16 %v1589, %v1587
          %v1638 = vpack.c.b16 %v1592, %v1590
          %v1639 = vpack.c.b16 %v1593, %v1591
          %v1640 = vpack.c.b16 %v1596, %v1594
          %v1641 = vpack.c.b16 %v1597, %v1595
          %v1642 = vpack.c.b16 %v1600, %v1598
          %v1643 = vpack.c.b16 %v1601, %v1599
          %v1644 = vpack.c.b16 %v1604, %v1602
          %v1645 = vpack.c.b16 %v1605, %v1603
          %v1646 = vpack.c.b16 %v1608, %v1606
          %v1647 = vpack.c.b16 %v1609, %v1607
          %v1648 = vpack.c.b16 %v1612, %v1610
          %v1649 = vpack.c.b16 %v1613, %v1611
          %v1650 = vpack.c.b16 %v1616, %v1614
          %v1651 = vpack.c.b16 %v1617, %v1615
          %v1652 = vpack.c.b16 %v1620, %v1618
          %v1653 = vpack.c.b16 %v1621, %v1619
          %v1718 = vunpack.c.l.b16 %v1462
          %v1719 = vunpack.c.l.b16 %v1463
          %v1720 = vunpack.c.l.b16 %v1464
          %v1721 = vunpack.c.l.b16 %v1465
          %v1722 = vunpack.c.l.b16 %v1466
          %v1723 = vunpack.c.l.b16 %v1467
          %v1724 = vunpack.c.l.b16 %v1468
          %v1725 = vunpack.c.l.b16 %v1469
          %v1726 = vunpack.c.l.b16 %v1470
          %v1727 = vunpack.c.l.b16 %v1471
          %v1728 = vunpack.c.l.b16 %v1472
          %v1729 = vunpack.c.l.b16 %v1473
          %v1730 = vunpack.c.l.b16 %v1474
          %v1731 = vunpack.c.l.b16 %v1475
          %v1732 = vunpack.c.l.b16 %v1476
          %v1733 = vunpack.c.l.b16 %v1477
          %v1734 = vunpack.c.l.b16 %v1478
          %v1735 = vunpack.c.l.b16 %v1479
          %v1736 = vunpack.c.l.b16 %v1480
          %v1737 = vunpack.c.l.b16 %v1481
          %v1738 = vunpack.c.l.b16 %v1482
          %v1739 = vunpack.c.l.b16 %v1483
          %v1740 = vunpack.c.l.b16 %v1484
          %v1741 = vunpack.c.l.b16 %v1485
          %v1742 = vunpack.c.l.b16 %v1486
          %v1743 = vunpack.c.l.b16 %v1487
          %v1744 = vunpack.c.l.b16 %v1488
          %v1745 = vunpack.c.l.b16 %v1489
          %v1746 = vunpack.c.l.b16 %v1490
          %v1747 = vunpack.c.l.b16 %v1491
          %v1748 = vunpack.c.l.b16 %v1492
          %v1749 = vunpack.c.l.b16 %v1493
          %v1750 = vpack.c.b16 %v1719, %v1718
          %v1751 = vpack.c.b16 %v1721, %v1720
          %v1752 = vpack.c.b16 %v1723, %v1722
          %v1753 = vpack.c.b16 %v1725, %v1724
          %v1754 = vpack.c.b16 %v1727, %v1726
          %v1755 = vpack.c.b16 %v1729, %v1728
          %v1756 = vpack.c.b16 %v1731, %v1730
          %v1757 = vpack.c.b16 %v1733, %v1732
          %v1758 = vpack.c.b16 %v1735, %v1734
          %v1759 = vpack.c.b16 %v1737, %v1736
          %v1760 = vpack.c.b16 %v1739, %v1738
          %v1761 = vpack.c.b16 %v1741, %v1740
          %v1762 = vpack.c.b16 %v1743, %v1742
          %v1763 = vpack.c.b16 %v1745, %v1744
          %v1764 = vpack.c.b16 %v1747, %v1746
          %v1765 = vpack.c.b16 %v1749, %v1748
          %1782 = vmatprep.subr.bf16.mxu0 0
          %1783 = vmatpush1.bf16.msra.mxu0 %v1757
          %1784 = vmatprep.subr.bf16.mxu0 0
          %1785 = vmatpush1.bf16.msra.mxu0 %v1756
          %1786 = vmatprep.subr.bf16.mxu0 0
          %1787 = vmatpush1.bf16.msra.mxu0 %v1755
          %1788 = vmatprep.subr.bf16.mxu0 0
          %1789 = vmatpush1.bf16.msra.mxu0 %v1754
          %1790 = vmatprep.subr.bf16.mxu0 0
          %1791 = vmatpush1.bf16.msra.mxu0 %v1753
          %1792 = vmatprep.subr.bf16.mxu0 0
          %1793 = vmatpush1.bf16.msra.mxu0 %v1752
          %1794 = vmatprep.subr.bf16.mxu0 0
          %1795 = vmatpush1.bf16.msra.mxu0 %v1751
          %1796 = vmatprep.subr.bf16.mxu0 0
          %1797 = vmatpush1.bf16.msra.mxu0 %v1750
          %1798 = vmatprep.subr.bf16.mxu0 0
          %1799 = vmatpush2.bf16.msra.mxu0 %v1765
          %1800 = vmatprep.subr.bf16.mxu0 0
          %1801 = vmatpush2.bf16.msra.mxu0 %v1764
          %1802 = vmatprep.subr.bf16.mxu0 0
          %1803 = vmatpush2.bf16.msra.mxu0 %v1763
          %1804 = vmatprep.subr.bf16.mxu0 0
          %1805 = vmatpush2.bf16.msra.mxu0 %v1762
          %1806 = vmatprep.subr.bf16.mxu0 0
          %1807 = vmatpush2.bf16.msra.mxu0 %v1761
          %1808 = vmatprep.subr.bf16.mxu0 0
          %1809 = vmatpush2.bf16.msra.mxu0 %v1760
          %1810 = vmatprep.subr.bf16.mxu0 0
          %1811 = vmatpush2.bf16.msra.mxu0 %v1759
          %1812 = vmatprep.subr.bf16.mxu0 0
          %1813 = vmatpush2.bf16.msra.mxu0 %v1758
          %1814 = vmatprep.mubr.bf16.mxu0 %v1623
          %1815 = vmatmul.mubr.bf16.gmra.mxu0 %v1622
          %v1816 = vpop.f32.mrf.mxu0
          %v1817 = vadd.f32 0.0, %v1816
          %v1818 = vpop.f32.mrf.mxu0
          %v1819 = vpop.f32.mrf.mxu0
          %v1820 = vadd.f32 0.0, %v1819
          %v1821 = vpop.f32.mrf.mxu0
          %1822 = vmatprep.mubr.bf16.mxu0 %v1625
          %1823 = vmatmul.mubr.bf16.gmra.mxu0 %v1624
          %v1824 = vpop.f32.mrf.mxu0
          %v1825 = vadd.f32 0.0, %v1824
          %v1826 = vpop.f32.mrf.mxu0
          %v1827 = vpop.f32.mrf.mxu0
          %v1828 = vadd.f32 0.0, %v1827
          %v1829 = vpop.f32.mrf.mxu0
          %1830 = vmatprep.mubr.bf16.mxu0 %v1627
          %1831 = vmatmul.mubr.bf16.gmra.mxu0 %v1626
          %v1832 = vpop.f32.mrf.mxu0
          %v1833 = vadd.f32 0.0, %v1832
          %v1834 = vpop.f32.mrf.mxu0
          %v1835 = vpop.f32.mrf.mxu0
          %v1836 = vadd.f32 0.0, %v1835
          %v1837 = vpop.f32.mrf.mxu0
          %1838 = vmatprep.mubr.bf16.mxu0 %v1629
          %1839 = vmatmul.mubr.bf16.gmra.mxu0 %v1628
          %v1840 = vpop.f32.mrf.mxu0
          %v1841 = vadd.f32 0.0, %v1840
          %v1842 = vpop.f32.mrf.mxu0
          %v1843 = vpop.f32.mrf.mxu0
          %v1844 = vadd.f32 0.0, %v1843
          %v1845 = vpop.f32.mrf.mxu0
          %1846 = vmatprep.mubr.bf16.mxu0 %v1631
          %1847 = vmatmul.mubr.bf16.gmra.mxu0 %v1630
          %v1848 = vpop.f32.mrf.mxu0
          %v1849 = vadd.f32 0.0, %v1848
          %v1850 = vpop.f32.mrf.mxu0
          %v1851 = vpop.f32.mrf.mxu0
          %v1852 = vadd.f32 0.0, %v1851
          %v1853 = vpop.f32.mrf.mxu0
          %1854 = vmatprep.mubr.bf16.mxu0 %v1633
          %1855 = vmatmul.mubr.bf16.gmra.mxu0 %v1632
          %v1856 = vpop.f32.mrf.mxu0
          %v1857 = vadd.f32 0.0, %v1856
          %v1858 = vpop.f32.mrf.mxu0
          %v1859 = vpop.f32.mrf.mxu0
          %v1860 = vadd.f32 0.0, %v1859
          %v1861 = vpop.f32.mrf.mxu0
          %1862 = vmatprep.mubr.bf16.mxu0 %v1635
          %1863 = vmatmul.mubr.bf16.gmra.mxu0 %v1634
          %v1864 = vpop.f32.mrf.mxu0
          %v1865 = vadd.f32 0.0, %v1864
          %v1866 = vpop.f32.mrf.mxu0
          %v1867 = vpop.f32.mrf.mxu0
          %v1868 = vadd.f32 0.0, %v1867
          %v1869 = vpop.f32.mrf.mxu0
          %1870 = vmatprep.mubr.bf16.mxu0 %v1637
          %1871 = vmatmul.mubr.bf16.gmra.mxu0 %v1636
          %v1872 = vpop.f32.mrf.mxu0
          %v1873 = vadd.f32 0.0, %v1872
          %v1874 = vpop.f32.mrf.mxu0
          %v1875 = vpop.f32.mrf.mxu0
          %v1876 = vadd.f32 0.0, %v1875
          %v1877 = vpop.f32.mrf.mxu0
          %1878 = vmatprep.mubr.bf16.mxu0 %v1639
          %1879 = vmatmul.mubr.bf16.gmra.mxu0 %v1638
          %v1880 = vpop.f32.mrf.mxu0
          %v1881 = vadd.f32 0.0, %v1880
          %v1882 = vpop.f32.mrf.mxu0
          %v1883 = vpop.f32.mrf.mxu0
          %v1884 = vadd.f32 0.0, %v1883
          %v1885 = vpop.f32.mrf.mxu0
          %1886 = vmatprep.mubr.bf16.mxu0 %v1641
          %1887 = vmatmul.mubr.bf16.gmra.mxu0 %v1640
          %v1888 = vpop.f32.mrf.mxu0
          %v1889 = vadd.f32 0.0, %v1888
          %v1890 = vpop.f32.mrf.mxu0
          %v1891 = vpop.f32.mrf.mxu0
          %v1892 = vadd.f32 0.0, %v1891
          %v1893 = vpop.f32.mrf.mxu0
          %1894 = vmatprep.mubr.bf16.mxu0 %v1643
          %1895 = vmatmul.mubr.bf16.gmra.mxu0 %v1642
          %v1896 = vpop.f32.mrf.mxu0
          %v1897 = vadd.f32 0.0, %v1896
          %v1898 = vpop.f32.mrf.mxu0
          %v1899 = vpop.f32.mrf.mxu0
          %v1900 = vadd.f32 0.0, %v1899
          %v1901 = vpop.f32.mrf.mxu0
          %1902 = vmatprep.mubr.bf16.mxu0 %v1645
          %1903 = vmatmul.mubr.bf16.gmra.mxu0 %v1644
          %v1904 = vpop.f32.mrf.mxu0
          %v1905 = vadd.f32 0.0, %v1904
          %v1906 = vpop.f32.mrf.mxu0
          %v1907 = vpop.f32.mrf.mxu0
          %v1908 = vadd.f32 0.0, %v1907
          %v1909 = vpop.f32.mrf.mxu0
          %1910 = vmatprep.mubr.bf16.mxu0 %v1647
          %1911 = vmatmul.mubr.bf16.gmra.mxu0 %v1646
          %v1912 = vpop.f32.mrf.mxu0
          %v1913 = vadd.f32 0.0, %v1912
          %v1914 = vpop.f32.mrf.mxu0
          %v1915 = vpop.f32.mrf.mxu0
          %v1916 = vadd.f32 0.0, %v1915
          %v1917 = vpop.f32.mrf.mxu0
          %1918 = vmatprep.mubr.bf16.mxu0 %v1649
          %1919 = vmatmul.mubr.bf16.gmra.mxu0 %v1648
          %v1920 = vpop.f32.mrf.mxu0
          %v1921 = vadd.f32 0.0, %v1920
          %v1922 = vpop.f32.mrf.mxu0
          %v1923 = vpop.f32.mrf.mxu0
          %v1924 = vadd.f32 0.0, %v1923
          %v1925 = vpop.f32.mrf.mxu0
          %1926 = vmatprep.mubr.bf16.mxu0 %v1651
          %1927 = vmatmul.mubr.bf16.gmra.mxu0 %v1650
          %v1928 = vpop.f32.mrf.mxu0
          %v1929 = vadd.f32 0.0, %v1928
          %v1930 = vpop.f32.mrf.mxu0
          %v1931 = vpop.f32.mrf.mxu0
          %v1932 = vadd.f32 0.0, %v1931
          %v1933 = vpop.f32.mrf.mxu0
          %1934 = vmatprep.mubr.bf16.mxu0 %v1653
          %1935 = vmatmul.mubr.bf16.gmra.mxu0 %v1652
          %v1936 = vpop.f32.mrf.mxu0
          %v1937 = vadd.f32 0.0, %v1936
          %v1938 = vpop.f32.mrf.mxu0
          %v1939 = vpop.f32.mrf.mxu0
          %v1940 = vadd.f32 0.0, %v1939
          %v1941 = vpop.f32.mrf.mxu0
          %1942 = vdwg.mxu0
          %1943 = vst [vmem:[#allocation3] sm:$0xff] %v1817
          %1944 = vst [vmem:[#allocation3 + $0x8] sm:$0xff] %v1820
          %1945 = vst [vmem:[#allocation3 + $0x10] sm:$0xff] %v1825
          %1946 = vst [vmem:[#allocation3 + $0x18] sm:$0xff] %v1828
          %1947 = vst [vmem:[#allocation3 + $0x20] sm:$0xff] %v1833
          %1948 = vst [vmem:[#allocation3 + $0x28] sm:$0xff] %v1836
          %1949 = vst [vmem:[#allocation3 + $0x30] sm:$0xff] %v1841
          %1950 = vst [vmem:[#allocation3 + $0x38] sm:$0xff] %v1844
          %1951 = vst [vmem:[#allocation3 + $0x40] sm:$0xff] %v1849
          %1952 = vst [vmem:[#allocation3 + $0x48] sm:$0xff] %v1852
          %1953 = vst [vmem:[#allocation3 + $0x50] sm:$0xff] %v1857
          %1954 = vst [vmem:[#allocation3 + $0x58] sm:$0xff] %v1860
          %1955 = vst [vmem:[#allocation3 + $0x60] sm:$0xff] %v1865
          %1956 = vst [vmem:[#allocation3 + $0x68] sm:$0xff] %v1868
          %1957 = vst [vmem:[#allocation3 + $0x70] sm:$0xff] %v1873
          %1958 = vst [vmem:[#allocation3 + $0x78] sm:$0xff] %v1876
          %1959 = vst [vmem:[#allocation3 + $0x80] sm:$0xff] %v1881
          %1960 = vst [vmem:[#allocation3 + $0x88] sm:$0xff] %v1884
          %1961 = vst [vmem:[#allocation3 + $0x90] sm:$0xff] %v1889
          %1962 = vst [vmem:[#allocation3 + $0x98] sm:$0xff] %v1892
          %1963 = vst [vmem:[#allocation3 + $0xa0] sm:$0xff] %v1897
          %1964 = vst [vmem:[#allocation3 + $0xa8] sm:$0xff] %v1900
          %1965 = vst [vmem:[#allocation3 + $0xb0] sm:$0xff] %v1905
          %1966 = vst [vmem:[#allocation3 + $0xb8] sm:$0xff] %v1908
          %1967 = vst [vmem:[#allocation3 + $0xc0] sm:$0xff] %v1913
          %1968 = vst [vmem:[#allocation3 + $0xc8] sm:$0xff] %v1916
          %1969 = vst [vmem:[#allocation3 + $0xd0] sm:$0xff] %v1921
          %1970 = vst [vmem:[#allocation3 + $0xd8] sm:$0xff] %v1924
          %1971 = vst [vmem:[#allocation3 + $0xe0] sm:$0xff] %v1929
          %1972 = vst [vmem:[#allocation3 + $0xe8] sm:$0xff] %v1932
          %1973 = vst [vmem:[#allocation3 + $0xf0] sm:$0xff] %v1937
          %1974 = vst [vmem:[#allocation3 + $0xf8] sm:$0xff] %v1940
        $region88: #{tpu_custom_call.1} parent=59 // pred_fallthru
          _
        %p1975 = scmp.gt.s32.totalorder %s39, 0
        %s1976 = sld [smem:[#allocation6 + %s38]]
        %p1977 = scmp.lt.s32.totalorder %s39, %s1976
        %p1978 = pnand %p1975, %p1977
        %p1979 = pneg %p1978
        %p1980 = pnand %p1435, %p1979
        %p1981 = pneg %p1980
        // Predicated region
        $region89: #{tpu_custom_call.1} parent=59 // pred_check
          _
        $region90: #{tpu_custom_call.1} parent=59 // pred_check_branch
          %1983 = sbr.rel (%p1980) target = $region92
        $region91: #{tpu_custom_call.1} parent=59 // pred_region
          %s1984 = ssub.s32 %s37, 1
          %p1985 = scmp.lt.s32.totalorder %s1984, 0
          %s1986 = ssub.s32 0, %s1984
          %s1987 = scalar_select %p1985, %s1986, %s1984
          %s1988 = sand.u32 %s1987, 1
          %s1989 = ssub.s32 0, %s1988
          %s1990 = scalar_select %p1985, %s1989, %s1988
          %p1991 = scmp.ne.s32.totalorder %s1990, 0
          %p1992 = scmp.lt.s32.totalorder %s1990, 0
          %p1993 = pnand %p1992, %p1991
          %p1994 = pneg %p1993
          %s1995 = sadd.s32 %s1990, 2
          %s1996 = scalar_select %p1994, %s1995, %s1990
          %s1997 = smul.u32 %s1996, 256
          %s1998 = sadd.s32 %s38, %s39
          %s1999 = sld [smem:[#allocation5 + %s1998]]
          %s2000 = smul.u32 %s1999, 256
          %s2001 = sadd.s32 %s1997, %s2000
          %s2002 = sshra.s32 %s2001, 3
          %s2003 = sand.u32 %s2001, 7
          %s2004 = smul.addr %s2002, 4
          %s2005 = scalar_lea.vmem [#allocation2], %s2004
          %v2006 = vld [vmem:[%s2005] sm:$0xf]
          %v2007 = vld [vmem:[%s2005 + $0x4] sm:$0xf]
          %v2008 = vld [vmem:[%s2005 + $0x8] sm:$0xf]
          %v2009 = vld [vmem:[%s2005 + $0xc] sm:$0xf]
          %v2010 = vld [vmem:[%s2005 + $0x10] sm:$0xf]
          %v2011 = vld [vmem:[%s2005 + $0x14] sm:$0xf]
          %v2012 = vld [vmem:[%s2005 + $0x18] sm:$0xf]
          %v2013 = vld [vmem:[%s2005 + $0x1c] sm:$0xf]
          %v2014 = vld [vmem:[%s2005 + $0x20] sm:$0xf]
          %v2015 = vld [vmem:[%s2005 + $0x24] sm:$0xf]
          %v2016 = vld [vmem:[%s2005 + $0x28] sm:$0xf]
          %v2017 = vld [vmem:[%s2005 + $0x2c] sm:$0xf]
          %v2018 = vld [vmem:[%s2005 + $0x30] sm:$0xf]
          %v2019 = vld [vmem:[%s2005 + $0x34] sm:$0xf]
          %v2020 = vld [vmem:[%s2005 + $0x38] sm:$0xf]
          %v2021 = vld [vmem:[%s2005 + $0x3c] sm:$0xf]
          %v2022 = vld [vmem:[%s2005 + $0x40] sm:$0xf]
          %v2023 = vld [vmem:[%s2005 + $0x44] sm:$0xf]
          %v2024 = vld [vmem:[%s2005 + $0x48] sm:$0xf]
          %v2025 = vld [vmem:[%s2005 + $0x4c] sm:$0xf]
          %v2026 = vld [vmem:[%s2005 + $0x50] sm:$0xf]
          %v2027 = vld [vmem:[%s2005 + $0x54] sm:$0xf]
          %v2028 = vld [vmem:[%s2005 + $0x58] sm:$0xf]
          %v2029 = vld [vmem:[%s2005 + $0x5c] sm:$0xf]
          %v2030 = vld [vmem:[%s2005 + $0x60] sm:$0xf]
          %v2031 = vld [vmem:[%s2005 + $0x64] sm:$0xf]
          %v2032 = vld [vmem:[%s2005 + $0x68] sm:$0xf]
          %v2033 = vld [vmem:[%s2005 + $0x6c] sm:$0xf]
          %v2034 = vld [vmem:[%s2005 + $0x70] sm:$0xf]
          %v2035 = vld [vmem:[%s2005 + $0x74] sm:$0xf]
          %v2036 = vld [vmem:[%s2005 + $0x78] sm:$0xf]
          %v2037 = vld [vmem:[%s2005 + $0x7c] sm:$0xf]
          %v2038 = vld [vmem:[%s645] sm:$0xff]
          %v2039 = vld [vmem:[%s645 + $0x8] sm:$0xff]
          %v2040 = vld [vmem:[%s645 + $0x10] sm:$0xff]
          %v2041 = vld [vmem:[%s645 + $0x18] sm:$0xff]
          %v2042 = vld [vmem:[%s645 + $0x20] sm:$0xff]
          %v2043 = vld [vmem:[%s645 + $0x28] sm:$0xff]
          %v2044 = vld [vmem:[%s645 + $0x30] sm:$0xff]
          %v2045 = vld [vmem:[%s645 + $0x38] sm:$0xff]
          %v2046 = vld [vmem:[%s645 + $0x40] sm:$0xff]
          %v2047 = vld [vmem:[%s645 + $0x48] sm:$0xff]
          %v2048 = vld [vmem:[%s645 + $0x50] sm:$0xff]
          %v2049 = vld [vmem:[%s645 + $0x58] sm:$0xff]
          %v2050 = vld [vmem:[%s645 + $0x60] sm:$0xff]
          %v2051 = vld [vmem:[%s645 + $0x68] sm:$0xff]
          %v2052 = vld [vmem:[%s645 + $0x70] sm:$0xff]
          %v2053 = vld [vmem:[%s645 + $0x78] sm:$0xff]
          %v2054 = vld [vmem:[%s645 + $0x80] sm:$0xff]
          %v2055 = vld [vmem:[%s645 + $0x88] sm:$0xff]
          %v2056 = vld [vmem:[%s645 + $0x90] sm:$0xff]
          %v2057 = vld [vmem:[%s645 + $0x98] sm:$0xff]
          %v2058 = vld [vmem:[%s645 + $0xa0] sm:$0xff]
          %v2059 = vld [vmem:[%s645 + $0xa8] sm:$0xff]
          %v2060 = vld [vmem:[%s645 + $0xb0] sm:$0xff]
          %v2061 = vld [vmem:[%s645 + $0xb8] sm:$0xff]
          %v2062 = vld [vmem:[%s645 + $0xc0] sm:$0xff]
          %v2063 = vld [vmem:[%s645 + $0xc8] sm:$0xff]
          %v2064 = vld [vmem:[%s645 + $0xd0] sm:$0xff]
          %v2065 = vld [vmem:[%s645 + $0xd8] sm:$0xff]
          %v2066 = vld [vmem:[%s645 + $0xe0] sm:$0xff]
          %v2067 = vld [vmem:[%s645 + $0xe8] sm:$0xff]
          %v2068 = vld [vmem:[%s645 + $0xf0] sm:$0xff]
          %v2069 = vld [vmem:[%s645 + $0xf8] sm:$0xff]
          %v2102 = vunpack.c.l.b16 %v2038
          %v2103 = vunpack.c.h.b16 %v2038
          %v2104 = vunpack.c.l.b16 %v2039
          %v2105 = vunpack.c.h.b16 %v2039
          %v2106 = vunpack.c.l.b16 %v2040
          %v2107 = vunpack.c.h.b16 %v2040
          %v2108 = vunpack.c.l.b16 %v2041
          %v2109 = vunpack.c.h.b16 %v2041
          %v2110 = vunpack.c.l.b16 %v2042
          %v2111 = vunpack.c.h.b16 %v2042
          %v2112 = vunpack.c.l.b16 %v2043
          %v2113 = vunpack.c.h.b16 %v2043
          %v2114 = vunpack.c.l.b16 %v2044
          %v2115 = vunpack.c.h.b16 %v2044
          %v2116 = vunpack.c.l.b16 %v2045
          %v2117 = vunpack.c.h.b16 %v2045
          %v2118 = vunpack.c.l.b16 %v2046
          %v2119 = vunpack.c.h.b16 %v2046
          %v2120 = vunpack.c.l.b16 %v2047
          %v2121 = vunpack.c.h.b16 %v2047
          %v2122 = vunpack.c.l.b16 %v2048
          %v2123 = vunpack.c.h.b16 %v2048
          %v2124 = vunpack.c.l.b16 %v2049
          %v2125 = vunpack.c.h.b16 %v2049
          %v2126 = vunpack.c.l.b16 %v2050
          %v2127 = vunpack.c.h.b16 %v2050
          %v2128 = vunpack.c.l.b16 %v2051
          %v2129 = vunpack.c.h.b16 %v2051
          %v2130 = vunpack.c.l.b16 %v2052
          %v2131 = vunpack.c.h.b16 %v2052
          %v2132 = vunpack.c.l.b16 %v2053
          %v2133 = vunpack.c.h.b16 %v2053
          %v2134 = vunpack.c.l.b16 %v2054
          %v2135 = vunpack.c.h.b16 %v2054
          %v2136 = vunpack.c.l.b16 %v2055
          %v2137 = vunpack.c.h.b16 %v2055
          %v2138 = vunpack.c.l.b16 %v2056
          %v2139 = vunpack.c.h.b16 %v2056
          %v2140 = vunpack.c.l.b16 %v2057
          %v2141 = vunpack.c.h.b16 %v2057
          %v2142 = vunpack.c.l.b16 %v2058
          %v2143 = vunpack.c.h.b16 %v2058
          %v2144 = vunpack.c.l.b16 %v2059
          %v2145 = vunpack.c.h.b16 %v2059
          %v2146 = vunpack.c.l.b16 %v2060
          %v2147 = vunpack.c.h.b16 %v2060
          %v2148 = vunpack.c.l.b16 %v2061
          %v2149 = vunpack.c.h.b16 %v2061
          %v2150 = vunpack.c.l.b16 %v2062
          %v2151 = vunpack.c.h.b16 %v2062
          %v2152 = vunpack.c.l.b16 %v2063
          %v2153 = vunpack.c.h.b16 %v2063
          %v2154 = vunpack.c.l.b16 %v2064
          %v2155 = vunpack.c.h.b16 %v2064
          %v2156 = vunpack.c.l.b16 %v2065
          %v2157 = vunpack.c.h.b16 %v2065
          %v2158 = vunpack.c.l.b16 %v2066
          %v2159 = vunpack.c.h.b16 %v2066
          %v2160 = vunpack.c.l.b16 %v2067
          %v2161 = vunpack.c.h.b16 %v2067
          %v2162 = vunpack.c.l.b16 %v2068
          %v2163 = vunpack.c.h.b16 %v2068
          %v2164 = vunpack.c.l.b16 %v2069
          %v2165 = vunpack.c.h.b16 %v2069
          %v2166 = vpack.c.b16 %v2104, %v2102
          %v2167 = vpack.c.b16 %v2105, %v2103
          %v2168 = vpack.c.b16 %v2108, %v2106
          %v2169 = vpack.c.b16 %v2109, %v2107
          %v2170 = vpack.c.b16 %v2112, %v2110
          %v2171 = vpack.c.b16 %v2113, %v2111
          %v2172 = vpack.c.b16 %v2116, %v2114
          %v2173 = vpack.c.b16 %v2117, %v2115
          %v2174 = vpack.c.b16 %v2120, %v2118
          %v2175 = vpack.c.b16 %v2121, %v2119
          %v2176 = vpack.c.b16 %v2124, %v2122
          %v2177 = vpack.c.b16 %v2125, %v2123
          %v2178 = vpack.c.b16 %v2128, %v2126
          %v2179 = vpack.c.b16 %v2129, %v2127
          %v2180 = vpack.c.b16 %v2132, %v2130
          %v2181 = vpack.c.b16 %v2133, %v2131
          %v2182 = vpack.c.b16 %v2136, %v2134
          %v2183 = vpack.c.b16 %v2137, %v2135
          %v2184 = vpack.c.b16 %v2140, %v2138
          %v2185 = vpack.c.b16 %v2141, %v2139
          %v2186 = vpack.c.b16 %v2144, %v2142
          %v2187 = vpack.c.b16 %v2145, %v2143
          %v2188 = vpack.c.b16 %v2148, %v2146
          %v2189 = vpack.c.b16 %v2149, %v2147
          %v2190 = vpack.c.b16 %v2152, %v2150
          %v2191 = vpack.c.b16 %v2153, %v2151
          %v2192 = vpack.c.b16 %v2156, %v2154
          %v2193 = vpack.c.b16 %v2157, %v2155
          %v2194 = vpack.c.b16 %v2160, %v2158
          %v2195 = vpack.c.b16 %v2161, %v2159
          %v2196 = vpack.c.b16 %v2164, %v2162
          %v2197 = vpack.c.b16 %v2165, %v2163
          %v2262 = vunpack.c.l.b16 %v2006
          %v2263 = vunpack.c.l.b16 %v2007
          %v2264 = vunpack.c.l.b16 %v2008
          %v2265 = vunpack.c.l.b16 %v2009
          %v2266 = vunpack.c.l.b16 %v2010
          %v2267 = vunpack.c.l.b16 %v2011
          %v2268 = vunpack.c.l.b16 %v2012
          %v2269 = vunpack.c.l.b16 %v2013
          %v2270 = vunpack.c.l.b16 %v2014
          %v2271 = vunpack.c.l.b16 %v2015
          %v2272 = vunpack.c.l.b16 %v2016
          %v2273 = vunpack.c.l.b16 %v2017
          %v2274 = vunpack.c.l.b16 %v2018
          %v2275 = vunpack.c.l.b16 %v2019
          %v2276 = vunpack.c.l.b16 %v2020
          %v2277 = vunpack.c.l.b16 %v2021
          %v2278 = vunpack.c.l.b16 %v2022
          %v2279 = vunpack.c.l.b16 %v2023
          %v2280 = vunpack.c.l.b16 %v2024
          %v2281 = vunpack.c.l.b16 %v2025
          %v2282 = vunpack.c.l.b16 %v2026
          %v2283 = vunpack.c.l.b16 %v2027
          %v2284 = vunpack.c.l.b16 %v2028
          %v2285 = vunpack.c.l.b16 %v2029
          %v2286 = vunpack.c.l.b16 %v2030
          %v2287 = vunpack.c.l.b16 %v2031
          %v2288 = vunpack.c.l.b16 %v2032
          %v2289 = vunpack.c.l.b16 %v2033
          %v2290 = vunpack.c.l.b16 %v2034
          %v2291 = vunpack.c.l.b16 %v2035
          %v2292 = vunpack.c.l.b16 %v2036
          %v2293 = vunpack.c.l.b16 %v2037
          %v2294 = vpack.c.b16 %v2263, %v2262
          %v2295 = vpack.c.b16 %v2265, %v2264
          %v2296 = vpack.c.b16 %v2267, %v2266
          %v2297 = vpack.c.b16 %v2269, %v2268
          %v2298 = vpack.c.b16 %v2271, %v2270
          %v2299 = vpack.c.b16 %v2273, %v2272
          %v2300 = vpack.c.b16 %v2275, %v2274
          %v2301 = vpack.c.b16 %v2277, %v2276
          %v2302 = vpack.c.b16 %v2279, %v2278
          %v2303 = vpack.c.b16 %v2281, %v2280
          %v2304 = vpack.c.b16 %v2283, %v2282
          %v2305 = vpack.c.b16 %v2285, %v2284
          %v2306 = vpack.c.b16 %v2287, %v2286
          %v2307 = vpack.c.b16 %v2289, %v2288
          %v2308 = vpack.c.b16 %v2291, %v2290
          %v2309 = vpack.c.b16 %v2293, %v2292
          %2326 = vmatprep.subr.bf16.mxu0 0
          %2327 = vmatpush1.bf16.msra.mxu0 %v2301
          %2328 = vmatprep.subr.bf16.mxu0 0
          %2329 = vmatpush1.bf16.msra.mxu0 %v2300
          %2330 = vmatprep.subr.bf16.mxu0 0
          %2331 = vmatpush1.bf16.msra.mxu0 %v2299
          %2332 = vmatprep.subr.bf16.mxu0 0
          %2333 = vmatpush1.bf16.msra.mxu0 %v2298
          %2334 = vmatprep.subr.bf16.mxu0 0
          %2335 = vmatpush1.bf16.msra.mxu0 %v2297
          %2336 = vmatprep.subr.bf16.mxu0 0
          %2337 = vmatpush1.bf16.msra.mxu0 %v2296
          %2338 = vmatprep.subr.bf16.mxu0 0
          %2339 = vmatpush1.bf16.msra.mxu0 %v2295
          %2340 = vmatprep.subr.bf16.mxu0 0
          %2341 = vmatpush1.bf16.msra.mxu0 %v2294
          %2342 = vmatprep.subr.bf16.mxu0 0
          %2343 = vmatpush2.bf16.msra.mxu0 %v2309
          %2344 = vmatprep.subr.bf16.mxu0 0
          %2345 = vmatpush2.bf16.msra.mxu0 %v2308
          %2346 = vmatprep.subr.bf16.mxu0 0
          %2347 = vmatpush2.bf16.msra.mxu0 %v2307
          %2348 = vmatprep.subr.bf16.mxu0 0
          %2349 = vmatpush2.bf16.msra.mxu0 %v2306
          %2350 = vmatprep.subr.bf16.mxu0 0
          %2351 = vmatpush2.bf16.msra.mxu0 %v2305
          %2352 = vmatprep.subr.bf16.mxu0 0
          %2353 = vmatpush2.bf16.msra.mxu0 %v2304
          %2354 = vmatprep.subr.bf16.mxu0 0
          %2355 = vmatpush2.bf16.msra.mxu0 %v2303
          %2356 = vmatprep.subr.bf16.mxu0 0
          %2357 = vmatpush2.bf16.msra.mxu0 %v2302
          %2358 = vmatprep.mubr.bf16.mxu0 %v2167
          %2359 = vmatmul.mubr.bf16.gmra.mxu0 %v2166
          %v2360 = vpop.f32.mrf.mxu0
          %v2361 = vadd.f32 0.0, %v2360
          %v2362 = vpop.f32.mrf.mxu0
          %v2363 = vpop.f32.mrf.mxu0
          %v2364 = vadd.f32 0.0, %v2363
          %v2365 = vpop.f32.mrf.mxu0
          %2366 = vmatprep.mubr.bf16.mxu0 %v2169
          %2367 = vmatmul.mubr.bf16.gmra.mxu0 %v2168
          %v2368 = vpop.f32.mrf.mxu0
          %v2369 = vadd.f32 0.0, %v2368
          %v2370 = vpop.f32.mrf.mxu0
          %v2371 = vpop.f32.mrf.mxu0
          %v2372 = vadd.f32 0.0, %v2371
          %v2373 = vpop.f32.mrf.mxu0
          %2374 = vmatprep.mubr.bf16.mxu0 %v2171
          %2375 = vmatmul.mubr.bf16.gmra.mxu0 %v2170
          %v2376 = vpop.f32.mrf.mxu0
          %v2377 = vadd.f32 0.0, %v2376
          %v2378 = vpop.f32.mrf.mxu0
          %v2379 = vpop.f32.mrf.mxu0
          %v2380 = vadd.f32 0.0, %v2379
          %v2381 = vpop.f32.mrf.mxu0
          %2382 = vmatprep.mubr.bf16.mxu0 %v2173
          %2383 = vmatmul.mubr.bf16.gmra.mxu0 %v2172
          %v2384 = vpop.f32.mrf.mxu0
          %v2385 = vadd.f32 0.0, %v2384
          %v2386 = vpop.f32.mrf.mxu0
          %v2387 = vpop.f32.mrf.mxu0
          %v2388 = vadd.f32 0.0, %v2387
          %v2389 = vpop.f32.mrf.mxu0
          %2390 = vmatprep.mubr.bf16.mxu0 %v2175
          %2391 = vmatmul.mubr.bf16.gmra.mxu0 %v2174
          %v2392 = vpop.f32.mrf.mxu0
          %v2393 = vadd.f32 0.0, %v2392
          %v2394 = vpop.f32.mrf.mxu0
          %v2395 = vpop.f32.mrf.mxu0
          %v2396 = vadd.f32 0.0, %v2395
          %v2397 = vpop.f32.mrf.mxu0
          %2398 = vmatprep.mubr.bf16.mxu0 %v2177
          %2399 = vmatmul.mubr.bf16.gmra.mxu0 %v2176
          %v2400 = vpop.f32.mrf.mxu0
          %v2401 = vadd.f32 0.0, %v2400
          %v2402 = vpop.f32.mrf.mxu0
          %v2403 = vpop.f32.mrf.mxu0
          %v2404 = vadd.f32 0.0, %v2403
          %v2405 = vpop.f32.mrf.mxu0
          %2406 = vmatprep.mubr.bf16.mxu0 %v2179
          %2407 = vmatmul.mubr.bf16.gmra.mxu0 %v2178
          %v2408 = vpop.f32.mrf.mxu0
          %v2409 = vadd.f32 0.0, %v2408
          %v2410 = vpop.f32.mrf.mxu0
          %v2411 = vpop.f32.mrf.mxu0
          %v2412 = vadd.f32 0.0, %v2411
          %v2413 = vpop.f32.mrf.mxu0
          %2414 = vmatprep.mubr.bf16.mxu0 %v2181
          %2415 = vmatmul.mubr.bf16.gmra.mxu0 %v2180
          %v2416 = vpop.f32.mrf.mxu0
          %v2417 = vadd.f32 0.0, %v2416
          %v2418 = vpop.f32.mrf.mxu0
          %v2419 = vpop.f32.mrf.mxu0
          %v2420 = vadd.f32 0.0, %v2419
          %v2421 = vpop.f32.mrf.mxu0
          %2422 = vmatprep.mubr.bf16.mxu0 %v2183
          %2423 = vmatmul.mubr.bf16.gmra.mxu0 %v2182
          %v2424 = vpop.f32.mrf.mxu0
          %v2425 = vadd.f32 0.0, %v2424
          %v2426 = vpop.f32.mrf.mxu0
          %v2427 = vpop.f32.mrf.mxu0
          %v2428 = vadd.f32 0.0, %v2427
          %v2429 = vpop.f32.mrf.mxu0
          %2430 = vmatprep.mubr.bf16.mxu0 %v2185
          %2431 = vmatmul.mubr.bf16.gmra.mxu0 %v2184
          %v2432 = vpop.f32.mrf.mxu0
          %v2433 = vadd.f32 0.0, %v2432
          %v2434 = vpop.f32.mrf.mxu0
          %v2435 = vpop.f32.mrf.mxu0
          %v2436 = vadd.f32 0.0, %v2435
          %v2437 = vpop.f32.mrf.mxu0
          %2438 = vmatprep.mubr.bf16.mxu0 %v2187
          %2439 = vmatmul.mubr.bf16.gmra.mxu0 %v2186
          %v2440 = vpop.f32.mrf.mxu0
          %v2441 = vadd.f32 0.0, %v2440
          %v2442 = vpop.f32.mrf.mxu0
          %v2443 = vpop.f32.mrf.mxu0
          %v2444 = vadd.f32 0.0, %v2443
          %v2445 = vpop.f32.mrf.mxu0
          %2446 = vmatprep.mubr.bf16.mxu0 %v2189
          %2447 = vmatmul.mubr.bf16.gmra.mxu0 %v2188
          %v2448 = vpop.f32.mrf.mxu0
          %v2449 = vadd.f32 0.0, %v2448
          %v2450 = vpop.f32.mrf.mxu0
          %v2451 = vpop.f32.mrf.mxu0
          %v2452 = vadd.f32 0.0, %v2451
          %v2453 = vpop.f32.mrf.mxu0
          %2454 = vmatprep.mubr.bf16.mxu0 %v2191
          %2455 = vmatmul.mubr.bf16.gmra.mxu0 %v2190
          %v2456 = vpop.f32.mrf.mxu0
          %v2457 = vadd.f32 0.0, %v2456
          %v2458 = vpop.f32.mrf.mxu0
          %v2459 = vpop.f32.mrf.mxu0
          %v2460 = vadd.f32 0.0, %v2459
          %v2461 = vpop.f32.mrf.mxu0
          %2462 = vmatprep.mubr.bf16.mxu0 %v2193
          %2463 = vmatmul.mubr.bf16.gmra.mxu0 %v2192
          %v2464 = vpop.f32.mrf.mxu0
          %v2465 = vadd.f32 0.0, %v2464
          %v2466 = vpop.f32.mrf.mxu0
          %v2467 = vpop.f32.mrf.mxu0
          %v2468 = vadd.f32 0.0, %v2467
          %v2469 = vpop.f32.mrf.mxu0
          %2470 = vmatprep.mubr.bf16.mxu0 %v2195
          %2471 = vmatmul.mubr.bf16.gmra.mxu0 %v2194
          %v2472 = vpop.f32.mrf.mxu0
          %v2473 = vadd.f32 0.0, %v2472
          %v2474 = vpop.f32.mrf.mxu0
          %v2475 = vpop.f32.mrf.mxu0
          %v2476 = vadd.f32 0.0, %v2475
          %v2477 = vpop.f32.mrf.mxu0
          %2478 = vmatprep.mubr.bf16.mxu0 %v2197
          %2479 = vmatmul.mubr.bf16.gmra.mxu0 %v2196
          %v2480 = vpop.f32.mrf.mxu0
          %v2481 = vadd.f32 0.0, %v2480
          %v2482 = vpop.f32.mrf.mxu0
          %v2483 = vpop.f32.mrf.mxu0
          %v2484 = vadd.f32 0.0, %v2483
          %v2485 = vpop.f32.mrf.mxu0
          %2486 = vdwg.mxu0
          %v2487 = vld [vmem:[#allocation3] sm:$0xff]
          %v2488 = vld [vmem:[#allocation3 + $0x8] sm:$0xff]
          %v2489 = vld [vmem:[#allocation3 + $0x10] sm:$0xff]
          %v2490 = vld [vmem:[#allocation3 + $0x18] sm:$0xff]
          %v2491 = vld [vmem:[#allocation3 + $0x20] sm:$0xff]
          %v2492 = vld [vmem:[#allocation3 + $0x28] sm:$0xff]
          %v2493 = vld [vmem:[#allocation3 + $0x30] sm:$0xff]
          %v2494 = vld [vmem:[#allocation3 + $0x38] sm:$0xff]
          %v2495 = vld [vmem:[#allocation3 + $0x40] sm:$0xff]
          %v2496 = vld [vmem:[#allocation3 + $0x48] sm:$0xff]
          %v2497 = vld [vmem:[#allocation3 + $0x50] sm:$0xff]
          %v2498 = vld [vmem:[#allocation3 + $0x58] sm:$0xff]
          %v2499 = vld [vmem:[#allocation3 + $0x60] sm:$0xff]
          %v2500 = vld [vmem:[#allocation3 + $0x68] sm:$0xff]
          %v2501 = vld [vmem:[#allocation3 + $0x70] sm:$0xff]
          %v2502 = vld [vmem:[#allocation3 + $0x78] sm:$0xff]
          %v2503 = vld [vmem:[#allocation3 + $0x80] sm:$0xff]
          %v2504 = vld [vmem:[#allocation3 + $0x88] sm:$0xff]
          %v2505 = vld [vmem:[#allocation3 + $0x90] sm:$0xff]
          %v2506 = vld [vmem:[#allocation3 + $0x98] sm:$0xff]
          %v2507 = vld [vmem:[#allocation3 + $0xa0] sm:$0xff]
          %v2508 = vld [vmem:[#allocation3 + $0xa8] sm:$0xff]
          %v2509 = vld [vmem:[#allocation3 + $0xb0] sm:$0xff]
          %v2510 = vld [vmem:[#allocation3 + $0xb8] sm:$0xff]
          %v2511 = vld [vmem:[#allocation3 + $0xc0] sm:$0xff]
          %v2512 = vld [vmem:[#allocation3 + $0xc8] sm:$0xff]
          %v2513 = vld [vmem:[#allocation3 + $0xd0] sm:$0xff]
          %v2514 = vld [vmem:[#allocation3 + $0xd8] sm:$0xff]
          %v2515 = vld [vmem:[#allocation3 + $0xe0] sm:$0xff]
          %v2516 = vld [vmem:[#allocation3 + $0xe8] sm:$0xff]
          %v2517 = vld [vmem:[#allocation3 + $0xf0] sm:$0xff]
          %v2518 = vld [vmem:[#allocation3 + $0xf8] sm:$0xff]
          %v2519 = vadd.f32 %v2487, %v2361
          %v2520 = vadd.f32 %v2488, %v2364
          %v2521 = vadd.f32 %v2489, %v2369
          %v2522 = vadd.f32 %v2490, %v2372
          %v2523 = vadd.f32 %v2491, %v2377
          %v2524 = vadd.f32 %v2492, %v2380
          %v2525 = vadd.f32 %v2493, %v2385
          %v2526 = vadd.f32 %v2494, %v2388
          %v2527 = vadd.f32 %v2495, %v2393
          %v2528 = vadd.f32 %v2496, %v2396
          %v2529 = vadd.f32 %v2497, %v2401
          %v2530 = vadd.f32 %v2498, %v2404
          %v2531 = vadd.f32 %v2499, %v2409
          %v2532 = vadd.f32 %v2500, %v2412
          %v2533 = vadd.f32 %v2501, %v2417
          %v2534 = vadd.f32 %v2502, %v2420
          %v2535 = vadd.f32 %v2503, %v2425
          %v2536 = vadd.f32 %v2504, %v2428
          %v2537 = vadd.f32 %v2505, %v2433
          %v2538 = vadd.f32 %v2506, %v2436
          %v2539 = vadd.f32 %v2507, %v2441
          %v2540 = vadd.f32 %v2508, %v2444
          %v2541 = vadd.f32 %v2509, %v2449
          %v2542 = vadd.f32 %v2510, %v2452
          %v2543 = vadd.f32 %v2511, %v2457
          %v2544 = vadd.f32 %v2512, %v2460
          %v2545 = vadd.f32 %v2513, %v2465
          %v2546 = vadd.f32 %v2514, %v2468
          %v2547 = vadd.f32 %v2515, %v2473
          %v2548 = vadd.f32 %v2516, %v2476
          %v2549 = vadd.f32 %v2517, %v2481
          %v2550 = vadd.f32 %v2518, %v2484
          %2551 = vst [vmem:[#allocation3] sm:$0xff] %v2519
          %2552 = vst [vmem:[#allocation3 + $0x8] sm:$0xff] %v2520
          %2553 = vst [vmem:[#allocation3 + $0x10] sm:$0xff] %v2521
          %2554 = vst [vmem:[#allocation3 + $0x18] sm:$0xff] %v2522
          %2555 = vst [vmem:[#allocation3 + $0x20] sm:$0xff] %v2523
          %2556 = vst [vmem:[#allocation3 + $0x28] sm:$0xff] %v2524
          %2557 = vst [vmem:[#allocation3 + $0x30] sm:$0xff] %v2525
          %2558 = vst [vmem:[#allocation3 + $0x38] sm:$0xff] %v2526
          %2559 = vst [vmem:[#allocation3 + $0x40] sm:$0xff] %v2527
          %2560 = vst [vmem:[#allocation3 + $0x48] sm:$0xff] %v2528
          %2561 = vst [vmem:[#allocation3 + $0x50] sm:$0xff] %v2529
          %2562 = vst [vmem:[#allocation3 + $0x58] sm:$0xff] %v2530
          %2563 = vst [vmem:[#allocation3 + $0x60] sm:$0xff] %v2531
          %2564 = vst [vmem:[#allocation3 + $0x68] sm:$0xff] %v2532
          %2565 = vst [vmem:[#allocation3 + $0x70] sm:$0xff] %v2533
          %2566 = vst [vmem:[#allocation3 + $0x78] sm:$0xff] %v2534
          %2567 = vst [vmem:[#allocation3 + $0x80] sm:$0xff] %v2535
          %2568 = vst [vmem:[#allocation3 + $0x88] sm:$0xff] %v2536
          %2569 = vst [vmem:[#allocation3 + $0x90] sm:$0xff] %v2537
          %2570 = vst [vmem:[#allocation3 + $0x98] sm:$0xff] %v2538
          %2571 = vst [vmem:[#allocation3 + $0xa0] sm:$0xff] %v2539
          %2572 = vst [vmem:[#allocation3 + $0xa8] sm:$0xff] %v2540
          %2573 = vst [vmem:[#allocation3 + $0xb0] sm:$0xff] %v2541
          %2574 = vst [vmem:[#allocation3 + $0xb8] sm:$0xff] %v2542
          %2575 = vst [vmem:[#allocation3 + $0xc0] sm:$0xff] %v2543
          %2576 = vst [vmem:[#allocation3 + $0xc8] sm:$0xff] %v2544
          %2577 = vst [vmem:[#allocation3 + $0xd0] sm:$0xff] %v2545
          %2578 = vst [vmem:[#allocation3 + $0xd8] sm:$0xff] %v2546
          %2579 = vst [vmem:[#allocation3 + $0xe0] sm:$0xff] %v2547
          %2580 = vst [vmem:[#allocation3 + $0xe8] sm:$0xff] %v2548
          %2581 = vst [vmem:[#allocation3 + $0xf0] sm:$0xff] %v2549
          %2582 = vst [vmem:[#allocation3 + $0xf8] sm:$0xff] %v2550
        $region92: #{tpu_custom_call.1} parent=59 // pred_fallthru
          _
        // Predicated region
        $region93: #{tpu_custom_call.1} parent=59 // pred_check
          _
        $region94: #{tpu_custom_call.1} parent=59 // pred_check_branch
          %2584 = sbr.rel (%p1436) target = $region96
        $region95: #{tpu_custom_call.1} parent=59 // pred_region
          %s2585 = ssub.s32 %s37, 1
          %p2586 = scmp.lt.s32.totalorder %s2585, 0
          %s2587 = ssub.s32 0, %s2585
          %s2588 = scalar_select %p2586, %s2587, %s2585
          %s2589 = sand.u32 %s2588, 1
          %s2590 = ssub.s32 0, %s2589
          %s2591 = scalar_select %p2586, %s2590, %s2589
          %p2592 = scmp.ne.s32.totalorder %s2591, 0
          %p2593 = scmp.lt.s32.totalorder %s2591, 0
          %p2594 = pnand %p2593, %p2592
          %p2595 = pneg %p2594
          %s2596 = sadd.s32 %s2591, 2
          %s2597 = scalar_select %p2595, %s2596, %s2591
          %s2598 = smul.u32 %s2597, 256
          %p2599 = scmp.lt.s32.totalorder %s37, 0
          %s2600 = ssub.s32 0, %s37
          %s2601 = scalar_select %p2599, %s2600, %s37
          %s2602 = sand.u32 %s2601, 1
          %s2603 = ssub.s32 0, %s2602
          %s2604 = scalar_select %p2599, %s2603, %s2602
          %p2605 = scmp.ne.s32.totalorder %s2604, 0
          %p2606 = scmp.lt.s32.totalorder %s2604, 0
          %p2607 = pnand %p2606, %p2605
          %p2608 = pneg %p2607
          %s2609 = sadd.s32 %s2604, 2
          %s2610 = scalar_select %p2608, %s2609, %s2604
          %s2611 = smul.u32 %s2610, 256
          %s2612 = smul.u32 %s38, 256
          %s2613 = sadd.s32 %s2598, %s2612
          %s2614 = sshra.s32 %s2613, 3
          %s2615 = sand.u32 %s2613, 7
          %s2616 = smul.addr %s2614, 4
          %s2617 = scalar_lea.vmem [#allocation2], %s2616
          %v2618 = vld [vmem:[%s2617] sm:$0xf]
          %v2619 = vld [vmem:[%s2617 + $0x4] sm:$0xf]
          %v2620 = vld [vmem:[%s2617 + $0x8] sm:$0xf]
          %v2621 = vld [vmem:[%s2617 + $0xc] sm:$0xf]
          %v2622 = vld [vmem:[%s2617 + $0x10] sm:$0xf]
          %v2623 = vld [vmem:[%s2617 + $0x14] sm:$0xf]
          %v2624 = vld [vmem:[%s2617 + $0x18] sm:$0xf]
          %v2625 = vld [vmem:[%s2617 + $0x1c] sm:$0xf]
          %v2626 = vld [vmem:[%s2617 + $0x20] sm:$0xf]
          %v2627 = vld [vmem:[%s2617 + $0x24] sm:$0xf]
          %v2628 = vld [vmem:[%s2617 + $0x28] sm:$0xf]
          %v2629 = vld [vmem:[%s2617 + $0x2c] sm:$0xf]
          %v2630 = vld [vmem:[%s2617 + $0x30] sm:$0xf]
          %v2631 = vld [vmem:[%s2617 + $0x34] sm:$0xf]
          %v2632 = vld [vmem:[%s2617 + $0x38] sm:$0xf]
          %v2633 = vld [vmem:[%s2617 + $0x3c] sm:$0xf]
          %v2634 = vld [vmem:[%s2617 + $0x40] sm:$0xf]
          %v2635 = vld [vmem:[%s2617 + $0x44] sm:$0xf]
          %v2636 = vld [vmem:[%s2617 + $0x48] sm:$0xf]
          %v2637 = vld [vmem:[%s2617 + $0x4c] sm:$0xf]
          %v2638 = vld [vmem:[%s2617 + $0x50] sm:$0xf]
          %v2639 = vld [vmem:[%s2617 + $0x54] sm:$0xf]
          %v2640 = vld [vmem:[%s2617 + $0x58] sm:$0xf]
          %v2641 = vld [vmem:[%s2617 + $0x5c] sm:$0xf]
          %v2642 = vld [vmem:[%s2617 + $0x60] sm:$0xf]
          %v2643 = vld [vmem:[%s2617 + $0x64] sm:$0xf]
          %v2644 = vld [vmem:[%s2617 + $0x68] sm:$0xf]
          %v2645 = vld [vmem:[%s2617 + $0x6c] sm:$0xf]
          %v2646 = vld [vmem:[%s2617 + $0x70] sm:$0xf]
          %v2647 = vld [vmem:[%s2617 + $0x74] sm:$0xf]
          %v2648 = vld [vmem:[%s2617 + $0x78] sm:$0xf]
          %v2649 = vld [vmem:[%s2617 + $0x7c] sm:$0xf]
          %v2650 = vld [vmem:[#allocation3] sm:$0xff]
          %v2651 = vld [vmem:[#allocation3 + $0x8] sm:$0xff]
          %v2652 = vld [vmem:[#allocation3 + $0x10] sm:$0xff]
          %v2653 = vld [vmem:[#allocation3 + $0x18] sm:$0xff]
          %v2654 = vld [vmem:[#allocation3 + $0x20] sm:$0xff]
          %v2655 = vld [vmem:[#allocation3 + $0x28] sm:$0xff]
          %v2656 = vld [vmem:[#allocation3 + $0x30] sm:$0xff]
          %v2657 = vld [vmem:[#allocation3 + $0x38] sm:$0xff]
          %v2658 = vld [vmem:[#allocation3 + $0x40] sm:$0xff]
          %v2659 = vld [vmem:[#allocation3 + $0x48] sm:$0xff]
          %v2660 = vld [vmem:[#allocation3 + $0x50] sm:$0xff]
          %v2661 = vld [vmem:[#allocation3 + $0x58] sm:$0xff]
          %v2662 = vld [vmem:[#allocation3 + $0x60] sm:$0xff]
          %v2663 = vld [vmem:[#allocation3 + $0x68] sm:$0xff]
          %v2664 = vld [vmem:[#allocation3 + $0x70] sm:$0xff]
          %v2665 = vld [vmem:[#allocation3 + $0x78] sm:$0xff]
          %v2666 = vld [vmem:[#allocation3 + $0x80] sm:$0xff]
          %v2667 = vld [vmem:[#allocation3 + $0x88] sm:$0xff]
          %v2668 = vld [vmem:[#allocation3 + $0x90] sm:$0xff]
          %v2669 = vld [vmem:[#allocation3 + $0x98] sm:$0xff]
          %v2670 = vld [vmem:[#allocation3 + $0xa0] sm:$0xff]
          %v2671 = vld [vmem:[#allocation3 + $0xa8] sm:$0xff]
          %v2672 = vld [vmem:[#allocation3 + $0xb0] sm:$0xff]
          %v2673 = vld [vmem:[#allocation3 + $0xb8] sm:$0xff]
          %v2674 = vld [vmem:[#allocation3 + $0xc0] sm:$0xff]
          %v2675 = vld [vmem:[#allocation3 + $0xc8] sm:$0xff]
          %v2676 = vld [vmem:[#allocation3 + $0xd0] sm:$0xff]
          %v2677 = vld [vmem:[#allocation3 + $0xd8] sm:$0xff]
          %v2678 = vld [vmem:[#allocation3 + $0xe0] sm:$0xff]
          %v2679 = vld [vmem:[#allocation3 + $0xe8] sm:$0xff]
          %v2680 = vld [vmem:[#allocation3 + $0xf0] sm:$0xff]
          %v2681 = vld [vmem:[#allocation3 + $0xf8] sm:$0xff]
          %v2682 = vld [vmem:[%s657] sm:$0xff]
          %v2683 = vld [vmem:[%s657 + $0x8] sm:$0xff]
          %v2684 = vld [vmem:[%s657 + $0x10] sm:$0xff]
          %v2685 = vld [vmem:[%s657 + $0x18] sm:$0xff]
          %v2686 = vld [vmem:[%s657 + $0x20] sm:$0xff]
          %v2687 = vld [vmem:[%s657 + $0x28] sm:$0xff]
          %v2688 = vld [vmem:[%s657 + $0x30] sm:$0xff]
          %v2689 = vld [vmem:[%s657 + $0x38] sm:$0xff]
          %v2690 = vld [vmem:[%s657 + $0x40] sm:$0xff]
          %v2691 = vld [vmem:[%s657 + $0x48] sm:$0xff]
          %v2692 = vld [vmem:[%s657 + $0x50] sm:$0xff]
          %v2693 = vld [vmem:[%s657 + $0x58] sm:$0xff]
          %v2694 = vld [vmem:[%s657 + $0x60] sm:$0xff]
          %v2695 = vld [vmem:[%s657 + $0x68] sm:$0xff]
          %v2696 = vld [vmem:[%s657 + $0x70] sm:$0xff]
          %v2697 = vld [vmem:[%s657 + $0x78] sm:$0xff]
          %v2698 = vld [vmem:[%s657 + $0x80] sm:$0xff]
          %v2699 = vld [vmem:[%s657 + $0x88] sm:$0xff]
          %v2700 = vld [vmem:[%s657 + $0x90] sm:$0xff]
          %v2701 = vld [vmem:[%s657 + $0x98] sm:$0xff]
          %v2702 = vld [vmem:[%s657 + $0xa0] sm:$0xff]
          %v2703 = vld [vmem:[%s657 + $0xa8] sm:$0xff]
          %v2704 = vld [vmem:[%s657 + $0xb0] sm:$0xff]
          %v2705 = vld [vmem:[%s657 + $0xb8] sm:$0xff]
          %v2706 = vld [vmem:[%s657 + $0xc0] sm:$0xff]
          %v2707 = vld [vmem:[%s657 + $0xc8] sm:$0xff]
          %v2708 = vld [vmem:[%s657 + $0xd0] sm:$0xff]
          %v2709 = vld [vmem:[%s657 + $0xd8] sm:$0xff]
          %v2710 = vld [vmem:[%s657 + $0xe0] sm:$0xff]
          %v2711 = vld [vmem:[%s657 + $0xe8] sm:$0xff]
          %v2712 = vld [vmem:[%s657 + $0xf0] sm:$0xff]
          %v2713 = vld [vmem:[%s657 + $0xf8] sm:$0xff]
          %2715 = vset.pattern.permute.xlu0 0
          %2716 = vperm.xlu0 %2715, %v2682
          %v2717 = vpop.permute.xlu0 %2716
          %2720 = vset.pattern.permute.xlu0 0
          %2721 = vperm.xlu0 %2720, %v2683
          %v2722 = vpop.permute.xlu0 %2721
          %2725 = vset.pattern.permute.xlu0 0
          %2726 = vperm.xlu0 %2725, %v2684
          %v2727 = vpop.permute.xlu0 %2726
          %2730 = vset.pattern.permute.xlu0 0
          %2731 = vperm.xlu0 %2730, %v2685
          %v2732 = vpop.permute.xlu0 %2731
          %2735 = vset.pattern.permute.xlu0 0
          %2736 = vperm.xlu0 %2735, %v2686
          %v2737 = vpop.permute.xlu0 %2736
          %2740 = vset.pattern.permute.xlu0 0
          %2741 = vperm.xlu0 %2740, %v2687
          %v2742 = vpop.permute.xlu0 %2741
          %2745 = vset.pattern.permute.xlu0 0
          %2746 = vperm.xlu0 %2745, %v2688
          %v2747 = vpop.permute.xlu0 %2746
          %2750 = vset.pattern.permute.xlu0 0
          %2751 = vperm.xlu0 %2750, %v2689
          %v2752 = vpop.permute.xlu0 %2751
          %2755 = vset.pattern.permute.xlu0 0
          %2756 = vperm.xlu0 %2755, %v2690
          %v2757 = vpop.permute.xlu0 %2756
          %2760 = vset.pattern.permute.xlu0 0
          %2761 = vperm.xlu0 %2760, %v2691
          %v2762 = vpop.permute.xlu0 %2761
          %2765 = vset.pattern.permute.xlu0 0
          %2766 = vperm.xlu0 %2765, %v2692
          %v2767 = vpop.permute.xlu0 %2766
          %2770 = vset.pattern.permute.xlu0 0
          %2771 = vperm.xlu0 %2770, %v2693
          %v2772 = vpop.permute.xlu0 %2771
          %2775 = vset.pattern.permute.xlu0 0
          %2776 = vperm.xlu0 %2775, %v2694
          %v2777 = vpop.permute.xlu0 %2776
          %2780 = vset.pattern.permute.xlu0 0
          %2781 = vperm.xlu0 %2780, %v2695
          %v2782 = vpop.permute.xlu0 %2781
          %2785 = vset.pattern.permute.xlu0 0
          %2786 = vperm.xlu0 %2785, %v2696
          %v2787 = vpop.permute.xlu0 %2786
          %2790 = vset.pattern.permute.xlu0 0
          %2791 = vperm.xlu0 %2790, %v2697
          %v2792 = vpop.permute.xlu0 %2791
          %2795 = vset.pattern.permute.xlu0 0
          %2796 = vperm.xlu0 %2795, %v2698
          %v2797 = vpop.permute.xlu0 %2796
          %2800 = vset.pattern.permute.xlu0 0
          %2801 = vperm.xlu0 %2800, %v2699
          %v2802 = vpop.permute.xlu0 %2801
          %2805 = vset.pattern.permute.xlu0 0
          %2806 = vperm.xlu0 %2805, %v2700
          %v2807 = vpop.permute.xlu0 %2806
          %2810 = vset.pattern.permute.xlu0 0
          %2811 = vperm.xlu0 %2810, %v2701
          %v2812 = vpop.permute.xlu0 %2811
          %2815 = vset.pattern.permute.xlu0 0
          %2816 = vperm.xlu0 %2815, %v2702
          %v2817 = vpop.permute.xlu0 %2816
          %2820 = vset.pattern.permute.xlu0 0
          %2821 = vperm.xlu0 %2820, %v2703
          %v2822 = vpop.permute.xlu0 %2821
          %2825 = vset.pattern.permute.xlu0 0
          %2826 = vperm.xlu0 %2825, %v2704
          %v2827 = vpop.permute.xlu0 %2826
          %2830 = vset.pattern.permute.xlu0 0
          %2831 = vperm.xlu0 %2830, %v2705
          %v2832 = vpop.permute.xlu0 %2831
          %2835 = vset.pattern.permute.xlu0 0
          %2836 = vperm.xlu0 %2835, %v2706
          %v2837 = vpop.permute.xlu0 %2836
          %2840 = vset.pattern.permute.xlu0 0
          %2841 = vperm.xlu0 %2840, %v2707
          %v2842 = vpop.permute.xlu0 %2841
          %2845 = vset.pattern.permute.xlu0 0
          %2846 = vperm.xlu0 %2845, %v2708
          %v2847 = vpop.permute.xlu0 %2846
          %2850 = vset.pattern.permute.xlu0 0
          %2851 = vperm.xlu0 %2850, %v2709
          %v2852 = vpop.permute.xlu0 %2851
          %2855 = vset.pattern.permute.xlu0 0
          %2856 = vperm.xlu0 %2855, %v2710
          %v2857 = vpop.permute.xlu0 %2856
          %2860 = vset.pattern.permute.xlu0 0
          %2861 = vperm.xlu0 %2860, %v2711
          %v2862 = vpop.permute.xlu0 %2861
          %2865 = vset.pattern.permute.xlu0 0
          %2866 = vperm.xlu0 %2865, %v2712
          %v2867 = vpop.permute.xlu0 %2866
          %2870 = vset.pattern.permute.xlu0 0
          %2871 = vperm.xlu0 %2870, %v2713
          %v2872 = vpop.permute.xlu0 %2871
          %v2874 = vmul.f32 %v2650, %v2717
          %v2875 = vmul.f32 %v2651, %v2722
          %v2876 = vmul.f32 %v2652, %v2727
          %v2877 = vmul.f32 %v2653, %v2732
          %v2878 = vmul.f32 %v2654, %v2737
          %v2879 = vmul.f32 %v2655, %v2742
          %v2880 = vmul.f32 %v2656, %v2747
          %v2881 = vmul.f32 %v2657, %v2752
          %v2882 = vmul.f32 %v2658, %v2757
          %v2883 = vmul.f32 %v2659, %v2762
          %v2884 = vmul.f32 %v2660, %v2767
          %v2885 = vmul.f32 %v2661, %v2772
          %v2886 = vmul.f32 %v2662, %v2777
          %v2887 = vmul.f32 %v2663, %v2782
          %v2888 = vmul.f32 %v2664, %v2787
          %v2889 = vmul.f32 %v2665, %v2792
          %v2890 = vmul.f32 %v2666, %v2797
          %v2891 = vmul.f32 %v2667, %v2802
          %v2892 = vmul.f32 %v2668, %v2807
          %v2893 = vmul.f32 %v2669, %v2812
          %v2894 = vmul.f32 %v2670, %v2817
          %v2895 = vmul.f32 %v2671, %v2822
          %v2896 = vmul.f32 %v2672, %v2827
          %v2897 = vmul.f32 %v2673, %v2832
          %v2898 = vmul.f32 %v2674, %v2837
          %v2899 = vmul.f32 %v2675, %v2842
          %v2900 = vmul.f32 %v2676, %v2847
          %v2901 = vmul.f32 %v2677, %v2852
          %v2902 = vmul.f32 %v2678, %v2857
          %v2903 = vmul.f32 %v2679, %v2862
          %v2904 = vmul.f32 %v2680, %v2867
          %v2905 = vmul.f32 %v2681, %v2872
          %v2906 = vpack.c.bf16 %v2875, %v2874
          %v2907 = vpack.c.bf16 %v2877, %v2876
          %v2908 = vpack.c.bf16 %v2879, %v2878
          %v2909 = vpack.c.bf16 %v2881, %v2880
          %v2910 = vpack.c.bf16 %v2883, %v2882
          %v2911 = vpack.c.bf16 %v2885, %v2884
          %v2912 = vpack.c.bf16 %v2887, %v2886
          %v2913 = vpack.c.bf16 %v2889, %v2888
          %v2914 = vpack.c.bf16 %v2891, %v2890
          %v2915 = vpack.c.bf16 %v2893, %v2892
          %v2916 = vpack.c.bf16 %v2895, %v2894
          %v2917 = vpack.c.bf16 %v2897, %v2896
          %v2918 = vpack.c.bf16 %v2899, %v2898
          %v2919 = vpack.c.bf16 %v2901, %v2900
          %v2920 = vpack.c.bf16 %v2903, %v2902
          %v2921 = vpack.c.bf16 %v2905, %v2904
          %v2922 = vld [vmem:[%s551] sm:$0xf]
          %v2923 = vld [vmem:[%s551 + $0x4] sm:$0xf]
          %v2924 = vld [vmem:[%s551 + $0x8] sm:$0xf]
          %v2925 = vld [vmem:[%s551 + $0xc] sm:$0xf]
          %v2926 = vld [vmem:[%s551 + $0x10] sm:$0xf]
          %v2927 = vld [vmem:[%s551 + $0x14] sm:$0xf]
          %v2928 = vld [vmem:[%s551 + $0x18] sm:$0xf]
          %v2929 = vld [vmem:[%s551 + $0x1c] sm:$0xf]
          %v2930 = vld [vmem:[%s551 + $0x20] sm:$0xf]
          %v2931 = vld [vmem:[%s551 + $0x24] sm:$0xf]
          %v2932 = vld [vmem:[%s551 + $0x28] sm:$0xf]
          %v2933 = vld [vmem:[%s551 + $0x2c] sm:$0xf]
          %v2934 = vld [vmem:[%s551 + $0x30] sm:$0xf]
          %v2935 = vld [vmem:[%s551 + $0x34] sm:$0xf]
          %v2936 = vld [vmem:[%s551 + $0x38] sm:$0xf]
          %v2937 = vld [vmem:[%s551 + $0x3c] sm:$0xf]
          %v2938 = vld [vmem:[%s542] sm:$0xf]
          %v2939 = vld [vmem:[%s542 + $0x4] sm:$0xf]
          %v2940 = vld [vmem:[%s542 + $0x8] sm:$0xf]
          %v2941 = vld [vmem:[%s542 + $0xc] sm:$0xf]
          %v2942 = vld [vmem:[%s542 + $0x10] sm:$0xf]
          %v2943 = vld [vmem:[%s542 + $0x14] sm:$0xf]
          %v2944 = vld [vmem:[%s542 + $0x18] sm:$0xf]
          %v2945 = vld [vmem:[%s542 + $0x1c] sm:$0xf]
          %v2946 = vld [vmem:[%s542 + $0x20] sm:$0xf]
          %v2947 = vld [vmem:[%s542 + $0x24] sm:$0xf]
          %v2948 = vld [vmem:[%s542 + $0x28] sm:$0xf]
          %v2949 = vld [vmem:[%s542 + $0x2c] sm:$0xf]
          %v2950 = vld [vmem:[%s542 + $0x30] sm:$0xf]
          %v2951 = vld [vmem:[%s542 + $0x34] sm:$0xf]
          %v2952 = vld [vmem:[%s542 + $0x38] sm:$0xf]
          %v2953 = vld [vmem:[%s542 + $0x3c] sm:$0xf]
          %v2970 = vunpack.c.l.b16 %v2938
          %v2971 = vunpack.c.l.b16 %v2939
          %v2972 = vunpack.c.l.b16 %v2940
          %v2973 = vunpack.c.l.b16 %v2941
          %v2974 = vunpack.c.l.b16 %v2942
          %v2975 = vunpack.c.l.b16 %v2943
          %v2976 = vunpack.c.l.b16 %v2944
          %v2977 = vunpack.c.l.b16 %v2945
          %v2978 = vunpack.c.l.b16 %v2946
          %v2979 = vunpack.c.l.b16 %v2947
          %v2980 = vunpack.c.l.b16 %v2948
          %v2981 = vunpack.c.l.b16 %v2949
          %v2982 = vunpack.c.l.b16 %v2950
          %v2983 = vunpack.c.l.b16 %v2951
          %v2984 = vunpack.c.l.b16 %v2952
          %v2985 = vunpack.c.l.b16 %v2953
          %v2986 = vpack.c.b16 %v2971, %v2970
          %v2987 = vpack.c.b16 %v2973, %v2972
          %v2988 = vpack.c.b16 %v2975, %v2974
          %v2989 = vpack.c.b16 %v2977, %v2976
          %v2990 = vpack.c.b16 %v2979, %v2978
          %v2991 = vpack.c.b16 %v2981, %v2980
          %v2992 = vpack.c.b16 %v2983, %v2982
          %v2993 = vpack.c.b16 %v2985, %v2984
          %3002 = vmatprep.subr.bf16.mxu0 0
          %3003 = vmatpush1.bf16.msra.mxu0 %v2993
          %3004 = vmatprep.subr.bf16.mxu0 0
          %3005 = vmatpush1.bf16.msra.mxu0 %v2992
          %3006 = vmatprep.subr.bf16.mxu0 0
          %3007 = vmatpush1.bf16.msra.mxu0 %v2991
          %3008 = vmatprep.subr.bf16.mxu0 0
          %3009 = vmatpush1.bf16.msra.mxu0 %v2990
          %3010 = vmatprep.subr.bf16.mxu0 0
          %3011 = vmatpush1.bf16.msra.mxu0 %v2989
          %3012 = vmatprep.subr.bf16.mxu0 0
          %3013 = vmatpush1.bf16.msra.mxu0 %v2988
          %3014 = vmatprep.subr.bf16.mxu0 0
          %3015 = vmatpush1.bf16.msra.mxu0 %v2987
          %3016 = vmatprep.subr.bf16.mxu0 0
          %3017 = vmatpush1.bf16.msra.mxu0 %v2986
          %3018 = vmatprep.subr.bf16.mxu0 0
          %3019 = vmatpush2.bf16.msra.mxu0 0
          %3020 = vmatprep.subr.bf16.mxu0 0
          %3021 = vmatpush2.bf16.msra.mxu0 0
          %3022 = vmatprep.subr.bf16.mxu0 0
          %3023 = vmatpush2.bf16.msra.mxu0 0
          %3024 = vmatprep.subr.bf16.mxu0 0
          %3025 = vmatpush2.bf16.msra.mxu0 0
          %3026 = vmatprep.subr.bf16.mxu0 0
          %3027 = vmatpush2.bf16.msra.mxu0 0
          %3028 = vmatprep.subr.bf16.mxu0 0
          %3029 = vmatpush2.bf16.msra.mxu0 0
          %3030 = vmatprep.subr.bf16.mxu0 0
          %3031 = vmatpush2.bf16.msra.mxu0 0
          %3032 = vmatprep.subr.bf16.mxu0 0
          %3033 = vmatpush2.bf16.msra.mxu0 0
          %3034 = vmatprep.mubr.bf16.mxu0 0
          %3035 = vmatmul.mubr.bf16.gmra.mxu0 %v2906
          %v3036 = vpop.f32.mrf.mxu0
          %v3037 = vadd.f32 0.0, %v3036
          %v3038 = vpop.f32.mrf.mxu0
          %v3039 = vpop.f32.mrf.mxu0
          %v3040 = vadd.f32 0.0, %v3039
          %v3041 = vpop.f32.mrf.mxu0
          %3042 = vmatprep.mubr.bf16.mxu0 0
          %3043 = vmatmul.mubr.bf16.gmra.mxu0 %v2907
          %v3044 = vpop.f32.mrf.mxu0
          %v3045 = vadd.f32 0.0, %v3044
          %v3046 = vpop.f32.mrf.mxu0
          %v3047 = vpop.f32.mrf.mxu0
          %v3048 = vadd.f32 0.0, %v3047
          %v3049 = vpop.f32.mrf.mxu0
          %3050 = vmatprep.mubr.bf16.mxu0 0
          %3051 = vmatmul.mubr.bf16.gmra.mxu0 %v2908
          %v3052 = vpop.f32.mrf.mxu0
          %v3053 = vadd.f32 0.0, %v3052
          %v3054 = vpop.f32.mrf.mxu0
          %v3055 = vpop.f32.mrf.mxu0
          %v3056 = vadd.f32 0.0, %v3055
          %v3057 = vpop.f32.mrf.mxu0
          %3058 = vmatprep.mubr.bf16.mxu0 0
          %3059 = vmatmul.mubr.bf16.gmra.mxu0 %v2909
          %v3060 = vpop.f32.mrf.mxu0
          %v3061 = vadd.f32 0.0, %v3060
          %v3062 = vpop.f32.mrf.mxu0
          %v3063 = vpop.f32.mrf.mxu0
          %v3064 = vadd.f32 0.0, %v3063
          %v3065 = vpop.f32.mrf.mxu0
          %3066 = vmatprep.mubr.bf16.mxu0 0
          %3067 = vmatmul.mubr.bf16.gmra.mxu0 %v2910
          %v3068 = vpop.f32.mrf.mxu0
          %v3069 = vadd.f32 0.0, %v3068
          %v3070 = vpop.f32.mrf.mxu0
          %v3071 = vpop.f32.mrf.mxu0
          %v3072 = vadd.f32 0.0, %v3071
          %v3073 = vpop.f32.mrf.mxu0
          %3074 = vmatprep.mubr.bf16.mxu0 0
          %3075 = vmatmul.mubr.bf16.gmra.mxu0 %v2911
          %v3076 = vpop.f32.mrf.mxu0
          %v3077 = vadd.f32 0.0, %v3076
          %v3078 = vpop.f32.mrf.mxu0
          %v3079 = vpop.f32.mrf.mxu0
          %v3080 = vadd.f32 0.0, %v3079
          %v3081 = vpop.f32.mrf.mxu0
          %3082 = vmatprep.mubr.bf16.mxu0 0
          %3083 = vmatmul.mubr.bf16.gmra.mxu0 %v2912
          %v3084 = vpop.f32.mrf.mxu0
          %v3085 = vadd.f32 0.0, %v3084
          %v3086 = vpop.f32.mrf.mxu0
          %v3087 = vpop.f32.mrf.mxu0
          %v3088 = vadd.f32 0.0, %v3087
          %v3089 = vpop.f32.mrf.mxu0
          %3090 = vmatprep.mubr.bf16.mxu0 0
          %3091 = vmatmul.mubr.bf16.gmra.mxu0 %v2913
          %v3092 = vpop.f32.mrf.mxu0
          %v3093 = vadd.f32 0.0, %v3092
          %v3094 = vpop.f32.mrf.mxu0
          %v3095 = vpop.f32.mrf.mxu0
          %v3096 = vadd.f32 0.0, %v3095
          %v3097 = vpop.f32.mrf.mxu0
          %3098 = vmatprep.mubr.bf16.mxu0 0
          %3099 = vmatmul.mubr.bf16.gmra.mxu0 %v2914
          %v3100 = vpop.f32.mrf.mxu0
          %v3101 = vadd.f32 0.0, %v3100
          %v3102 = vpop.f32.mrf.mxu0
          %v3103 = vpop.f32.mrf.mxu0
          %v3104 = vadd.f32 0.0, %v3103
          %v3105 = vpop.f32.mrf.mxu0
          %3106 = vmatprep.mubr.bf16.mxu0 0
          %3107 = vmatmul.mubr.bf16.gmra.mxu0 %v2915
          %v3108 = vpop.f32.mrf.mxu0
          %v3109 = vadd.f32 0.0, %v3108
          %v3110 = vpop.f32.mrf.mxu0
          %v3111 = vpop.f32.mrf.mxu0
          %v3112 = vadd.f32 0.0, %v3111
          %v3113 = vpop.f32.mrf.mxu0
          %3114 = vmatprep.mubr.bf16.mxu0 0
          %3115 = vmatmul.mubr.bf16.gmra.mxu0 %v2916
          %v3116 = vpop.f32.mrf.mxu0
          %v3117 = vadd.f32 0.0, %v3116
          %v3118 = vpop.f32.mrf.mxu0
          %v3119 = vpop.f32.mrf.mxu0
          %v3120 = vadd.f32 0.0, %v3119
          %v3121 = vpop.f32.mrf.mxu0
          %3122 = vmatprep.mubr.bf16.mxu0 0
          %3123 = vmatmul.mubr.bf16.gmra.mxu0 %v2917
          %v3124 = vpop.f32.mrf.mxu0
          %v3125 = vadd.f32 0.0, %v3124
          %v3126 = vpop.f32.mrf.mxu0
          %v3127 = vpop.f32.mrf.mxu0
          %v3128 = vadd.f32 0.0, %v3127
          %v3129 = vpop.f32.mrf.mxu0
          %3130 = vmatprep.mubr.bf16.mxu0 0
          %3131 = vmatmul.mubr.bf16.gmra.mxu0 %v2918
          %v3132 = vpop.f32.mrf.mxu0
          %v3133 = vadd.f32 0.0, %v3132
          %v3134 = vpop.f32.mrf.mxu0
          %v3135 = vpop.f32.mrf.mxu0
          %v3136 = vadd.f32 0.0, %v3135
          %v3137 = vpop.f32.mrf.mxu0
          %3138 = vmatprep.mubr.bf16.mxu0 0
          %3139 = vmatmul.mubr.bf16.gmra.mxu0 %v2919
          %v3140 = vpop.f32.mrf.mxu0
          %v3141 = vadd.f32 0.0, %v3140
          %v3142 = vpop.f32.mrf.mxu0
          %v3143 = vpop.f32.mrf.mxu0
          %v3144 = vadd.f32 0.0, %v3143
          %v3145 = vpop.f32.mrf.mxu0
          %3146 = vmatprep.mubr.bf16.mxu0 0
          %3147 = vmatmul.mubr.bf16.gmra.mxu0 %v2920
          %v3148 = vpop.f32.mrf.mxu0
          %v3149 = vadd.f32 0.0, %v3148
          %v3150 = vpop.f32.mrf.mxu0
          %v3151 = vpop.f32.mrf.mxu0
          %v3152 = vadd.f32 0.0, %v3151
          %v3153 = vpop.f32.mrf.mxu0
          %3154 = vmatprep.mubr.bf16.mxu0 0
          %3155 = vmatmul.mubr.bf16.gmra.mxu0 %v2921
          %v3156 = vpop.f32.mrf.mxu0
          %v3157 = vadd.f32 0.0, %v3156
          %v3158 = vpop.f32.mrf.mxu0
          %v3159 = vpop.f32.mrf.mxu0
          %v3160 = vadd.f32 0.0, %v3159
          %v3161 = vpop.f32.mrf.mxu0
          %3162 = vdwg.mxu0
          %v3195 = vunpack.c.l.b16 %v2618
          %v3196 = vunpack.c.l.b16 %v2619
          %v3197 = vunpack.c.l.b16 %v2620
          %v3198 = vunpack.c.l.b16 %v2621
          %v3199 = vunpack.c.l.b16 %v2622
          %v3200 = vunpack.c.l.b16 %v2623
          %v3201 = vunpack.c.l.b16 %v2624
          %v3202 = vunpack.c.l.b16 %v2625
          %v3203 = vunpack.c.l.b16 %v2626
          %v3204 = vunpack.c.l.b16 %v2627
          %v3205 = vunpack.c.l.b16 %v2628
          %v3206 = vunpack.c.l.b16 %v2629
          %v3207 = vunpack.c.l.b16 %v2630
          %v3208 = vunpack.c.l.b16 %v2631
          %v3209 = vunpack.c.l.b16 %v2632
          %v3210 = vunpack.c.l.b16 %v2633
          %v3211 = vunpack.c.l.b16 %v2634
          %v3212 = vunpack.c.l.b16 %v2635
          %v3213 = vunpack.c.l.b16 %v2636
          %v3214 = vunpack.c.l.b16 %v2637
          %v3215 = vunpack.c.l.b16 %v2638
          %v3216 = vunpack.c.l.b16 %v2639
          %v3217 = vunpack.c.l.b16 %v2640
          %v3218 = vunpack.c.l.b16 %v2641
          %v3219 = vunpack.c.l.b16 %v2642
          %v3220 = vunpack.c.l.b16 %v2643
          %v3221 = vunpack.c.l.b16 %v2644
          %v3222 = vunpack.c.l.b16 %v2645
          %v3223 = vunpack.c.l.b16 %v2646
          %v3224 = vunpack.c.l.b16 %v2647
          %v3225 = vunpack.c.l.b16 %v2648
          %v3226 = vunpack.c.l.b16 %v2649
          %v3227 = vpack.c.b16 %v3196, %v3195
          %v3228 = vpack.c.b16 %v3198, %v3197
          %v3229 = vpack.c.b16 %v3200, %v3199
          %v3230 = vpack.c.b16 %v3202, %v3201
          %v3231 = vpack.c.b16 %v3204, %v3203
          %v3232 = vpack.c.b16 %v3206, %v3205
          %v3233 = vpack.c.b16 %v3208, %v3207
          %v3234 = vpack.c.b16 %v3210, %v3209
          %v3235 = vpack.c.b16 %v3212, %v3211
          %v3236 = vpack.c.b16 %v3214, %v3213
          %v3237 = vpack.c.b16 %v3216, %v3215
          %v3238 = vpack.c.b16 %v3218, %v3217
          %v3239 = vpack.c.b16 %v3220, %v3219
          %v3240 = vpack.c.b16 %v3222, %v3221
          %v3241 = vpack.c.b16 %v3224, %v3223
          %v3242 = vpack.c.b16 %v3226, %v3225
          %v3275 = vunpack.c.l.b16 %v2922
          %v3276 = vunpack.c.l.b16 %v2923
          %v3277 = vunpack.c.l.b16 %v2924
          %v3278 = vunpack.c.l.b16 %v2925
          %v3279 = vunpack.c.l.b16 %v2926
          %v3280 = vunpack.c.l.b16 %v2927
          %v3281 = vunpack.c.l.b16 %v2928
          %v3282 = vunpack.c.l.b16 %v2929
          %v3283 = vunpack.c.l.b16 %v2930
          %v3284 = vunpack.c.l.b16 %v2931
          %v3285 = vunpack.c.l.b16 %v2932
          %v3286 = vunpack.c.l.b16 %v2933
          %v3287 = vunpack.c.l.b16 %v2934
          %v3288 = vunpack.c.l.b16 %v2935
          %v3289 = vunpack.c.l.b16 %v2936
          %v3290 = vunpack.c.l.b16 %v2937
          %v3291 = vpack.c.b16 %v3276, %v3275
          %v3292 = vpack.c.b16 %v3278, %v3277
          %v3293 = vpack.c.b16 %v3280, %v3279
          %v3294 = vpack.c.b16 %v3282, %v3281
          %v3295 = vpack.c.b16 %v3284, %v3283
          %v3296 = vpack.c.b16 %v3286, %v3285
          %v3297 = vpack.c.b16 %v3288, %v3287
          %v3298 = vpack.c.b16 %v3290, %v3289
          %3307 = vmatprep.subr.bf16.mxu0 0
          %3308 = vmatpush1.bf16.msra.mxu0 %v3298
          %3309 = vmatprep.subr.bf16.mxu0 0
          %3310 = vmatpush1.bf16.msra.mxu0 %v3297
          %3311 = vmatprep.subr.bf16.mxu0 0
          %3312 = vmatpush1.bf16.msra.mxu0 %v3296
          %3313 = vmatprep.subr.bf16.mxu0 0
          %3314 = vmatpush1.bf16.msra.mxu0 %v3295
          %3315 = vmatprep.subr.bf16.mxu0 0
          %3316 = vmatpush1.bf16.msra.mxu0 %v3294
          %3317 = vmatprep.subr.bf16.mxu0 0
          %3318 = vmatpush1.bf16.msra.mxu0 %v3293
          %3319 = vmatprep.subr.bf16.mxu0 0
          %3320 = vmatpush1.bf16.msra.mxu0 %v3292
          %3321 = vmatprep.subr.bf16.mxu0 0
          %3322 = vmatpush1.bf16.msra.mxu0 %v3291
          %3323 = vmatprep.subr.bf16.mxu0 0
          %3324 = vmatpush2.bf16.msra.mxu0 0
          %3325 = vmatprep.subr.bf16.mxu0 0
          %3326 = vmatpush2.bf16.msra.mxu0 0
          %3327 = vmatprep.subr.bf16.mxu0 0
          %3328 = vmatpush2.bf16.msra.mxu0 0
          %3329 = vmatprep.subr.bf16.mxu0 0
          %3330 = vmatpush2.bf16.msra.mxu0 0
          %3331 = vmatprep.subr.bf16.mxu0 0
          %3332 = vmatpush2.bf16.msra.mxu0 0
          %3333 = vmatprep.subr.bf16.mxu0 0
          %3334 = vmatpush2.bf16.msra.mxu0 0
          %3335 = vmatprep.subr.bf16.mxu0 0
          %3336 = vmatpush2.bf16.msra.mxu0 0
          %3337 = vmatprep.subr.bf16.mxu0 0
          %3338 = vmatpush2.bf16.msra.mxu0 0
          %3339 = vmatprep.mubr.bf16.mxu0 0
          %3340 = vmatmul.mubr.bf16.gmra.mxu0 %v3227
          %v3341 = vpop.f32.mrf.mxu0
          %v3342 = vadd.f32 %v3037, %v3341
          %v3343 = vpop.f32.mrf.mxu0
          %v3344 = vpop.f32.mrf.mxu0
          %v3345 = vadd.f32 %v3040, %v3344
          %v3346 = vpop.f32.mrf.mxu0
          %3347 = vmatprep.mubr.bf16.mxu0 0
          %3348 = vmatmul.mubr.bf16.gmra.mxu0 %v3228
          %v3349 = vpop.f32.mrf.mxu0
          %v3350 = vadd.f32 %v3045, %v3349
          %v3351 = vpop.f32.mrf.mxu0
          %v3352 = vpop.f32.mrf.mxu0
          %v3353 = vadd.f32 %v3048, %v3352
          %v3354 = vpop.f32.mrf.mxu0
          %3355 = vmatprep.mubr.bf16.mxu0 0
          %3356 = vmatmul.mubr.bf16.gmra.mxu0 %v3229
          %v3357 = vpop.f32.mrf.mxu0
          %v3358 = vadd.f32 %v3053, %v3357
          %v3359 = vpop.f32.mrf.mxu0
          %v3360 = vpop.f32.mrf.mxu0
          %v3361 = vadd.f32 %v3056, %v3360
          %v3362 = vpop.f32.mrf.mxu0
          %3363 = vmatprep.mubr.bf16.mxu0 0
          %3364 = vmatmul.mubr.bf16.gmra.mxu0 %v3230
          %v3365 = vpop.f32.mrf.mxu0
          %v3366 = vadd.f32 %v3061, %v3365
          %v3367 = vpop.f32.mrf.mxu0
          %v3368 = vpop.f32.mrf.mxu0
          %v3369 = vadd.f32 %v3064, %v3368
          %v3370 = vpop.f32.mrf.mxu0
          %3371 = vmatprep.mubr.bf16.mxu0 0
          %3372 = vmatmul.mubr.bf16.gmra.mxu0 %v3231
          %v3373 = vpop.f32.mrf.mxu0
          %v3374 = vadd.f32 %v3069, %v3373
          %v3375 = vpop.f32.mrf.mxu0
          %v3376 = vpop.f32.mrf.mxu0
          %v3377 = vadd.f32 %v3072, %v3376
          %v3378 = vpop.f32.mrf.mxu0
          %3379 = vmatprep.mubr.bf16.mxu0 0
          %3380 = vmatmul.mubr.bf16.gmra.mxu0 %v3232
          %v3381 = vpop.f32.mrf.mxu0
          %v3382 = vadd.f32 %v3077, %v3381
          %v3383 = vpop.f32.mrf.mxu0
          %v3384 = vpop.f32.mrf.mxu0
          %v3385 = vadd.f32 %v3080, %v3384
          %v3386 = vpop.f32.mrf.mxu0
          %3387 = vmatprep.mubr.bf16.mxu0 0
          %3388 = vmatmul.mubr.bf16.gmra.mxu0 %v3233
          %v3389 = vpop.f32.mrf.mxu0
          %v3390 = vadd.f32 %v3085, %v3389
          %v3391 = vpop.f32.mrf.mxu0
          %v3392 = vpop.f32.mrf.mxu0
          %v3393 = vadd.f32 %v3088, %v3392
          %v3394 = vpop.f32.mrf.mxu0
          %3395 = vmatprep.mubr.bf16.mxu0 0
          %3396 = vmatmul.mubr.bf16.gmra.mxu0 %v3234
          %v3397 = vpop.f32.mrf.mxu0
          %v3398 = vadd.f32 %v3093, %v3397
          %v3399 = vpop.f32.mrf.mxu0
          %v3400 = vpop.f32.mrf.mxu0
          %v3401 = vadd.f32 %v3096, %v3400
          %v3402 = vpop.f32.mrf.mxu0
          %3403 = vmatprep.mubr.bf16.mxu0 0
          %3404 = vmatmul.mubr.bf16.gmra.mxu0 %v3235
          %v3405 = vpop.f32.mrf.mxu0
          %v3406 = vadd.f32 %v3101, %v3405
          %v3407 = vpop.f32.mrf.mxu0
          %v3408 = vpop.f32.mrf.mxu0
          %v3409 = vadd.f32 %v3104, %v3408
          %v3410 = vpop.f32.mrf.mxu0
          %3411 = vmatprep.mubr.bf16.mxu0 0
          %3412 = vmatmul.mubr.bf16.gmra.mxu0 %v3236
          %v3413 = vpop.f32.mrf.mxu0
          %v3414 = vadd.f32 %v3109, %v3413
          %v3415 = vpop.f32.mrf.mxu0
          %v3416 = vpop.f32.mrf.mxu0
          %v3417 = vadd.f32 %v3112, %v3416
          %v3418 = vpop.f32.mrf.mxu0
          %3419 = vmatprep.mubr.bf16.mxu0 0
          %3420 = vmatmul.mubr.bf16.gmra.mxu0 %v3237
          %v3421 = vpop.f32.mrf.mxu0
          %v3422 = vadd.f32 %v3117, %v3421
          %v3423 = vpop.f32.mrf.mxu0
          %v3424 = vpop.f32.mrf.mxu0
          %v3425 = vadd.f32 %v3120, %v3424
          %v3426 = vpop.f32.mrf.mxu0
          %3427 = vmatprep.mubr.bf16.mxu0 0
          %3428 = vmatmul.mubr.bf16.gmra.mxu0 %v3238
          %v3429 = vpop.f32.mrf.mxu0
          %v3430 = vadd.f32 %v3125, %v3429
          %v3431 = vpop.f32.mrf.mxu0
          %v3432 = vpop.f32.mrf.mxu0
          %v3433 = vadd.f32 %v3128, %v3432
          %v3434 = vpop.f32.mrf.mxu0
          %3435 = vmatprep.mubr.bf16.mxu0 0
          %3436 = vmatmul.mubr.bf16.gmra.mxu0 %v3239
          %v3437 = vpop.f32.mrf.mxu0
          %v3438 = vadd.f32 %v3133, %v3437
          %v3439 = vpop.f32.mrf.mxu0
          %v3440 = vpop.f32.mrf.mxu0
          %v3441 = vadd.f32 %v3136, %v3440
          %v3442 = vpop.f32.mrf.mxu0
          %3443 = vmatprep.mubr.bf16.mxu0 0
          %3444 = vmatmul.mubr.bf16.gmra.mxu0 %v3240
          %v3445 = vpop.f32.mrf.mxu0
          %v3446 = vadd.f32 %v3141, %v3445
          %v3447 = vpop.f32.mrf.mxu0
          %v3448 = vpop.f32.mrf.mxu0
          %v3449 = vadd.f32 %v3144, %v3448
          %v3450 = vpop.f32.mrf.mxu0
          %3451 = vmatprep.mubr.bf16.mxu0 0
          %3452 = vmatmul.mubr.bf16.gmra.mxu0 %v3241
          %v3453 = vpop.f32.mrf.mxu0
          %v3454 = vadd.f32 %v3149, %v3453
          %v3455 = vpop.f32.mrf.mxu0
          %v3456 = vpop.f32.mrf.mxu0
          %v3457 = vadd.f32 %v3152, %v3456
          %v3458 = vpop.f32.mrf.mxu0
          %3459 = vmatprep.mubr.bf16.mxu0 0
          %3460 = vmatmul.mubr.bf16.gmra.mxu0 %v3242
          %v3461 = vpop.f32.mrf.mxu0
          %v3462 = vadd.f32 %v3157, %v3461
          %v3463 = vpop.f32.mrf.mxu0
          %v3464 = vpop.f32.mrf.mxu0
          %v3465 = vadd.f32 %v3160, %v3464
          %v3466 = vpop.f32.mrf.mxu0
          %3467 = vdwg.mxu0
          %v3468 = vld [vmem:[%s670] sm:$0x1]
          %v3470 = vlaneseq
          %v3471 = vshrl.u32 %v3470, 7
          %v3472 = vsub.s32 0, %v3471
          %v3473 = vrot.slane %v3468, %v3472
          %v3475 = vadd.f32 %v3342, %v3473
          %v3476 = vadd.f32 %v3345, %v3473
          %v3477 = vadd.f32 %v3350, %v3473
          %v3478 = vadd.f32 %v3353, %v3473
          %v3479 = vadd.f32 %v3358, %v3473
          %v3480 = vadd.f32 %v3361, %v3473
          %v3481 = vadd.f32 %v3366, %v3473
          %v3482 = vadd.f32 %v3369, %v3473
          %v3483 = vadd.f32 %v3374, %v3473
          %v3484 = vadd.f32 %v3377, %v3473
          %v3485 = vadd.f32 %v3382, %v3473
          %v3486 = vadd.f32 %v3385, %v3473
          %v3487 = vadd.f32 %v3390, %v3473
          %v3488 = vadd.f32 %v3393, %v3473
          %v3489 = vadd.f32 %v3398, %v3473
          %v3490 = vadd.f32 %v3401, %v3473
          %v3491 = vadd.f32 %v3406, %v3473
          %v3492 = vadd.f32 %v3409, %v3473
          %v3493 = vadd.f32 %v3414, %v3473
          %v3494 = vadd.f32 %v3417, %v3473
          %v3495 = vadd.f32 %v3422, %v3473
          %v3496 = vadd.f32 %v3425, %v3473
          %v3497 = vadd.f32 %v3430, %v3473
          %v3498 = vadd.f32 %v3433, %v3473
          %v3499 = vadd.f32 %v3438, %v3473
          %v3500 = vadd.f32 %v3441, %v3473
          %v3501 = vadd.f32 %v3446, %v3473
          %v3502 = vadd.f32 %v3449, %v3473
          %v3503 = vadd.f32 %v3454, %v3473
          %v3504 = vadd.f32 %v3457, %v3473
          %v3505 = vadd.f32 %v3462, %v3473
          %v3506 = vadd.f32 %v3465, %v3473
          %v3507 = vmax.f32 %v3475, 0.0
          %v3508 = vmax.f32 %v3476, 0.0
          %v3509 = vmax.f32 %v3477, 0.0
          %v3510 = vmax.f32 %v3478, 0.0
          %v3511 = vmax.f32 %v3479, 0.0
          %v3512 = vmax.f32 %v3480, 0.0
          %v3513 = vmax.f32 %v3481, 0.0
          %v3514 = vmax.f32 %v3482, 0.0
          %v3515 = vmax.f32 %v3483, 0.0
          %v3516 = vmax.f32 %v3484, 0.0
          %v3517 = vmax.f32 %v3485, 0.0
          %v3518 = vmax.f32 %v3486, 0.0
          %v3519 = vmax.f32 %v3487, 0.0
          %v3520 = vmax.f32 %v3488, 0.0
          %v3521 = vmax.f32 %v3489, 0.0
          %v3522 = vmax.f32 %v3490, 0.0
          %v3523 = vmax.f32 %v3491, 0.0
          %v3524 = vmax.f32 %v3492, 0.0
          %v3525 = vmax.f32 %v3493, 0.0
          %v3526 = vmax.f32 %v3494, 0.0
          %v3527 = vmax.f32 %v3495, 0.0
          %v3528 = vmax.f32 %v3496, 0.0
          %v3529 = vmax.f32 %v3497, 0.0
          %v3530 = vmax.f32 %v3498, 0.0
          %v3531 = vmax.f32 %v3499, 0.0
          %v3532 = vmax.f32 %v3500, 0.0
          %v3533 = vmax.f32 %v3501, 0.0
          %v3534 = vmax.f32 %v3502, 0.0
          %v3535 = vmax.f32 %v3503, 0.0
          %v3536 = vmax.f32 %v3504, 0.0
          %v3537 = vmax.f32 %v3505, 0.0
          %v3538 = vmax.f32 %v3506, 0.0
          %v3539 = vpack.c.bf16 %v3508, %v3507
          %v3540 = vpack.c.bf16 %v3510, %v3509
          %v3541 = vpack.c.bf16 %v3512, %v3511
          %v3542 = vpack.c.bf16 %v3514, %v3513
          %v3543 = vpack.c.bf16 %v3516, %v3515
          %v3544 = vpack.c.bf16 %v3518, %v3517
          %v3545 = vpack.c.bf16 %v3520, %v3519
          %v3546 = vpack.c.bf16 %v3522, %v3521
          %v3547 = vpack.c.bf16 %v3524, %v3523
          %v3548 = vpack.c.bf16 %v3526, %v3525
          %v3549 = vpack.c.bf16 %v3528, %v3527
          %v3550 = vpack.c.bf16 %v3530, %v3529
          %v3551 = vpack.c.bf16 %v3532, %v3531
          %v3552 = vpack.c.bf16 %v3534, %v3533
          %v3553 = vpack.c.bf16 %v3536, %v3535
          %v3554 = vpack.c.bf16 %v3538, %v3537
          %s3555 = sadd.s32 %s2611, %s2612
          %v3572 = vunpack.c.l.b16 %v3539
          %v3573 = vunpack.c.h.b16 %v3539
          %v3574 = vunpack.c.l.b16 %v3540
          %v3575 = vunpack.c.h.b16 %v3540
          %v3576 = vunpack.c.l.b16 %v3541
          %v3577 = vunpack.c.h.b16 %v3541
          %v3578 = vunpack.c.l.b16 %v3542
          %v3579 = vunpack.c.h.b16 %v3542
          %v3580 = vunpack.c.l.b16 %v3543
          %v3581 = vunpack.c.h.b16 %v3543
          %v3582 = vunpack.c.l.b16 %v3544
          %v3583 = vunpack.c.h.b16 %v3544
          %v3584 = vunpack.c.l.b16 %v3545
          %v3585 = vunpack.c.h.b16 %v3545
          %v3586 = vunpack.c.l.b16 %v3546
          %v3587 = vunpack.c.h.b16 %v3546
          %v3588 = vunpack.c.l.b16 %v3547
          %v3589 = vunpack.c.h.b16 %v3547
          %v3590 = vunpack.c.l.b16 %v3548
          %v3591 = vunpack.c.h.b16 %v3548
          %v3592 = vunpack.c.l.b16 %v3549
          %v3593 = vunpack.c.h.b16 %v3549
          %v3594 = vunpack.c.l.b16 %v3550
          %v3595 = vunpack.c.h.b16 %v3550
          %v3596 = vunpack.c.l.b16 %v3551
          %v3597 = vunpack.c.h.b16 %v3551
          %v3598 = vunpack.c.l.b16 %v3552
          %v3599 = vunpack.c.h.b16 %v3552
          %v3600 = vunpack.c.l.b16 %v3553
          %v3601 = vunpack.c.h.b16 %v3553
          %v3602 = vunpack.c.l.b16 %v3554
          %v3603 = vunpack.c.h.b16 %v3554
          %v3604 = vpack.c.b16 %v3572, %v3572
          %v3605 = vpack.c.b16 %v3573, %v3573
          %v3606 = vpack.c.b16 %v3574, %v3574
          %v3607 = vpack.c.b16 %v3575, %v3575
          %v3608 = vpack.c.b16 %v3576, %v3576
          %v3609 = vpack.c.b16 %v3577, %v3577
          %v3610 = vpack.c.b16 %v3578, %v3578
          %v3611 = vpack.c.b16 %v3579, %v3579
          %v3612 = vpack.c.b16 %v3580, %v3580
          %v3613 = vpack.c.b16 %v3581, %v3581
          %v3614 = vpack.c.b16 %v3582, %v3582
          %v3615 = vpack.c.b16 %v3583, %v3583
          %v3616 = vpack.c.b16 %v3584, %v3584
          %v3617 = vpack.c.b16 %v3585, %v3585
          %v3618 = vpack.c.b16 %v3586, %v3586
          %v3619 = vpack.c.b16 %v3587, %v3587
          %v3620 = vpack.c.b16 %v3588, %v3588
          %v3621 = vpack.c.b16 %v3589, %v3589
          %v3622 = vpack.c.b16 %v3590, %v3590
          %v3623 = vpack.c.b16 %v3591, %v3591
          %v3624 = vpack.c.b16 %v3592, %v3592
          %v3625 = vpack.c.b16 %v3593, %v3593
          %v3626 = vpack.c.b16 %v3594, %v3594
          %v3627 = vpack.c.b16 %v3595, %v3595
          %v3628 = vpack.c.b16 %v3596, %v3596
          %v3629 = vpack.c.b16 %v3597, %v3597
          %v3630 = vpack.c.b16 %v3598, %v3598
          %v3631 = vpack.c.b16 %v3599, %v3599
          %v3632 = vpack.c.b16 %v3600, %v3600
          %v3633 = vpack.c.b16 %v3601, %v3601
          %v3634 = vpack.c.b16 %v3602, %v3602
          %v3635 = vpack.c.b16 %v3603, %v3603
          %s3668 = sshra.s32 %s3555, 3
          %s3669 = sand.u32 %s3555, 7
          %s3670 = smul.addr %s3668, 4
          %s3671 = scalar_lea.vmem [#allocation2], %s3670
          %3672 = vst [vmem:[%s3671] sm:$0xf] %v3604
          %3673 = vst [vmem:[%s3671 + $0x4] sm:$0xf] %v3605
          %3674 = vst [vmem:[%s3671 + $0x8] sm:$0xf] %v3606
          %3675 = vst [vmem:[%s3671 + $0xc] sm:$0xf] %v3607
          %3676 = vst [vmem:[%s3671 + $0x10] sm:$0xf] %v3608
          %3677 = vst [vmem:[%s3671 + $0x14] sm:$0xf] %v3609
          %3678 = vst [vmem:[%s3671 + $0x18] sm:$0xf] %v3610
          %3679 = vst [vmem:[%s3671 + $0x1c] sm:$0xf] %v3611
          %3680 = vst [vmem:[%s3671 + $0x20] sm:$0xf] %v3612
          %3681 = vst [vmem:[%s3671 + $0x24] sm:$0xf] %v3613
          %3682 = vst [vmem:[%s3671 + $0x28] sm:$0xf] %v3614
          %3683 = vst [vmem:[%s3671 + $0x2c] sm:$0xf] %v3615
          %3684 = vst [vmem:[%s3671 + $0x30] sm:$0xf] %v3616
          %3685 = vst [vmem:[%s3671 + $0x34] sm:$0xf] %v3617
          %3686 = vst [vmem:[%s3671 + $0x38] sm:$0xf] %v3618
          %3687 = vst [vmem:[%s3671 + $0x3c] sm:$0xf] %v3619
          %3688 = vst [vmem:[%s3671 + $0x40] sm:$0xf] %v3620
          %3689 = vst [vmem:[%s3671 + $0x44] sm:$0xf] %v3621
          %3690 = vst [vmem:[%s3671 + $0x48] sm:$0xf] %v3622
          %3691 = vst [vmem:[%s3671 + $0x4c] sm:$0xf] %v3623
          %3692 = vst [vmem:[%s3671 + $0x50] sm:$0xf] %v3624
          %3693 = vst [vmem:[%s3671 + $0x54] sm:$0xf] %v3625
          %3694 = vst [vmem:[%s3671 + $0x58] sm:$0xf] %v3626
          %3695 = vst [vmem:[%s3671 + $0x5c] sm:$0xf] %v3627
          %3696 = vst [vmem:[%s3671 + $0x60] sm:$0xf] %v3628
          %3697 = vst [vmem:[%s3671 + $0x64] sm:$0xf] %v3629
          %3698 = vst [vmem:[%s3671 + $0x68] sm:$0xf] %v3630
          %3699 = vst [vmem:[%s3671 + $0x6c] sm:$0xf] %v3631
          %3700 = vst [vmem:[%s3671 + $0x70] sm:$0xf] %v3632
          %3701 = vst [vmem:[%s3671 + $0x74] sm:$0xf] %v3633
          %3702 = vst [vmem:[%s3671 + $0x78] sm:$0xf] %v3634
          %3703 = vst [vmem:[%s3671 + $0x7c] sm:$0xf] %v3635
          %p3704 = scmp.eq.s32.totalorder %s37, 2
          // Predicated region
          $region97: #{tpu_custom_call.1} parent=95 // pred_check
            %p3705 = pneg %p3704
          $region98: #{tpu_custom_call.1} parent=95 // pred_check_branch
            %3707 = sbr.rel (%p3705) target = $region100
          $region99: #{tpu_custom_call.1} parent=95 // pred_region
            %v3708 = vld [vmem:[#allocation14] sm:$0xf]
            %v3709 = vld [vmem:[#allocation14 + $0x4] sm:$0xf]
            %v3710 = vld [vmem:[#allocation14 + $0x8] sm:$0xf]
            %v3711 = vld [vmem:[#allocation14 + $0xc] sm:$0xf]
            %v3712 = vld [vmem:[#allocation14 + $0x10] sm:$0xf]
            %v3713 = vld [vmem:[#allocation14 + $0x14] sm:$0xf]
            %v3714 = vld [vmem:[#allocation14 + $0x18] sm:$0xf]
            %v3715 = vld [vmem:[#allocation14 + $0x1c] sm:$0xf]
            %v3716 = vld [vmem:[#allocation14 + $0x20] sm:$0xf]
            %v3717 = vld [vmem:[#allocation14 + $0x24] sm:$0xf]
            %v3718 = vld [vmem:[#allocation14 + $0x28] sm:$0xf]
            %v3719 = vld [vmem:[#allocation14 + $0x2c] sm:$0xf]
            %v3720 = vld [vmem:[#allocation14 + $0x30] sm:$0xf]
            %v3721 = vld [vmem:[#allocation14 + $0x34] sm:$0xf]
            %v3722 = vld [vmem:[#allocation14 + $0x38] sm:$0xf]
            %v3723 = vld [vmem:[#allocation14 + $0x3c] sm:$0xf]
            %v3724 = vld [vmem:[%s11] sm:$0x1]
            %v3726 = vlaneseq
            %v3727 = vshrl.u32 %v3726, 7
            %v3728 = vsub.s32 0, %v3727
            %v3729 = vrot.slane %v3724, %v3728
            %v3747 = vunpack.c.l.b16 %v3708
            %v3748 = vunpack.c.l.b16 %v3709
            %v3749 = vunpack.c.l.b16 %v3710
            %v3750 = vunpack.c.l.b16 %v3711
            %v3751 = vunpack.c.l.b16 %v3712
            %v3752 = vunpack.c.l.b16 %v3713
            %v3753 = vunpack.c.l.b16 %v3714
            %v3754 = vunpack.c.l.b16 %v3715
            %v3755 = vunpack.c.l.b16 %v3716
            %v3756 = vunpack.c.l.b16 %v3717
            %v3757 = vunpack.c.l.b16 %v3718
            %v3758 = vunpack.c.l.b16 %v3719
            %v3759 = vunpack.c.l.b16 %v3720
            %v3760 = vunpack.c.l.b16 %v3721
            %v3761 = vunpack.c.l.b16 %v3722
            %v3762 = vunpack.c.l.b16 %v3723
            %v3763 = vpack.c.b16 %v3748, %v3747
            %v3764 = vpack.c.b16 %v3750, %v3749
            %v3765 = vpack.c.b16 %v3752, %v3751
            %v3766 = vpack.c.b16 %v3754, %v3753
            %v3767 = vpack.c.b16 %v3756, %v3755
            %v3768 = vpack.c.b16 %v3758, %v3757
            %v3769 = vpack.c.b16 %v3760, %v3759
            %v3770 = vpack.c.b16 %v3762, %v3761
            %3779 = vmatprep.subr.bf16.mxu0 0
            %3780 = vmatpush1.bf16.msra.mxu0 %v3770
            %3781 = vmatprep.subr.bf16.mxu0 0
            %3782 = vmatpush1.bf16.msra.mxu0 %v3769
            %3783 = vmatprep.subr.bf16.mxu0 0
            %3784 = vmatpush1.bf16.msra.mxu0 %v3768
            %3785 = vmatprep.subr.bf16.mxu0 0
            %3786 = vmatpush1.bf16.msra.mxu0 %v3767
            %3787 = vmatprep.subr.bf16.mxu0 0
            %3788 = vmatpush1.bf16.msra.mxu0 %v3766
            %3789 = vmatprep.subr.bf16.mxu0 0
            %3790 = vmatpush1.bf16.msra.mxu0 %v3765
            %3791 = vmatprep.subr.bf16.mxu0 0
            %3792 = vmatpush1.bf16.msra.mxu0 %v3764
            %3793 = vmatprep.subr.bf16.mxu0 0
            %3794 = vmatpush1.bf16.msra.mxu0 %v3763
            %3795 = vmatprep.subr.bf16.mxu0 0
            %3796 = vmatpush2.bf16.msra.mxu0 0
            %3797 = vmatprep.subr.bf16.mxu0 0
            %3798 = vmatpush2.bf16.msra.mxu0 0
            %3799 = vmatprep.subr.bf16.mxu0 0
            %3800 = vmatpush2.bf16.msra.mxu0 0
            %3801 = vmatprep.subr.bf16.mxu0 0
            %3802 = vmatpush2.bf16.msra.mxu0 0
            %3803 = vmatprep.subr.bf16.mxu0 0
            %3804 = vmatpush2.bf16.msra.mxu0 0
            %3805 = vmatprep.subr.bf16.mxu0 0
            %3806 = vmatpush2.bf16.msra.mxu0 0
            %3807 = vmatprep.subr.bf16.mxu0 0
            %3808 = vmatpush2.bf16.msra.mxu0 0
            %3809 = vmatprep.subr.bf16.mxu0 0
            %3810 = vmatpush2.bf16.msra.mxu0 0
            %3811 = vmatprep.mubr.bf16.mxu0 0
            %3812 = vmatmul.mubr.bf16.gmra.mxu0 %v3539
            %v3813 = vpop.f32.mrf.mxu0
            %v3814 = vadd.f32 %v3729, %v3813
            %v3815 = vpop.f32.mrf.mxu0
            %v3816 = vpop.f32.mrf.mxu0
            %v3817 = vadd.f32 %v3729, %v3816
            %v3818 = vpop.f32.mrf.mxu0
            %3819 = vmatprep.mubr.bf16.mxu0 0
            %3820 = vmatmul.mubr.bf16.gmra.mxu0 %v3540
            %v3821 = vpop.f32.mrf.mxu0
            %v3822 = vadd.f32 %v3729, %v3821
            %v3823 = vpop.f32.mrf.mxu0
            %v3824 = vpop.f32.mrf.mxu0
            %v3825 = vadd.f32 %v3729, %v3824
            %v3826 = vpop.f32.mrf.mxu0
            %3827 = vmatprep.mubr.bf16.mxu0 0
            %3828 = vmatmul.mubr.bf16.gmra.mxu0 %v3541
            %v3829 = vpop.f32.mrf.mxu0
            %v3830 = vadd.f32 %v3729, %v3829
            %v3831 = vpop.f32.mrf.mxu0
            %v3832 = vpop.f32.mrf.mxu0
            %v3833 = vadd.f32 %v3729, %v3832
            %v3834 = vpop.f32.mrf.mxu0
            %3835 = vmatprep.mubr.bf16.mxu0 0
            %3836 = vmatmul.mubr.bf16.gmra.mxu0 %v3542
            %v3837 = vpop.f32.mrf.mxu0
            %v3838 = vadd.f32 %v3729, %v3837
            %v3839 = vpop.f32.mrf.mxu0
            %v3840 = vpop.f32.mrf.mxu0
            %v3841 = vadd.f32 %v3729, %v3840
            %v3842 = vpop.f32.mrf.mxu0
            %3843 = vmatprep.mubr.bf16.mxu0 0
            %3844 = vmatmul.mubr.bf16.gmra.mxu0 %v3543
            %v3845 = vpop.f32.mrf.mxu0
            %v3846 = vadd.f32 %v3729, %v3845
            %v3847 = vpop.f32.mrf.mxu0
            %v3848 = vpop.f32.mrf.mxu0
            %v3849 = vadd.f32 %v3729, %v3848
            %v3850 = vpop.f32.mrf.mxu0
            %3851 = vmatprep.mubr.bf16.mxu0 0
            %3852 = vmatmul.mubr.bf16.gmra.mxu0 %v3544
            %v3853 = vpop.f32.mrf.mxu0
            %v3854 = vadd.f32 %v3729, %v3853
            %v3855 = vpop.f32.mrf.mxu0
            %v3856 = vpop.f32.mrf.mxu0
            %v3857 = vadd.f32 %v3729, %v3856
            %v3858 = vpop.f32.mrf.mxu0
            %3859 = vmatprep.mubr.bf16.mxu0 0
            %3860 = vmatmul.mubr.bf16.gmra.mxu0 %v3545
            %v3861 = vpop.f32.mrf.mxu0
            %v3862 = vadd.f32 %v3729, %v3861
            %v3863 = vpop.f32.mrf.mxu0
            %v3864 = vpop.f32.mrf.mxu0
            %v3865 = vadd.f32 %v3729, %v3864
            %v3866 = vpop.f32.mrf.mxu0
            %3867 = vmatprep.mubr.bf16.mxu0 0
            %3868 = vmatmul.mubr.bf16.gmra.mxu0 %v3546
            %v3869 = vpop.f32.mrf.mxu0
            %v3870 = vadd.f32 %v3729, %v3869
            %v3871 = vpop.f32.mrf.mxu0
            %v3872 = vpop.f32.mrf.mxu0
            %v3873 = vadd.f32 %v3729, %v3872
            %v3874 = vpop.f32.mrf.mxu0
            %3875 = vmatprep.mubr.bf16.mxu0 0
            %3876 = vmatmul.mubr.bf16.gmra.mxu0 %v3547
            %v3877 = vpop.f32.mrf.mxu0
            %v3878 = vadd.f32 %v3729, %v3877
            %v3879 = vpop.f32.mrf.mxu0
            %v3880 = vpop.f32.mrf.mxu0
            %v3881 = vadd.f32 %v3729, %v3880
            %v3882 = vpop.f32.mrf.mxu0
            %3883 = vmatprep.mubr.bf16.mxu0 0
            %3884 = vmatmul.mubr.bf16.gmra.mxu0 %v3548
            %v3885 = vpop.f32.mrf.mxu0
            %v3886 = vadd.f32 %v3729, %v3885
            %v3887 = vpop.f32.mrf.mxu0
            %v3888 = vpop.f32.mrf.mxu0
            %v3889 = vadd.f32 %v3729, %v3888
            %v3890 = vpop.f32.mrf.mxu0
            %3891 = vmatprep.mubr.bf16.mxu0 0
            %3892 = vmatmul.mubr.bf16.gmra.mxu0 %v3549
            %v3893 = vpop.f32.mrf.mxu0
            %v3894 = vadd.f32 %v3729, %v3893
            %v3895 = vpop.f32.mrf.mxu0
            %v3896 = vpop.f32.mrf.mxu0
            %v3897 = vadd.f32 %v3729, %v3896
            %v3898 = vpop.f32.mrf.mxu0
            %3899 = vmatprep.mubr.bf16.mxu0 0
            %3900 = vmatmul.mubr.bf16.gmra.mxu0 %v3550
            %v3901 = vpop.f32.mrf.mxu0
            %v3902 = vadd.f32 %v3729, %v3901
            %v3903 = vpop.f32.mrf.mxu0
            %v3904 = vpop.f32.mrf.mxu0
            %v3905 = vadd.f32 %v3729, %v3904
            %v3906 = vpop.f32.mrf.mxu0
            %3907 = vmatprep.mubr.bf16.mxu0 0
            %3908 = vmatmul.mubr.bf16.gmra.mxu0 %v3551
            %v3909 = vpop.f32.mrf.mxu0
            %v3910 = vadd.f32 %v3729, %v3909
            %v3911 = vpop.f32.mrf.mxu0
            %v3912 = vpop.f32.mrf.mxu0
            %v3913 = vadd.f32 %v3729, %v3912
            %v3914 = vpop.f32.mrf.mxu0
            %3915 = vmatprep.mubr.bf16.mxu0 0
            %3916 = vmatmul.mubr.bf16.gmra.mxu0 %v3552
            %v3917 = vpop.f32.mrf.mxu0
            %v3918 = vadd.f32 %v3729, %v3917
            %v3919 = vpop.f32.mrf.mxu0
            %v3920 = vpop.f32.mrf.mxu0
            %v3921 = vadd.f32 %v3729, %v3920
            %v3922 = vpop.f32.mrf.mxu0
            %3923 = vmatprep.mubr.bf16.mxu0 0
            %3924 = vmatmul.mubr.bf16.gmra.mxu0 %v3553
            %v3925 = vpop.f32.mrf.mxu0
            %v3926 = vadd.f32 %v3729, %v3925
            %v3927 = vpop.f32.mrf.mxu0
            %v3928 = vpop.f32.mrf.mxu0
            %v3929 = vadd.f32 %v3729, %v3928
            %v3930 = vpop.f32.mrf.mxu0
            %3931 = vmatprep.mubr.bf16.mxu0 0
            %3932 = vmatmul.mubr.bf16.gmra.mxu0 %v3554
            %v3933 = vpop.f32.mrf.mxu0
            %v3934 = vadd.f32 %v3729, %v3933
            %v3935 = vpop.f32.mrf.mxu0
            %v3936 = vpop.f32.mrf.mxu0
            %v3937 = vadd.f32 %v3729, %v3936
            %v3938 = vpop.f32.mrf.mxu0
            %3939 = vdwg.mxu0
            %3940 = vst [vmem:[%s627] sm:$0xff] %v3814
            %3941 = vst [vmem:[%s627 + $0x8] sm:$0xff] %v3817
            %3942 = vst [vmem:[%s627 + $0x10] sm:$0xff] %v3822
            %3943 = vst [vmem:[%s627 + $0x18] sm:$0xff] %v3825
            %3944 = vst [vmem:[%s627 + $0x20] sm:$0xff] %v3830
            %3945 = vst [vmem:[%s627 + $0x28] sm:$0xff] %v3833
            %3946 = vst [vmem:[%s627 + $0x30] sm:$0xff] %v3838
            %3947 = vst [vmem:[%s627 + $0x38] sm:$0xff] %v3841
            %3948 = vst [vmem:[%s627 + $0x40] sm:$0xff] %v3846
            %3949 = vst [vmem:[%s627 + $0x48] sm:$0xff] %v3849
            %3950 = vst [vmem:[%s627 + $0x50] sm:$0xff] %v3854
            %3951 = vst [vmem:[%s627 + $0x58] sm:$0xff] %v3857
            %3952 = vst [vmem:[%s627 + $0x60] sm:$0xff] %v3862
            %3953 = vst [vmem:[%s627 + $0x68] sm:$0xff] %v3865
            %3954 = vst [vmem:[%s627 + $0x70] sm:$0xff] %v3870
            %3955 = vst [vmem:[%s627 + $0x78] sm:$0xff] %v3873
            %3956 = vst [vmem:[%s627 + $0x80] sm:$0xff] %v3878
            %3957 = vst [vmem:[%s627 + $0x88] sm:$0xff] %v3881
            %3958 = vst [vmem:[%s627 + $0x90] sm:$0xff] %v3886
            %3959 = vst [vmem:[%s627 + $0x98] sm:$0xff] %v3889
            %3960 = vst [vmem:[%s627 + $0xa0] sm:$0xff] %v3894
            %3961 = vst [vmem:[%s627 + $0xa8] sm:$0xff] %v3897
            %3962 = vst [vmem:[%s627 + $0xb0] sm:$0xff] %v3902
            %3963 = vst [vmem:[%s627 + $0xb8] sm:$0xff] %v3905
            %3964 = vst [vmem:[%s627 + $0xc0] sm:$0xff] %v3910
            %3965 = vst [vmem:[%s627 + $0xc8] sm:$0xff] %v3913
            %3966 = vst [vmem:[%s627 + $0xd0] sm:$0xff] %v3918
            %3967 = vst [vmem:[%s627 + $0xd8] sm:$0xff] %v3921
            %3968 = vst [vmem:[%s627 + $0xe0] sm:$0xff] %v3926
            %3969 = vst [vmem:[%s627 + $0xe8] sm:$0xff] %v3929
            %3970 = vst [vmem:[%s627 + $0xf0] sm:$0xff] %v3934
            %3971 = vst [vmem:[%s627 + $0xf8] sm:$0xff] %v3937
          $region100: #{tpu_custom_call.1} parent=95 // pred_fallthru
            _
        $region96: #{tpu_custom_call.1} parent=59 // pred_fallthru
          _
        %s3972 = sand.u32 %s337, 1
        %s3973 = scalar_lea.sflag [#allocation9], %s3972
        %s3974 = sand.u32 %s337, 1
        %s3975 = smul.addr %s3974, 256
        %s3976 = scalar_lea.vmem [#allocation15], %s3975
        // Predicated region
        $region101: #{tpu_custom_call.1} parent=59 // pred_check
          %p3977 = pneg %p347
        $region102: #{tpu_custom_call.1} parent=59 // pred_check_branch
          %3979 = sbr.rel (%p3977) target = $region104
        $region103: #{tpu_custom_call.1} parent=59 // pred_region
          %p3980 = scmp.eq.s32.totalorder %s37, 2
          %s3981 = scalar_select %p3980, %s38, 0
          %s3982 = smul.u32 32, %s3981
          %s3984 = ssub.s32 4096, 4096
          %3985 = vsyncadd %s3973, %s3984
          %s3986 = smul.addr %s3982, 128
          %s3987 = scalar_lea.hbm %s12, %s3986
          %s3988 = sshll.u32 %s3976, 4
          %s3989 = int_to_ptr.vmem [resolvable:$true] %s3988
          %3994 = dma.vmem_to_hbm [thread:$0]  %s3989, 4096, %s3987, %s3973, 128, 128, 8
        $region104: #{tpu_custom_call.1} parent=59 // pred_fallthru
          _
      $region60: #{tpu_custom_call.1} parent=5 // pred_fallthru
        _
      %p3995 = scmp.le.s32.totalorder 2, %s27
      // Predicated region
      $region105: #{tpu_custom_call.1} parent=5 // pred_check
        %p3996 = pneg %p3995
      $region106: #{tpu_custom_call.1} parent=5 // pred_check_branch
        %3998 = sbr.rel (%p3996) target = $region108
      $region107: #{tpu_custom_call.1} parent=5 // pred_region
        %s3999 = ssub.s32 %s27, 2
        // Predicated region
        $region109: #{tpu_custom_call.1} parent=107 // pred_check
          %p4000 = pneg %p353
        $region110: #{tpu_custom_call.1} parent=107 // pred_check_branch
          %4002 = sbr.rel (%p4000) target = $region112
        $region111: #{tpu_custom_call.1} parent=107 // pred_region
          %s4003 = sand.u32 %s338, 1
          %s4004 = scalar_lea.sflag [#allocation9], %s4003
          %s4005 = sand.u32 %s338, 1
          %s4006 = smul.addr %s4005, 256
          %s4007 = scalar_lea.vmem [#allocation15], %s4006
          %4008 = dma.done %s4004, 4096
        $region112: #{tpu_custom_call.1} parent=107 // pred_fallthru
          _
      $region108: #{tpu_custom_call.1} parent=5 // pred_fallthru
        _
    $region6: #{tpu_custom_call.1} parent=1 // loop_footer
      %s31 = sadd.s32 1, %s27
    $region7: #{tpu_custom_call.1} parent=1 // loop_footer_branch
      %26 = sbr.rel target = $region3
    $region8: #{tpu_custom_call.1} parent=1 // loop_exit
      _
    %4009 = vsyncpa [#allocation8], 1
    %s4010 = scalar_lea.sflag [#allocation8], 1
    %4011 = vsyncpa %s4010, 1
    %4012 = vsyncpa [#allocation11], 1
    %4013 = vsyncpa [#allocation9], 1
    %s4014 = scalar_lea.sflag [#allocation9], 1
    %4015 = vsyncpa %s4014, 1

</llo_original>
